<compile_context>
chip_gen: v7x
topology: tpu7x:2x2x1
jax: 0.10.0
libtpu: 0.0.40
codegen_flags: <defaults>
</compile_context>

<pallas_src>
import functools

import jax
import jax.numpy as jnp
from jax.experimental import pallas as pl
from jax.experimental.pallas import tpu as pltpu


# ----------------------------------------------------------------------------
# Fused kernel: stacked LSTM + flatten + Linear_2, single invocation, no grid.
# ----------------------------------------------------------------------------
def _make_fused_kernel(n_layers: int):
    """Builds the fused forward kernel for `n_layers` stacked LSTM layers."""

    def kernel(*refs):
        # refs = (x, [w_ih, w_hh, b] * n_layers, lin_w, lin_b, out)
        x_ref = refs[0]
        layer_refs = refs[1:1 + 3 * n_layers]
        lin_w_ref, lin_b_ref, o_ref = refs[-3], refs[-2], refs[-1]

        B, T, _ = x_ref.shape
        H = layer_refs[1].shape[0]          # w_hh: (H, 4H)

        # Hoisted gate-band mask: g band [2H, 3H) -> tanh, rest -> sigmoid.
        lane = jax.lax.broadcasted_iota(jnp.int32, (B, 4 * H), 1)
        g_band = (lane >= 2 * H) & (lane < 3 * H)

        # Time-major 2-D view of the batch-first input, built in-kernel
        # (no wrapper-side transpose): row t*B + b holds x[b, t, :].
        seq = jnp.concatenate([x_ref[:, t, :] for t in range(T)], axis=0)

        hs_last = None
        for layer in range(n_layers):
            w_ih = layer_refs[3 * layer + 0][...]     # (in_dim, 4H)
            w_hh = layer_refs[3 * layer + 1][...]     # (H, 4H)
            b = layer_refs[3 * layer + 2][...]        # (1, 4H)

            # Hoisted input projection: one matmul for ALL timesteps.
            gx = jnp.dot(seq, w_ih, preferred_element_type=jnp.float32) + b

            h = jnp.zeros((B, H), jnp.float32)
            c = jnp.zeros((B, H), jnp.float32)
            hs = []
            # Statically unrolled recurrence (T small, compile-time constant).
            for t in range(T):
                gates = gx[t * B:(t + 1) * B, :] + jnp.dot(
                    h, w_hh, preferred_element_type=jnp.float32)   # (B, 4H)
                # One activation pass over the packed gate vreg.
                act = jnp.where(g_band, jnp.tanh(gates), jax.nn.sigmoid(gates))
                i_g = act[:, 0 * H:1 * H]
                f_g = act[:, 1 * H:2 * H]
                g_g = act[:, 2 * H:3 * H]
                o_g = act[:, 3 * H:4 * H]
                c = f_g * c + i_g * g_g
                h = o_g * jnp.tanh(c)
                hs.append(h)

            hs_last = hs
            if layer + 1 < n_layers:
                # Next layer consumes the full hidden sequence, time-major.
                seq = jnp.concatenate(hs, axis=0)      # (T*B, H)

        # lstm_out.reshape(B, T*H): batch-major flatten == lane concat of h_t.
        flat = jnp.concatenate(hs_last, axis=1)        # (B, T*H), lane-dense

        # TODO(synk): dropout is identity here (eval-mode semantics); training
        # mode stochastic masking via pltpu.prng_random_bits not implemented.
        o_ref[...] = (
            jnp.dot(flat, lin_w_ref[...], preferred_element_type=jnp.float32)
            + lin_b_ref[...]
        )

    return kernel


# ----------------------------------------------------------------------------
# Parameters (PyTorch-style uniform init, weights stored pre-transposed).
# ----------------------------------------------------------------------------
def init_params(key, *, input_size, output_size, seq_length, hidden_size,
                num_lstm_layers):
    def uni(key, shape, s):
        return jax.random.uniform(key, shape, jnp.float32, minval=-s, maxval=s)

    params = {"lstm": []}
    k = 1.0 / jnp.sqrt(jnp.float32(hidden_size))
    for layer in range(num_lstm_layers):
        in_dim = seq_length if layer == 0 else hidden_size
        key, k1, k2, k3, k4 = jax.random.split(key, 5)
        w_ih = uni(k1, (4 * hidden_size, in_dim), k)        # PyTorch layout
        w_hh = uni(k2, (4 * hidden_size, hidden_size), k)
        b_ih = uni(k3, (4 * hidden_size,), k)
        b_hh = uni(k4, (4 * hidden_size,), k)
        params["lstm"].append({
            "w_ih": w_ih.T,                                 # (in_dim, 4H)
            "w_hh": w_hh.T,                                 # (H, 4H)
            "b": (b_ih + b_hh).reshape(1, 4 * hidden_size), # combined bias
        })

    d_in = input_size * hidden_size                         # T * H
    d_out = output_size * seq_length
    key, k1, k2 = jax.random.split(key, 3)
    s = 1.0 / jnp.sqrt(jnp.float32(d_in))
    params["lin_w"] = uni(k1, (d_in, d_out), s)             # Linear_2 weight^T
    params["lin_b"] = uni(k2, (1, d_out), s)
    return params


# ----------------------------------------------------------------------------
# Forward wrapper: one pallas_call, everything resident in VMEM.
# ----------------------------------------------------------------------------
@functools.partial(jax.jit, static_argnames=("output_size", "seq_length"))
def pure_lstm_forward(params, x, *, output_size, seq_length):
    """x: (B, T, F) batch-first, F == seq_length (LSTM per-step feature dim)."""
    B = x.shape[0]
    n_layers = len(params["lstm"])

    args = [x.astype(jnp.float32)]
    for lp in params["lstm"]:
        args.extend([lp["w_ih"], lp["w_hh"], lp["b"]])
    args.extend([params["lin_w"], params["lin_b"]])
    d_out = params["lin_w"].shape[1]

    y = pl.pallas_call(
        _make_fused_kernel(n_layers),
        out_shape=jax.ShapeDtypeStruct((B, d_out), jnp.float32),
        in_specs=[pl.BlockSpec(memory_space=pltpu.MemorySpace.VMEM)] * len(args),
        out_specs=pl.BlockSpec(memory_space=pltpu.MemorySpace.VMEM),
    )(*args)
    return y.reshape(-1, output_size, seq_length)


if __name__ == "__main__":
    # Small, module-consistent sizes:
    #   input_size  (= T, number of timesteps)        = 16
    #   seq_length  (= F, per-step feature dim)       = 4
    #   hidden_size                                   = 32  (4H = 128 lanes)
    #   lstm_layer                                    = 2
    #   output_size                                   = 8
    #   batch                                         = 2
    INPUT_SIZE = 16
    SEQ_LENGTH = 4
    HIDDEN = 32
    N_LAYERS = 2
    OUTPUT_SIZE = 8
    BATCH = 2

    key = jax.random.PRNGKey(0)
    key, pkey, xkey = jax.random.split(key, 3)
    params = init_params(pkey,
                         input_size=INPUT_SIZE,
                         output_size=OUTPUT_SIZE,
                         seq_length=SEQ_LENGTH,
                         hidden_size=HIDDEN,
                         num_lstm_layers=N_LAYERS)

    x = jax.random.normal(xkey, (BATCH, INPUT_SIZE, SEQ_LENGTH), jnp.float32)

    out = pure_lstm_forward(params, x,
                            output_size=OUTPUT_SIZE, seq_length=SEQ_LENGTH)
    out = jax.block_until_ready(out)
    assert out.shape == (BATCH, OUTPUT_SIZE, SEQ_LENGTH), out.shape
    print("KERNEL_OK")
</pallas_src>

<mosaic_0001>
module attributes {stable_mosaic.version = 11 : i64} {
  func.func @kernel(%arg0: memref<2x16x4xf32, #tpu.memory_space<vmem>>, %arg1: memref<4x128xf32, #tpu.memory_space<vmem>>, %arg2: memref<32x128xf32, #tpu.memory_space<vmem>>, %arg3: memref<1x128xf32, #tpu.memory_space<vmem>>, %arg4: memref<32x128xf32, #tpu.memory_space<vmem>>, %arg5: memref<32x128xf32, #tpu.memory_space<vmem>>, %arg6: memref<1x128xf32, #tpu.memory_space<vmem>>, %arg7: memref<512x32xf32, #tpu.memory_space<vmem>>, %arg8: memref<1x32xf32, #tpu.memory_space<vmem>>, %arg9: memref<2x32xf32, #tpu.memory_space<vmem>>) attributes {dimension_semantics = [], scalar_prefetch = 0 : i64, scratch_operands = 0 : i64, tpu.core_type = #tpu.core_type<tc>} {
    %0 = tpu.iota {dimensions = array<i32: 1>} : vector<2x128xi32>
    %c64_i32 = arith.constant 64 : i32
    %1 = vector.broadcast %c64_i32 : i32 to vector<2x128xi32>
    %2 = arith.cmpi sge, %0, %1 : vector<2x128xi32>
    %c96_i32 = arith.constant 96 : i32
    %3 = vector.broadcast %c96_i32 : i32 to vector<2x128xi32>
    %4 = arith.cmpi slt, %0, %3 : vector<2x128xi32>
    %5 = arith.andi %2, %4 : vector<2x128xi1>
    %c0 = arith.constant 0 : index
    %c0_0 = arith.constant 0 : index
    %c0_1 = arith.constant 0 : index
    %6 = vector.load %arg0[%c0, %c0_0, %c0_1] : memref<2x16x4xf32, #tpu.memory_space<vmem>>, vector<2x1x4xf32>
    %7 = vector.shape_cast %6 : vector<2x1x4xf32> to vector<2x4xf32>
    %c0_2 = arith.constant 0 : index
    %c1 = arith.constant 1 : index
    %c0_3 = arith.constant 0 : index
    %8 = vector.load %arg0[%c0_2, %c1, %c0_3] : memref<2x16x4xf32, #tpu.memory_space<vmem>>, vector<2x1x4xf32>
    %9 = vector.shape_cast %8 : vector<2x1x4xf32> to vector<2x4xf32>
    %c0_4 = arith.constant 0 : index
    %c2 = arith.constant 2 : index
    %c0_5 = arith.constant 0 : index
    %10 = vector.load %arg0[%c0_4, %c2, %c0_5] : memref<2x16x4xf32, #tpu.memory_space<vmem>>, vector<2x1x4xf32>
    %11 = vector.shape_cast %10 : vector<2x1x4xf32> to vector<2x4xf32>
    %c0_6 = arith.constant 0 : index
    %c3 = arith.constant 3 : index
    %c0_7 = arith.constant 0 : index
    %12 = vector.load %arg0[%c0_6, %c3, %c0_7] : memref<2x16x4xf32, #tpu.memory_space<vmem>>, vector<2x1x4xf32>
    %13 = vector.shape_cast %12 : vector<2x1x4xf32> to vector<2x4xf32>
    %c0_8 = arith.constant 0 : index
    %c4 = arith.constant 4 : index
    %c0_9 = arith.constant 0 : index
    %14 = vector.load %arg0[%c0_8, %c4, %c0_9] : memref<2x16x4xf32, #tpu.memory_space<vmem>>, vector<2x1x4xf32>
    %15 = vector.shape_cast %14 : vector<2x1x4xf32> to vector<2x4xf32>
    %c0_10 = arith.constant 0 : index
    %c5 = arith.constant 5 : index
    %c0_11 = arith.constant 0 : index
    %16 = vector.load %arg0[%c0_10, %c5, %c0_11] : memref<2x16x4xf32, #tpu.memory_space<vmem>>, vector<2x1x4xf32>
    %17 = vector.shape_cast %16 : vector<2x1x4xf32> to vector<2x4xf32>
    %c0_12 = arith.constant 0 : index
    %c6 = arith.constant 6 : index
    %c0_13 = arith.constant 0 : index
    %18 = vector.load %arg0[%c0_12, %c6, %c0_13] : memref<2x16x4xf32, #tpu.memory_space<vmem>>, vector<2x1x4xf32>
    %19 = vector.shape_cast %18 : vector<2x1x4xf32> to vector<2x4xf32>
    %c0_14 = arith.constant 0 : index
    %c7 = arith.constant 7 : index
    %c0_15 = arith.constant 0 : index
    %20 = vector.load %arg0[%c0_14, %c7, %c0_15] : memref<2x16x4xf32, #tpu.memory_space<vmem>>, vector<2x1x4xf32>
    %21 = vector.shape_cast %20 : vector<2x1x4xf32> to vector<2x4xf32>
    %c0_16 = arith.constant 0 : index
    %c8 = arith.constant 8 : index
    %c0_17 = arith.constant 0 : index
    %22 = vector.load %arg0[%c0_16, %c8, %c0_17] : memref<2x16x4xf32, #tpu.memory_space<vmem>>, vector<2x1x4xf32>
    %23 = vector.shape_cast %22 : vector<2x1x4xf32> to vector<2x4xf32>
    %c0_18 = arith.constant 0 : index
    %c9 = arith.constant 9 : index
    %c0_19 = arith.constant 0 : index
    %24 = vector.load %arg0[%c0_18, %c9, %c0_19] : memref<2x16x4xf32, #tpu.memory_space<vmem>>, vector<2x1x4xf32>
    %25 = vector.shape_cast %24 : vector<2x1x4xf32> to vector<2x4xf32>
    %c0_20 = arith.constant 0 : index
    %c10 = arith.constant 10 : index
    %c0_21 = arith.constant 0 : index
    %26 = vector.load %arg0[%c0_20, %c10, %c0_21] : memref<2x16x4xf32, #tpu.memory_space<vmem>>, vector<2x1x4xf32>
    %27 = vector.shape_cast %26 : vector<2x1x4xf32> to vector<2x4xf32>
    %c0_22 = arith.constant 0 : index
    %c11 = arith.constant 11 : index
    %c0_23 = arith.constant 0 : index
    %28 = vector.load %arg0[%c0_22, %c11, %c0_23] : memref<2x16x4xf32, #tpu.memory_space<vmem>>, vector<2x1x4xf32>
    %29 = vector.shape_cast %28 : vector<2x1x4xf32> to vector<2x4xf32>
    %c0_24 = arith.constant 0 : index
    %c12 = arith.constant 12 : index
    %c0_25 = arith.constant 0 : index
    %30 = vector.load %arg0[%c0_24, %c12, %c0_25] : memref<2x16x4xf32, #tpu.memory_space<vmem>>, vector<2x1x4xf32>
    %31 = vector.shape_cast %30 : vector<2x1x4xf32> to vector<2x4xf32>
    %c0_26 = arith.constant 0 : index
    %c13 = arith.constant 13 : index
    %c0_27 = arith.constant 0 : index
    %32 = vector.load %arg0[%c0_26, %c13, %c0_27] : memref<2x16x4xf32, #tpu.memory_space<vmem>>, vector<2x1x4xf32>
    %33 = vector.shape_cast %32 : vector<2x1x4xf32> to vector<2x4xf32>
    %c0_28 = arith.constant 0 : index
    %c14 = arith.constant 14 : index
    %c0_29 = arith.constant 0 : index
    %34 = vector.load %arg0[%c0_28, %c14, %c0_29] : memref<2x16x4xf32, #tpu.memory_space<vmem>>, vector<2x1x4xf32>
    %35 = vector.shape_cast %34 : vector<2x1x4xf32> to vector<2x4xf32>
    %c0_30 = arith.constant 0 : index
    %c15 = arith.constant 15 : index
    %c0_31 = arith.constant 0 : index
    %36 = vector.load %arg0[%c0_30, %c15, %c0_31] : memref<2x16x4xf32, #tpu.memory_space<vmem>>, vector<2x1x4xf32>
    %37 = vector.shape_cast %36 : vector<2x1x4xf32> to vector<2x4xf32>
    %38 = tpu.concatenate %7, %9, %11, %13, %15, %17, %19, %21, %23, %25, %27, %29, %31, %33, %35, %37 in 0 : vector<2x4xf32>, vector<2x4xf32>, vector<2x4xf32>, vector<2x4xf32>, vector<2x4xf32>, vector<2x4xf32>, vector<2x4xf32>, vector<2x4xf32>, vector<2x4xf32>, vector<2x4xf32>, vector<2x4xf32>, vector<2x4xf32>, vector<2x4xf32>, vector<2x4xf32>, vector<2x4xf32>, vector<2x4xf32> -> vector<32x4xf32>
    %c0_32 = arith.constant 0 : index
    %c0_33 = arith.constant 0 : index
    %39 = vector.load %arg1[%c0_32, %c0_33] : memref<4x128xf32, #tpu.memory_space<vmem>>, vector<4x128xf32>
    %c0_34 = arith.constant 0 : index
    %c0_35 = arith.constant 0 : index
    %40 = vector.load %arg2[%c0_34, %c0_35] : memref<32x128xf32, #tpu.memory_space<vmem>>, vector<32x128xf32>
    %c0_36 = arith.constant 0 : index
    %c0_37 = arith.constant 0 : index
    %41 = vector.load %arg3[%c0_36, %c0_37] : memref<1x128xf32, #tpu.memory_space<vmem>>, vector<1x128xf32>
    %cst = arith.constant dense<0.000000e+00> : vector<32x128xf32>
    %42 = tpu.matmul %38, %39, %cst {dimension_numbers = #tpu.dot_dimension_numbers<[1], [0], [0], [1], [0, 0, 1, 1], [], []>} : vector<32x4xf32>, vector<4x128xf32>, vector<32x128xf32> -> vector<32x128xf32>
    %43 = vector.broadcast %41 : vector<1x128xf32> to vector<32x128xf32>
    %44 = arith.addf %42, %43 : vector<32x128xf32>
    %cst_38 = arith.constant 0.000000e+00 : f32
    %45 = vector.broadcast %cst_38 : f32 to vector<2x32xf32>
    %cst_39 = arith.constant 0.000000e+00 : f32
    %46 = vector.broadcast %cst_39 : f32 to vector<2x32xf32>
    %47 = vector.extract_strided_slice %44 {offsets = [0, 0], sizes = [2, 128], strides = [1, 1]} : vector<32x128xf32> to vector<2x128xf32>
    %cst_40 = arith.constant dense<0.000000e+00> : vector<2x128xf32>
    %48 = tpu.matmul %45, %40, %cst_40 {dimension_numbers = #tpu.dot_dimension_numbers<[1], [0], [0], [1], [0, 0, 1, 1], [], []>} : vector<2x32xf32>, vector<32x128xf32>, vector<2x128xf32> -> vector<2x128xf32>
    %49 = arith.addf %47, %48 : vector<2x128xf32>
    %50 = math.tanh %49 : vector<2x128xf32>
    %51 = arith.negf %49 : vector<2x128xf32>
    %52 = math.exp %51 : vector<2x128xf32>
    %cst_41 = arith.constant 1.000000e+00 : f32
    %53 = vector.broadcast %cst_41 : f32 to vector<2x128xf32>
    %54 = arith.addf %53, %52 : vector<2x128xf32>
    %55 = arith.divf %53, %54 : vector<2x128xf32>
    %56 = arith.select %5, %50, %55 : vector<2x128xi1>, vector<2x128xf32>
    %57 = vector.extract_strided_slice %56 {offsets = [0, 0], sizes = [2, 32], strides = [1, 1]} : vector<2x128xf32> to vector<2x32xf32>
    %58 = vector.extract_strided_slice %56 {offsets = [0, 32], sizes = [2, 32], strides = [1, 1]} : vector<2x128xf32> to vector<2x32xf32>
    %59 = vector.extract_strided_slice %56 {offsets = [0, 64], sizes = [2, 32], strides = [1, 1]} : vector<2x128xf32> to vector<2x32xf32>
    %60 = vector.extract_strided_slice %56 {offsets = [0, 96], sizes = [2, 32], strides = [1, 1]} : vector<2x128xf32> to vector<2x32xf32>
    %61 = arith.mulf %58, %46 : vector<2x32xf32>
    %62 = arith.mulf %57, %59 : vector<2x32xf32>
    %63 = arith.addf %61, %62 : vector<2x32xf32>
    %64 = math.tanh %63 : vector<2x32xf32>
    %65 = arith.mulf %60, %64 : vector<2x32xf32>
    %66 = vector.extract_strided_slice %44 {offsets = [2, 0], sizes = [2, 128], strides = [1, 1]} : vector<32x128xf32> to vector<2x128xf32>
    %cst_42 = arith.constant dense<0.000000e+00> : vector<2x128xf32>
    %67 = tpu.matmul %65, %40, %cst_42 {dimension_numbers = #tpu.dot_dimension_numbers<[1], [0], [0], [1], [0, 0, 1, 1], [], []>} : vector<2x32xf32>, vector<32x128xf32>, vector<2x128xf32> -> vector<2x128xf32>
    %68 = arith.addf %66, %67 : vector<2x128xf32>
    %69 = math.tanh %68 : vector<2x128xf32>
    %70 = arith.negf %68 : vector<2x128xf32>
    %71 = math.exp %70 : vector<2x128xf32>
    %cst_43 = arith.constant 1.000000e+00 : f32
    %72 = vector.broadcast %cst_43 : f32 to vector<2x128xf32>
    %73 = arith.addf %72, %71 : vector<2x128xf32>
    %74 = arith.divf %72, %73 : vector<2x128xf32>
    %75 = arith.select %5, %69, %74 : vector<2x128xi1>, vector<2x128xf32>
    %76 = vector.extract_strided_slice %75 {offsets = [0, 0], sizes = [2, 32], strides = [1, 1]} : vector<2x128xf32> to vector<2x32xf32>
    %77 = vector.extract_strided_slice %75 {offsets = [0, 32], sizes = [2, 32], strides = [1, 1]} : vector<2x128xf32> to vector<2x32xf32>
    %78 = vector.extract_strided_slice %75 {offsets = [0, 64], sizes = [2, 32], strides = [1, 1]} : vector<2x128xf32> to vector<2x32xf32>
    %79 = vector.extract_strided_slice %75 {offsets = [0, 96], sizes = [2, 32], strides = [1, 1]} : vector<2x128xf32> to vector<2x32xf32>
    %80 = arith.mulf %77, %63 : vector<2x32xf32>
    %81 = arith.mulf %76, %78 : vector<2x32xf32>
    %82 = arith.addf %80, %81 : vector<2x32xf32>
    %83 = math.tanh %82 : vector<2x32xf32>
    %84 = arith.mulf %79, %83 : vector<2x32xf32>
    %85 = vector.extract_strided_slice %44 {offsets = [4, 0], sizes = [2, 128], strides = [1, 1]} : vector<32x128xf32> to vector<2x128xf32>
    %cst_44 = arith.constant dense<0.000000e+00> : vector<2x128xf32>
    %86 = tpu.matmul %84, %40, %cst_44 {dimension_numbers = #tpu.dot_dimension_numbers<[1], [0], [0], [1], [0, 0, 1, 1], [], []>} : vector<2x32xf32>, vector<32x128xf32>, vector<2x128xf32> -> vector<2x128xf32>
    %87 = arith.addf %85, %86 : vector<2x128xf32>
    %88 = math.tanh %87 : vector<2x128xf32>
    %89 = arith.negf %87 : vector<2x128xf32>
    %90 = math.exp %89 : vector<2x128xf32>
    %cst_45 = arith.constant 1.000000e+00 : f32
    %91 = vector.broadcast %cst_45 : f32 to vector<2x128xf32>
    %92 = arith.addf %91, %90 : vector<2x128xf32>
    %93 = arith.divf %91, %92 : vector<2x128xf32>
    %94 = arith.select %5, %88, %93 : vector<2x128xi1>, vector<2x128xf32>
    %95 = vector.extract_strided_slice %94 {offsets = [0, 0], sizes = [2, 32], strides = [1, 1]} : vector<2x128xf32> to vector<2x32xf32>
    %96 = vector.extract_strided_slice %94 {offsets = [0, 32], sizes = [2, 32], strides = [1, 1]} : vector<2x128xf32> to vector<2x32xf32>
    %97 = vector.extract_strided_slice %94 {offsets = [0, 64], sizes = [2, 32], strides = [1, 1]} : vector<2x128xf32> to vector<2x32xf32>
    %98 = vector.extract_strided_slice %94 {offsets = [0, 96], sizes = [2, 32], strides = [1, 1]} : vector<2x128xf32> to vector<2x32xf32>
    %99 = arith.mulf %96, %82 : vector<2x32xf32>
    %100 = arith.mulf %95, %97 : vector<2x32xf32>
    %101 = arith.addf %99, %100 : vector<2x32xf32>
    %102 = math.tanh %101 : vector<2x32xf32>
    %103 = arith.mulf %98, %102 : vector<2x32xf32>
    %104 = vector.extract_strided_slice %44 {offsets = [6, 0], sizes = [2, 128], strides = [1, 1]} : vector<32x128xf32> to vector<2x128xf32>
    %cst_46 = arith.constant dense<0.000000e+00> : vector<2x128xf32>
    %105 = tpu.matmul %103, %40, %cst_46 {dimension_numbers = #tpu.dot_dimension_numbers<[1], [0], [0], [1], [0, 0, 1, 1], [], []>} : vector<2x32xf32>, vector<32x128xf32>, vector<2x128xf32> -> vector<2x128xf32>
    %106 = arith.addf %104, %105 : vector<2x128xf32>
    %107 = math.tanh %106 : vector<2x128xf32>
    %108 = arith.negf %106 : vector<2x128xf32>
    %109 = math.exp %108 : vector<2x128xf32>
    %cst_47 = arith.constant 1.000000e+00 : f32
    %110 = vector.broadcast %cst_47 : f32 to vector<2x128xf32>
    %111 = arith.addf %110, %109 : vector<2x128xf32>
    %112 = arith.divf %110, %111 : vector<2x128xf32>
    %113 = arith.select %5, %107, %112 : vector<2x128xi1>, vector<2x128xf32>
    %114 = vector.extract_strided_slice %113 {offsets = [0, 0], sizes = [2, 32], strides = [1, 1]} : vector<2x128xf32> to vector<2x32xf32>
    %115 = vector.extract_strided_slice %113 {offsets = [0, 32], sizes = [2, 32], strides = [1, 1]} : vector<2x128xf32> to vector<2x32xf32>
    %116 = vector.extract_strided_slice %113 {offsets = [0, 64], sizes = [2, 32], strides = [1, 1]} : vector<2x128xf32> to vector<2x32xf32>
    %117 = vector.extract_strided_slice %113 {offsets = [0, 96], sizes = [2, 32], strides = [1, 1]} : vector<2x128xf32> to vector<2x32xf32>
    %118 = arith.mulf %115, %101 : vector<2x32xf32>
    %119 = arith.mulf %114, %116 : vector<2x32xf32>
    %120 = arith.addf %118, %119 : vector<2x32xf32>
    %121 = math.tanh %120 : vector<2x32xf32>
    %122 = arith.mulf %117, %121 : vector<2x32xf32>
    %123 = vector.extract_strided_slice %44 {offsets = [8, 0], sizes = [2, 128], strides = [1, 1]} : vector<32x128xf32> to vector<2x128xf32>
    %cst_48 = arith.constant dense<0.000000e+00> : vector<2x128xf32>
    %124 = tpu.matmul %122, %40, %cst_48 {dimension_numbers = #tpu.dot_dimension_numbers<[1], [0], [0], [1], [0, 0, 1, 1], [], []>} : vector<2x32xf32>, vector<32x128xf32>, vector<2x128xf32> -> vector<2x128xf32>
    %125 = arith.addf %123, %124 : vector<2x128xf32>
    %126 = math.tanh %125 : vector<2x128xf32>
    %127 = arith.negf %125 : vector<2x128xf32>
    %128 = math.exp %127 : vector<2x128xf32>
    %cst_49 = arith.constant 1.000000e+00 : f32
    %129 = vector.broadcast %cst_49 : f32 to vector<2x128xf32>
    %130 = arith.addf %129, %128 : vector<2x128xf32>
    %131 = arith.divf %129, %130 : vector<2x128xf32>
    %132 = arith.select %5, %126, %131 : vector<2x128xi1>, vector<2x128xf32>
    %133 = vector.extract_strided_slice %132 {offsets = [0, 0], sizes = [2, 32], strides = [1, 1]} : vector<2x128xf32> to vector<2x32xf32>
    %134 = vector.extract_strided_slice %132 {offsets = [0, 32], sizes = [2, 32], strides = [1, 1]} : vector<2x128xf32> to vector<2x32xf32>
    %135 = vector.extract_strided_slice %132 {offsets = [0, 64], sizes = [2, 32], strides = [1, 1]} : vector<2x128xf32> to vector<2x32xf32>
    %136 = vector.extract_strided_slice %132 {offsets = [0, 96], sizes = [2, 32], strides = [1, 1]} : vector<2x128xf32> to vector<2x32xf32>
    %137 = arith.mulf %134, %120 : vector<2x32xf32>
    %138 = arith.mulf %133, %135 : vector<2x32xf32>
    %139 = arith.addf %137, %138 : vector<2x32xf32>
    %140 = math.tanh %139 : vector<2x32xf32>
    %141 = arith.mulf %136, %140 : vector<2x32xf32>
    %142 = vector.extract_strided_slice %44 {offsets = [10, 0], sizes = [2, 128], strides = [1, 1]} : vector<32x128xf32> to vector<2x128xf32>
    %cst_50 = arith.constant dense<0.000000e+00> : vector<2x128xf32>
    %143 = tpu.matmul %141, %40, %cst_50 {dimension_numbers = #tpu.dot_dimension_numbers<[1], [0], [0], [1], [0, 0, 1, 1], [], []>} : vector<2x32xf32>, vector<32x128xf32>, vector<2x128xf32> -> vector<2x128xf32>
    %144 = arith.addf %142, %143 : vector<2x128xf32>
    %145 = math.tanh %144 : vector<2x128xf32>
    %146 = arith.negf %144 : vector<2x128xf32>
    %147 = math.exp %146 : vector<2x128xf32>
    %cst_51 = arith.constant 1.000000e+00 : f32
    %148 = vector.broadcast %cst_51 : f32 to vector<2x128xf32>
    %149 = arith.addf %148, %147 : vector<2x128xf32>
    %150 = arith.divf %148, %149 : vector<2x128xf32>
    %151 = arith.select %5, %145, %150 : vector<2x128xi1>, vector<2x128xf32>
    %152 = vector.extract_strided_slice %151 {offsets = [0, 0], sizes = [2, 32], strides = [1, 1]} : vector<2x128xf32> to vector<2x32xf32>
    %153 = vector.extract_strided_slice %151 {offsets = [0, 32], sizes = [2, 32], strides = [1, 1]} : vector<2x128xf32> to vector<2x32xf32>
    %154 = vector.extract_strided_slice %151 {offsets = [0, 64], sizes = [2, 32], strides = [1, 1]} : vector<2x128xf32> to vector<2x32xf32>
    %155 = vector.extract_strided_slice %151 {offsets = [0, 96], sizes = [2, 32], strides = [1, 1]} : vector<2x128xf32> to vector<2x32xf32>
    %156 = arith.mulf %153, %139 : vector<2x32xf32>
    %157 = arith.mulf %152, %154 : vector<2x32xf32>
    %158 = arith.addf %156, %157 : vector<2x32xf32>
    %159 = math.tanh %158 : vector<2x32xf32>
    %160 = arith.mulf %155, %159 : vector<2x32xf32>
    %161 = vector.extract_strided_slice %44 {offsets = [12, 0], sizes = [2, 128], strides = [1, 1]} : vector<32x128xf32> to vector<2x128xf32>
    %cst_52 = arith.constant dense<0.000000e+00> : vector<2x128xf32>
    %162 = tpu.matmul %160, %40, %cst_52 {dimension_numbers = #tpu.dot_dimension_numbers<[1], [0], [0], [1], [0, 0, 1, 1], [], []>} : vector<2x32xf32>, vector<32x128xf32>, vector<2x128xf32> -> vector<2x128xf32>
    %163 = arith.addf %161, %162 : vector<2x128xf32>
    %164 = math.tanh %163 : vector<2x128xf32>
    %165 = arith.negf %163 : vector<2x128xf32>
    %166 = math.exp %165 : vector<2x128xf32>
    %cst_53 = arith.constant 1.000000e+00 : f32
    %167 = vector.broadcast %cst_53 : f32 to vector<2x128xf32>
    %168 = arith.addf %167, %166 : vector<2x128xf32>
    %169 = arith.divf %167, %168 : vector<2x128xf32>
    %170 = arith.select %5, %164, %169 : vector<2x128xi1>, vector<2x128xf32>
    %171 = vector.extract_strided_slice %170 {offsets = [0, 0], sizes = [2, 32], strides = [1, 1]} : vector<2x128xf32> to vector<2x32xf32>
    %172 = vector.extract_strided_slice %170 {offsets = [0, 32], sizes = [2, 32], strides = [1, 1]} : vector<2x128xf32> to vector<2x32xf32>
    %173 = vector.extract_strided_slice %170 {offsets = [0, 64], sizes = [2, 32], strides = [1, 1]} : vector<2x128xf32> to vector<2x32xf32>
    %174 = vector.extract_strided_slice %170 {offsets = [0, 96], sizes = [2, 32], strides = [1, 1]} : vector<2x128xf32> to vector<2x32xf32>
    %175 = arith.mulf %172, %158 : vector<2x32xf32>
    %176 = arith.mulf %171, %173 : vector<2x32xf32>
    %177 = arith.addf %175, %176 : vector<2x32xf32>
    %178 = math.tanh %177 : vector<2x32xf32>
    %179 = arith.mulf %174, %178 : vector<2x32xf32>
    %180 = vector.extract_strided_slice %44 {offsets = [14, 0], sizes = [2, 128], strides = [1, 1]} : vector<32x128xf32> to vector<2x128xf32>
    %cst_54 = arith.constant dense<0.000000e+00> : vector<2x128xf32>
    %181 = tpu.matmul %179, %40, %cst_54 {dimension_numbers = #tpu.dot_dimension_numbers<[1], [0], [0], [1], [0, 0, 1, 1], [], []>} : vector<2x32xf32>, vector<32x128xf32>, vector<2x128xf32> -> vector<2x128xf32>
    %182 = arith.addf %180, %181 : vector<2x128xf32>
    %183 = math.tanh %182 : vector<2x128xf32>
    %184 = arith.negf %182 : vector<2x128xf32>
    %185 = math.exp %184 : vector<2x128xf32>
    %cst_55 = arith.constant 1.000000e+00 : f32
    %186 = vector.broadcast %cst_55 : f32 to vector<2x128xf32>
    %187 = arith.addf %186, %185 : vector<2x128xf32>
    %188 = arith.divf %186, %187 : vector<2x128xf32>
    %189 = arith.select %5, %183, %188 : vector<2x128xi1>, vector<2x128xf32>
    %190 = vector.extract_strided_slice %189 {offsets = [0, 0], sizes = [2, 32], strides = [1, 1]} : vector<2x128xf32> to vector<2x32xf32>
    %191 = vector.extract_strided_slice %189 {offsets = [0, 32], sizes = [2, 32], strides = [1, 1]} : vector<2x128xf32> to vector<2x32xf32>
    %192 = vector.extract_strided_slice %189 {offsets = [0, 64], sizes = [2, 32], strides = [1, 1]} : vector<2x128xf32> to vector<2x32xf32>
    %193 = vector.extract_strided_slice %189 {offsets = [0, 96], sizes = [2, 32], strides = [1, 1]} : vector<2x128xf32> to vector<2x32xf32>
    %194 = arith.mulf %191, %177 : vector<2x32xf32>
    %195 = arith.mulf %190, %192 : vector<2x32xf32>
    %196 = arith.addf %194, %195 : vector<2x32xf32>
    %197 = math.tanh %196 : vector<2x32xf32>
    %198 = arith.mulf %193, %197 : vector<2x32xf32>
    %199 = vector.extract_strided_slice %44 {offsets = [16, 0], sizes = [2, 128], strides = [1, 1]} : vector<32x128xf32> to vector<2x128xf32>
    %cst_56 = arith.constant dense<0.000000e+00> : vector<2x128xf32>
    %200 = tpu.matmul %198, %40, %cst_56 {dimension_numbers = #tpu.dot_dimension_numbers<[1], [0], [0], [1], [0, 0, 1, 1], [], []>} : vector<2x32xf32>, vector<32x128xf32>, vector<2x128xf32> -> vector<2x128xf32>
    %201 = arith.addf %199, %200 : vector<2x128xf32>
    %202 = math.tanh %201 : vector<2x128xf32>
    %203 = arith.negf %201 : vector<2x128xf32>
    %204 = math.exp %203 : vector<2x128xf32>
    %cst_57 = arith.constant 1.000000e+00 : f32
    %205 = vector.broadcast %cst_57 : f32 to vector<2x128xf32>
    %206 = arith.addf %205, %204 : vector<2x128xf32>
    %207 = arith.divf %205, %206 : vector<2x128xf32>
    %208 = arith.select %5, %202, %207 : vector<2x128xi1>, vector<2x128xf32>
    %209 = vector.extract_strided_slice %208 {offsets = [0, 0], sizes = [2, 32], strides = [1, 1]} : vector<2x128xf32> to vector<2x32xf32>
    %210 = vector.extract_strided_slice %208 {offsets = [0, 32], sizes = [2, 32], strides = [1, 1]} : vector<2x128xf32> to vector<2x32xf32>
    %211 = vector.extract_strided_slice %208 {offsets = [0, 64], sizes = [2, 32], strides = [1, 1]} : vector<2x128xf32> to vector<2x32xf32>
    %212 = vector.extract_strided_slice %208 {offsets = [0, 96], sizes = [2, 32], strides = [1, 1]} : vector<2x128xf32> to vector<2x32xf32>
    %213 = arith.mulf %210, %196 : vector<2x32xf32>
    %214 = arith.mulf %209, %211 : vector<2x32xf32>
    %215 = arith.addf %213, %214 : vector<2x32xf32>
    %216 = math.tanh %215 : vector<2x32xf32>
    %217 = arith.mulf %212, %216 : vector<2x32xf32>
    %218 = vector.extract_strided_slice %44 {offsets = [18, 0], sizes = [2, 128], strides = [1, 1]} : vector<32x128xf32> to vector<2x128xf32>
    %cst_58 = arith.constant dense<0.000000e+00> : vector<2x128xf32>
    %219 = tpu.matmul %217, %40, %cst_58 {dimension_numbers = #tpu.dot_dimension_numbers<[1], [0], [0], [1], [0, 0, 1, 1], [], []>} : vector<2x32xf32>, vector<32x128xf32>, vector<2x128xf32> -> vector<2x128xf32>
    %220 = arith.addf %218, %219 : vector<2x128xf32>
    %221 = math.tanh %220 : vector<2x128xf32>
    %222 = arith.negf %220 : vector<2x128xf32>
    %223 = math.exp %222 : vector<2x128xf32>
    %cst_59 = arith.constant 1.000000e+00 : f32
    %224 = vector.broadcast %cst_59 : f32 to vector<2x128xf32>
    %225 = arith.addf %224, %223 : vector<2x128xf32>
    %226 = arith.divf %224, %225 : vector<2x128xf32>
    %227 = arith.select %5, %221, %226 : vector<2x128xi1>, vector<2x128xf32>
    %228 = vector.extract_strided_slice %227 {offsets = [0, 0], sizes = [2, 32], strides = [1, 1]} : vector<2x128xf32> to vector<2x32xf32>
    %229 = vector.extract_strided_slice %227 {offsets = [0, 32], sizes = [2, 32], strides = [1, 1]} : vector<2x128xf32> to vector<2x32xf32>
    %230 = vector.extract_strided_slice %227 {offsets = [0, 64], sizes = [2, 32], strides = [1, 1]} : vector<2x128xf32> to vector<2x32xf32>
    %231 = vector.extract_strided_slice %227 {offsets = [0, 96], sizes = [2, 32], strides = [1, 1]} : vector<2x128xf32> to vector<2x32xf32>
    %232 = arith.mulf %229, %215 : vector<2x32xf32>
    %233 = arith.mulf %228, %230 : vector<2x32xf32>
    %234 = arith.addf %232, %233 : vector<2x32xf32>
    %235 = math.tanh %234 : vector<2x32xf32>
    %236 = arith.mulf %231, %235 : vector<2x32xf32>
    %237 = vector.extract_strided_slice %44 {offsets = [20, 0], sizes = [2, 128], strides = [1, 1]} : vector<32x128xf32> to vector<2x128xf32>
    %cst_60 = arith.constant dense<0.000000e+00> : vector<2x128xf32>
    %238 = tpu.matmul %236, %40, %cst_60 {dimension_numbers = #tpu.dot_dimension_numbers<[1], [0], [0], [1], [0, 0, 1, 1], [], []>} : vector<2x32xf32>, vector<32x128xf32>, vector<2x128xf32> -> vector<2x128xf32>
    %239 = arith.addf %237, %238 : vector<2x128xf32>
    %240 = math.tanh %239 : vector<2x128xf32>
    %241 = arith.negf %239 : vector<2x128xf32>
    %242 = math.exp %241 : vector<2x128xf32>
    %cst_61 = arith.constant 1.000000e+00 : f32
    %243 = vector.broadcast %cst_61 : f32 to vector<2x128xf32>
    %244 = arith.addf %243, %242 : vector<2x128xf32>
    %245 = arith.divf %243, %244 : vector<2x128xf32>
    %246 = arith.select %5, %240, %245 : vector<2x128xi1>, vector<2x128xf32>
    %247 = vector.extract_strided_slice %246 {offsets = [0, 0], sizes = [2, 32], strides = [1, 1]} : vector<2x128xf32> to vector<2x32xf32>
    %248 = vector.extract_strided_slice %246 {offsets = [0, 32], sizes = [2, 32], strides = [1, 1]} : vector<2x128xf32> to vector<2x32xf32>
    %249 = vector.extract_strided_slice %246 {offsets = [0, 64], sizes = [2, 32], strides = [1, 1]} : vector<2x128xf32> to vector<2x32xf32>
    %250 = vector.extract_strided_slice %246 {offsets = [0, 96], sizes = [2, 32], strides = [1, 1]} : vector<2x128xf32> to vector<2x32xf32>
    %251 = arith.mulf %248, %234 : vector<2x32xf32>
    %252 = arith.mulf %247, %249 : vector<2x32xf32>
    %253 = arith.addf %251, %252 : vector<2x32xf32>
    %254 = math.tanh %253 : vector<2x32xf32>
    %255 = arith.mulf %250, %254 : vector<2x32xf32>
    %256 = vector.extract_strided_slice %44 {offsets = [22, 0], sizes = [2, 128], strides = [1, 1]} : vector<32x128xf32> to vector<2x128xf32>
    %cst_62 = arith.constant dense<0.000000e+00> : vector<2x128xf32>
    %257 = tpu.matmul %255, %40, %cst_62 {dimension_numbers = #tpu.dot_dimension_numbers<[1], [0], [0], [1], [0, 0, 1, 1], [], []>} : vector<2x32xf32>, vector<32x128xf32>, vector<2x128xf32> -> vector<2x128xf32>
    %258 = arith.addf %256, %257 : vector<2x128xf32>
    %259 = math.tanh %258 : vector<2x128xf32>
    %260 = arith.negf %258 : vector<2x128xf32>
    %261 = math.exp %260 : vector<2x128xf32>
    %cst_63 = arith.constant 1.000000e+00 : f32
    %262 = vector.broadcast %cst_63 : f32 to vector<2x128xf32>
    %263 = arith.addf %262, %261 : vector<2x128xf32>
    %264 = arith.divf %262, %263 : vector<2x128xf32>
    %265 = arith.select %5, %259, %264 : vector<2x128xi1>, vector<2x128xf32>
    %266 = vector.extract_strided_slice %265 {offsets = [0, 0], sizes = [2, 32], strides = [1, 1]} : vector<2x128xf32> to vector<2x32xf32>
    %267 = vector.extract_strided_slice %265 {offsets = [0, 32], sizes = [2, 32], strides = [1, 1]} : vector<2x128xf32> to vector<2x32xf32>
    %268 = vector.extract_strided_slice %265 {offsets = [0, 64], sizes = [2, 32], strides = [1, 1]} : vector<2x128xf32> to vector<2x32xf32>
    %269 = vector.extract_strided_slice %265 {offsets = [0, 96], sizes = [2, 32], strides = [1, 1]} : vector<2x128xf32> to vector<2x32xf32>
    %270 = arith.mulf %267, %253 : vector<2x32xf32>
    %271 = arith.mulf %266, %268 : vector<2x32xf32>
    %272 = arith.addf %270, %271 : vector<2x32xf32>
    %273 = math.tanh %272 : vector<2x32xf32>
    %274 = arith.mulf %269, %273 : vector<2x32xf32>
    %275 = vector.extract_strided_slice %44 {offsets = [24, 0], sizes = [2, 128], strides = [1, 1]} : vector<32x128xf32> to vector<2x128xf32>
    %cst_64 = arith.constant dense<0.000000e+00> : vector<2x128xf32>
    %276 = tpu.matmul %274, %40, %cst_64 {dimension_numbers = #tpu.dot_dimension_numbers<[1], [0], [0], [1], [0, 0, 1, 1], [], []>} : vector<2x32xf32>, vector<32x128xf32>, vector<2x128xf32> -> vector<2x128xf32>
    %277 = arith.addf %275, %276 : vector<2x128xf32>
    %278 = math.tanh %277 : vector<2x128xf32>
    %279 = arith.negf %277 : vector<2x128xf32>
    %280 = math.exp %279 : vector<2x128xf32>
    %cst_65 = arith.constant 1.000000e+00 : f32
    %281 = vector.broadcast %cst_65 : f32 to vector<2x128xf32>
    %282 = arith.addf %281, %280 : vector<2x128xf32>
    %283 = arith.divf %281, %282 : vector<2x128xf32>
    %284 = arith.select %5, %278, %283 : vector<2x128xi1>, vector<2x128xf32>
    %285 = vector.extract_strided_slice %284 {offsets = [0, 0], sizes = [2, 32], strides = [1, 1]} : vector<2x128xf32> to vector<2x32xf32>
    %286 = vector.extract_strided_slice %284 {offsets = [0, 32], sizes = [2, 32], strides = [1, 1]} : vector<2x128xf32> to vector<2x32xf32>
    %287 = vector.extract_strided_slice %284 {offsets = [0, 64], sizes = [2, 32], strides = [1, 1]} : vector<2x128xf32> to vector<2x32xf32>
    %288 = vector.extract_strided_slice %284 {offsets = [0, 96], sizes = [2, 32], strides = [1, 1]} : vector<2x128xf32> to vector<2x32xf32>
    %289 = arith.mulf %286, %272 : vector<2x32xf32>
    %290 = arith.mulf %285, %287 : vector<2x32xf32>
    %291 = arith.addf %289, %290 : vector<2x32xf32>
    %292 = math.tanh %291 : vector<2x32xf32>
    %293 = arith.mulf %288, %292 : vector<2x32xf32>
    %294 = vector.extract_strided_slice %44 {offsets = [26, 0], sizes = [2, 128], strides = [1, 1]} : vector<32x128xf32> to vector<2x128xf32>
    %cst_66 = arith.constant dense<0.000000e+00> : vector<2x128xf32>
    %295 = tpu.matmul %293, %40, %cst_66 {dimension_numbers = #tpu.dot_dimension_numbers<[1], [0], [0], [1], [0, 0, 1, 1], [], []>} : vector<2x32xf32>, vector<32x128xf32>, vector<2x128xf32> -> vector<2x128xf32>
    %296 = arith.addf %294, %295 : vector<2x128xf32>
    %297 = math.tanh %296 : vector<2x128xf32>
    %298 = arith.negf %296 : vector<2x128xf32>
    %299 = math.exp %298 : vector<2x128xf32>
    %cst_67 = arith.constant 1.000000e+00 : f32
    %300 = vector.broadcast %cst_67 : f32 to vector<2x128xf32>
    %301 = arith.addf %300, %299 : vector<2x128xf32>
    %302 = arith.divf %300, %301 : vector<2x128xf32>
    %303 = arith.select %5, %297, %302 : vector<2x128xi1>, vector<2x128xf32>
    %304 = vector.extract_strided_slice %303 {offsets = [0, 0], sizes = [2, 32], strides = [1, 1]} : vector<2x128xf32> to vector<2x32xf32>
    %305 = vector.extract_strided_slice %303 {offsets = [0, 32], sizes = [2, 32], strides = [1, 1]} : vector<2x128xf32> to vector<2x32xf32>
    %306 = vector.extract_strided_slice %303 {offsets = [0, 64], sizes = [2, 32], strides = [1, 1]} : vector<2x128xf32> to vector<2x32xf32>
    %307 = vector.extract_strided_slice %303 {offsets = [0, 96], sizes = [2, 32], strides = [1, 1]} : vector<2x128xf32> to vector<2x32xf32>
    %308 = arith.mulf %305, %291 : vector<2x32xf32>
    %309 = arith.mulf %304, %306 : vector<2x32xf32>
    %310 = arith.addf %308, %309 : vector<2x32xf32>
    %311 = math.tanh %310 : vector<2x32xf32>
    %312 = arith.mulf %307, %311 : vector<2x32xf32>
    %313 = vector.extract_strided_slice %44 {offsets = [28, 0], sizes = [2, 128], strides = [1, 1]} : vector<32x128xf32> to vector<2x128xf32>
    %cst_68 = arith.constant dense<0.000000e+00> : vector<2x128xf32>
    %314 = tpu.matmul %312, %40, %cst_68 {dimension_numbers = #tpu.dot_dimension_numbers<[1], [0], [0], [1], [0, 0, 1, 1], [], []>} : vector<2x32xf32>, vector<32x128xf32>, vector<2x128xf32> -> vector<2x128xf32>
    %315 = arith.addf %313, %314 : vector<2x128xf32>
    %316 = math.tanh %315 : vector<2x128xf32>
    %317 = arith.negf %315 : vector<2x128xf32>
    %318 = math.exp %317 : vector<2x128xf32>
    %cst_69 = arith.constant 1.000000e+00 : f32
    %319 = vector.broadcast %cst_69 : f32 to vector<2x128xf32>
    %320 = arith.addf %319, %318 : vector<2x128xf32>
    %321 = arith.divf %319, %320 : vector<2x128xf32>
    %322 = arith.select %5, %316, %321 : vector<2x128xi1>, vector<2x128xf32>
    %323 = vector.extract_strided_slice %322 {offsets = [0, 0], sizes = [2, 32], strides = [1, 1]} : vector<2x128xf32> to vector<2x32xf32>
    %324 = vector.extract_strided_slice %322 {offsets = [0, 32], sizes = [2, 32], strides = [1, 1]} : vector<2x128xf32> to vector<2x32xf32>
    %325 = vector.extract_strided_slice %322 {offsets = [0, 64], sizes = [2, 32], strides = [1, 1]} : vector<2x128xf32> to vector<2x32xf32>
    %326 = vector.extract_strided_slice %322 {offsets = [0, 96], sizes = [2, 32], strides = [1, 1]} : vector<2x128xf32> to vector<2x32xf32>
    %327 = arith.mulf %324, %310 : vector<2x32xf32>
    %328 = arith.mulf %323, %325 : vector<2x32xf32>
    %329 = arith.addf %327, %328 : vector<2x32xf32>
    %330 = math.tanh %329 : vector<2x32xf32>
    %331 = arith.mulf %326, %330 : vector<2x32xf32>
    %332 = vector.extract_strided_slice %44 {offsets = [30, 0], sizes = [2, 128], strides = [1, 1]} : vector<32x128xf32> to vector<2x128xf32>
    %cst_70 = arith.constant dense<0.000000e+00> : vector<2x128xf32>
    %333 = tpu.matmul %331, %40, %cst_70 {dimension_numbers = #tpu.dot_dimension_numbers<[1], [0], [0], [1], [0, 0, 1, 1], [], []>} : vector<2x32xf32>, vector<32x128xf32>, vector<2x128xf32> -> vector<2x128xf32>
    %334 = arith.addf %332, %333 : vector<2x128xf32>
    %335 = math.tanh %334 : vector<2x128xf32>
    %336 = arith.negf %334 : vector<2x128xf32>
    %337 = math.exp %336 : vector<2x128xf32>
    %cst_71 = arith.constant 1.000000e+00 : f32
    %338 = vector.broadcast %cst_71 : f32 to vector<2x128xf32>
    %339 = arith.addf %338, %337 : vector<2x128xf32>
    %340 = arith.divf %338, %339 : vector<2x128xf32>
    %341 = arith.select %5, %335, %340 : vector<2x128xi1>, vector<2x128xf32>
    %342 = vector.extract_strided_slice %341 {offsets = [0, 0], sizes = [2, 32], strides = [1, 1]} : vector<2x128xf32> to vector<2x32xf32>
    %343 = vector.extract_strided_slice %341 {offsets = [0, 32], sizes = [2, 32], strides = [1, 1]} : vector<2x128xf32> to vector<2x32xf32>
    %344 = vector.extract_strided_slice %341 {offsets = [0, 64], sizes = [2, 32], strides = [1, 1]} : vector<2x128xf32> to vector<2x32xf32>
    %345 = vector.extract_strided_slice %341 {offsets = [0, 96], sizes = [2, 32], strides = [1, 1]} : vector<2x128xf32> to vector<2x32xf32>
    %346 = arith.mulf %343, %329 : vector<2x32xf32>
    %347 = arith.mulf %342, %344 : vector<2x32xf32>
    %348 = arith.addf %346, %347 : vector<2x32xf32>
    %349 = math.tanh %348 : vector<2x32xf32>
    %350 = arith.mulf %345, %349 : vector<2x32xf32>
    %351 = tpu.concatenate %65, %84, %103, %122, %141, %160, %179, %198, %217, %236, %255, %274, %293, %312, %331, %350 in 0 : vector<2x32xf32>, vector<2x32xf32>, vector<2x32xf32>, vector<2x32xf32>, vector<2x32xf32>, vector<2x32xf32>, vector<2x32xf32>, vector<2x32xf32>, vector<2x32xf32>, vector<2x32xf32>, vector<2x32xf32>, vector<2x32xf32>, vector<2x32xf32>, vector<2x32xf32>, vector<2x32xf32>, vector<2x32xf32> -> vector<32x32xf32>
    %c0_72 = arith.constant 0 : index
    %c0_73 = arith.constant 0 : index
    %352 = vector.load %arg4[%c0_72, %c0_73] : memref<32x128xf32, #tpu.memory_space<vmem>>, vector<32x128xf32>
    %c0_74 = arith.constant 0 : index
    %c0_75 = arith.constant 0 : index
    %353 = vector.load %arg5[%c0_74, %c0_75] : memref<32x128xf32, #tpu.memory_space<vmem>>, vector<32x128xf32>
    %c0_76 = arith.constant 0 : index
    %c0_77 = arith.constant 0 : index
    %354 = vector.load %arg6[%c0_76, %c0_77] : memref<1x128xf32, #tpu.memory_space<vmem>>, vector<1x128xf32>
    %cst_78 = arith.constant dense<0.000000e+00> : vector<32x128xf32>
    %355 = tpu.matmul %351, %352, %cst_78 {dimension_numbers = #tpu.dot_dimension_numbers<[1], [0], [0], [1], [0, 0, 1, 1], [], []>} : vector<32x32xf32>, vector<32x128xf32>, vector<32x128xf32> -> vector<32x128xf32>
    %356 = vector.broadcast %354 : vector<1x128xf32> to vector<32x128xf32>
    %357 = arith.addf %355, %356 : vector<32x128xf32>
    %cst_79 = arith.constant 0.000000e+00 : f32
    %358 = vector.broadcast %cst_79 : f32 to vector<2x32xf32>
    %cst_80 = arith.constant 0.000000e+00 : f32
    %359 = vector.broadcast %cst_80 : f32 to vector<2x32xf32>
    %360 = vector.extract_strided_slice %357 {offsets = [0, 0], sizes = [2, 128], strides = [1, 1]} : vector<32x128xf32> to vector<2x128xf32>
    %cst_81 = arith.constant dense<0.000000e+00> : vector<2x128xf32>
    %361 = tpu.matmul %358, %353, %cst_81 {dimension_numbers = #tpu.dot_dimension_numbers<[1], [0], [0], [1], [0, 0, 1, 1], [], []>} : vector<2x32xf32>, vector<32x128xf32>, vector<2x128xf32> -> vector<2x128xf32>
    %362 = arith.addf %360, %361 : vector<2x128xf32>
    %363 = math.tanh %362 : vector<2x128xf32>
    %364 = arith.negf %362 : vector<2x128xf32>
    %365 = math.exp %364 : vector<2x128xf32>
    %cst_82 = arith.constant 1.000000e+00 : f32
    %366 = vector.broadcast %cst_82 : f32 to vector<2x128xf32>
    %367 = arith.addf %366, %365 : vector<2x128xf32>
    %368 = arith.divf %366, %367 : vector<2x128xf32>
    %369 = arith.select %5, %363, %368 : vector<2x128xi1>, vector<2x128xf32>
    %370 = vector.extract_strided_slice %369 {offsets = [0, 0], sizes = [2, 32], strides = [1, 1]} : vector<2x128xf32> to vector<2x32xf32>
    %371 = vector.extract_strided_slice %369 {offsets = [0, 32], sizes = [2, 32], strides = [1, 1]} : vector<2x128xf32> to vector<2x32xf32>
    %372 = vector.extract_strided_slice %369 {offsets = [0, 64], sizes = [2, 32], strides = [1, 1]} : vector<2x128xf32> to vector<2x32xf32>
    %373 = vector.extract_strided_slice %369 {offsets = [0, 96], sizes = [2, 32], strides = [1, 1]} : vector<2x128xf32> to vector<2x32xf32>
    %374 = arith.mulf %371, %359 : vector<2x32xf32>
    %375 = arith.mulf %370, %372 : vector<2x32xf32>
    %376 = arith.addf %374, %375 : vector<2x32xf32>
    %377 = math.tanh %376 : vector<2x32xf32>
    %378 = arith.mulf %373, %377 : vector<2x32xf32>
    %379 = vector.extract_strided_slice %357 {offsets = [2, 0], sizes = [2, 128], strides = [1, 1]} : vector<32x128xf32> to vector<2x128xf32>
    %cst_83 = arith.constant dense<0.000000e+00> : vector<2x128xf32>
    %380 = tpu.matmul %378, %353, %cst_83 {dimension_numbers = #tpu.dot_dimension_numbers<[1], [0], [0], [1], [0, 0, 1, 1], [], []>} : vector<2x32xf32>, vector<32x128xf32>, vector<2x128xf32> -> vector<2x128xf32>
    %381 = arith.addf %379, %380 : vector<2x128xf32>
    %382 = math.tanh %381 : vector<2x128xf32>
    %383 = arith.negf %381 : vector<2x128xf32>
    %384 = math.exp %383 : vector<2x128xf32>
    %cst_84 = arith.constant 1.000000e+00 : f32
    %385 = vector.broadcast %cst_84 : f32 to vector<2x128xf32>
    %386 = arith.addf %385, %384 : vector<2x128xf32>
    %387 = arith.divf %385, %386 : vector<2x128xf32>
    %388 = arith.select %5, %382, %387 : vector<2x128xi1>, vector<2x128xf32>
    %389 = vector.extract_strided_slice %388 {offsets = [0, 0], sizes = [2, 32], strides = [1, 1]} : vector<2x128xf32> to vector<2x32xf32>
    %390 = vector.extract_strided_slice %388 {offsets = [0, 32], sizes = [2, 32], strides = [1, 1]} : vector<2x128xf32> to vector<2x32xf32>
    %391 = vector.extract_strided_slice %388 {offsets = [0, 64], sizes = [2, 32], strides = [1, 1]} : vector<2x128xf32> to vector<2x32xf32>
    %392 = vector.extract_strided_slice %388 {offsets = [0, 96], sizes = [2, 32], strides = [1, 1]} : vector<2x128xf32> to vector<2x32xf32>
    %393 = arith.mulf %390, %376 : vector<2x32xf32>
    %394 = arith.mulf %389, %391 : vector<2x32xf32>
    %395 = arith.addf %393, %394 : vector<2x32xf32>
    %396 = math.tanh %395 : vector<2x32xf32>
    %397 = arith.mulf %392, %396 : vector<2x32xf32>
    %398 = vector.extract_strided_slice %357 {offsets = [4, 0], sizes = [2, 128], strides = [1, 1]} : vector<32x128xf32> to vector<2x128xf32>
    %cst_85 = arith.constant dense<0.000000e+00> : vector<2x128xf32>
    %399 = tpu.matmul %397, %353, %cst_85 {dimension_numbers = #tpu.dot_dimension_numbers<[1], [0], [0], [1], [0, 0, 1, 1], [], []>} : vector<2x32xf32>, vector<32x128xf32>, vector<2x128xf32> -> vector<2x128xf32>
    %400 = arith.addf %398, %399 : vector<2x128xf32>
    %401 = math.tanh %400 : vector<2x128xf32>
    %402 = arith.negf %400 : vector<2x128xf32>
    %403 = math.exp %402 : vector<2x128xf32>
    %cst_86 = arith.constant 1.000000e+00 : f32
    %404 = vector.broadcast %cst_86 : f32 to vector<2x128xf32>
    %405 = arith.addf %404, %403 : vector<2x128xf32>
    %406 = arith.divf %404, %405 : vector<2x128xf32>
    %407 = arith.select %5, %401, %406 : vector<2x128xi1>, vector<2x128xf32>
    %408 = vector.extract_strided_slice %407 {offsets = [0, 0], sizes = [2, 32], strides = [1, 1]} : vector<2x128xf32> to vector<2x32xf32>
    %409 = vector.extract_strided_slice %407 {offsets = [0, 32], sizes = [2, 32], strides = [1, 1]} : vector<2x128xf32> to vector<2x32xf32>
    %410 = vector.extract_strided_slice %407 {offsets = [0, 64], sizes = [2, 32], strides = [1, 1]} : vector<2x128xf32> to vector<2x32xf32>
    %411 = vector.extract_strided_slice %407 {offsets = [0, 96], sizes = [2, 32], strides = [1, 1]} : vector<2x128xf32> to vector<2x32xf32>
    %412 = arith.mulf %409, %395 : vector<2x32xf32>
    %413 = arith.mulf %408, %410 : vector<2x32xf32>
    %414 = arith.addf %412, %413 : vector<2x32xf32>
    %415 = math.tanh %414 : vector<2x32xf32>
    %416 = arith.mulf %411, %415 : vector<2x32xf32>
    %417 = vector.extract_strided_slice %357 {offsets = [6, 0], sizes = [2, 128], strides = [1, 1]} : vector<32x128xf32> to vector<2x128xf32>
    %cst_87 = arith.constant dense<0.000000e+00> : vector<2x128xf32>
    %418 = tpu.matmul %416, %353, %cst_87 {dimension_numbers = #tpu.dot_dimension_numbers<[1], [0], [0], [1], [0, 0, 1, 1], [], []>} : vector<2x32xf32>, vector<32x128xf32>, vector<2x128xf32> -> vector<2x128xf32>
    %419 = arith.addf %417, %418 : vector<2x128xf32>
    %420 = math.tanh %419 : vector<2x128xf32>
    %421 = arith.negf %419 : vector<2x128xf32>
    %422 = math.exp %421 : vector<2x128xf32>
    %cst_88 = arith.constant 1.000000e+00 : f32
    %423 = vector.broadcast %cst_88 : f32 to vector<2x128xf32>
    %424 = arith.addf %423, %422 : vector<2x128xf32>
    %425 = arith.divf %423, %424 : vector<2x128xf32>
    %426 = arith.select %5, %420, %425 : vector<2x128xi1>, vector<2x128xf32>
    %427 = vector.extract_strided_slice %426 {offsets = [0, 0], sizes = [2, 32], strides = [1, 1]} : vector<2x128xf32> to vector<2x32xf32>
    %428 = vector.extract_strided_slice %426 {offsets = [0, 32], sizes = [2, 32], strides = [1, 1]} : vector<2x128xf32> to vector<2x32xf32>
    %429 = vector.extract_strided_slice %426 {offsets = [0, 64], sizes = [2, 32], strides = [1, 1]} : vector<2x128xf32> to vector<2x32xf32>
    %430 = vector.extract_strided_slice %426 {offsets = [0, 96], sizes = [2, 32], strides = [1, 1]} : vector<2x128xf32> to vector<2x32xf32>
    %431 = arith.mulf %428, %414 : vector<2x32xf32>
    %432 = arith.mulf %427, %429 : vector<2x32xf32>
    %433 = arith.addf %431, %432 : vector<2x32xf32>
    %434 = math.tanh %433 : vector<2x32xf32>
    %435 = arith.mulf %430, %434 : vector<2x32xf32>
    %436 = vector.extract_strided_slice %357 {offsets = [8, 0], sizes = [2, 128], strides = [1, 1]} : vector<32x128xf32> to vector<2x128xf32>
    %cst_89 = arith.constant dense<0.000000e+00> : vector<2x128xf32>
    %437 = tpu.matmul %435, %353, %cst_89 {dimension_numbers = #tpu.dot_dimension_numbers<[1], [0], [0], [1], [0, 0, 1, 1], [], []>} : vector<2x32xf32>, vector<32x128xf32>, vector<2x128xf32> -> vector<2x128xf32>
    %438 = arith.addf %436, %437 : vector<2x128xf32>
    %439 = math.tanh %438 : vector<2x128xf32>
    %440 = arith.negf %438 : vector<2x128xf32>
    %441 = math.exp %440 : vector<2x128xf32>
    %cst_90 = arith.constant 1.000000e+00 : f32
    %442 = vector.broadcast %cst_90 : f32 to vector<2x128xf32>
    %443 = arith.addf %442, %441 : vector<2x128xf32>
    %444 = arith.divf %442, %443 : vector<2x128xf32>
    %445 = arith.select %5, %439, %444 : vector<2x128xi1>, vector<2x128xf32>
    %446 = vector.extract_strided_slice %445 {offsets = [0, 0], sizes = [2, 32], strides = [1, 1]} : vector<2x128xf32> to vector<2x32xf32>
    %447 = vector.extract_strided_slice %445 {offsets = [0, 32], sizes = [2, 32], strides = [1, 1]} : vector<2x128xf32> to vector<2x32xf32>
    %448 = vector.extract_strided_slice %445 {offsets = [0, 64], sizes = [2, 32], strides = [1, 1]} : vector<2x128xf32> to vector<2x32xf32>
    %449 = vector.extract_strided_slice %445 {offsets = [0, 96], sizes = [2, 32], strides = [1, 1]} : vector<2x128xf32> to vector<2x32xf32>
    %450 = arith.mulf %447, %433 : vector<2x32xf32>
    %451 = arith.mulf %446, %448 : vector<2x32xf32>
    %452 = arith.addf %450, %451 : vector<2x32xf32>
    %453 = math.tanh %452 : vector<2x32xf32>
    %454 = arith.mulf %449, %453 : vector<2x32xf32>
    %455 = vector.extract_strided_slice %357 {offsets = [10, 0], sizes = [2, 128], strides = [1, 1]} : vector<32x128xf32> to vector<2x128xf32>
    %cst_91 = arith.constant dense<0.000000e+00> : vector<2x128xf32>
    %456 = tpu.matmul %454, %353, %cst_91 {dimension_numbers = #tpu.dot_dimension_numbers<[1], [0], [0], [1], [0, 0, 1, 1], [], []>} : vector<2x32xf32>, vector<32x128xf32>, vector<2x128xf32> -> vector<2x128xf32>
    %457 = arith.addf %455, %456 : vector<2x128xf32>
    %458 = math.tanh %457 : vector<2x128xf32>
    %459 = arith.negf %457 : vector<2x128xf32>
    %460 = math.exp %459 : vector<2x128xf32>
    %cst_92 = arith.constant 1.000000e+00 : f32
    %461 = vector.broadcast %cst_92 : f32 to vector<2x128xf32>
    %462 = arith.addf %461, %460 : vector<2x128xf32>
    %463 = arith.divf %461, %462 : vector<2x128xf32>
    %464 = arith.select %5, %458, %463 : vector<2x128xi1>, vector<2x128xf32>
    %465 = vector.extract_strided_slice %464 {offsets = [0, 0], sizes = [2, 32], strides = [1, 1]} : vector<2x128xf32> to vector<2x32xf32>
    %466 = vector.extract_strided_slice %464 {offsets = [0, 32], sizes = [2, 32], strides = [1, 1]} : vector<2x128xf32> to vector<2x32xf32>
    %467 = vector.extract_strided_slice %464 {offsets = [0, 64], sizes = [2, 32], strides = [1, 1]} : vector<2x128xf32> to vector<2x32xf32>
    %468 = vector.extract_strided_slice %464 {offsets = [0, 96], sizes = [2, 32], strides = [1, 1]} : vector<2x128xf32> to vector<2x32xf32>
    %469 = arith.mulf %466, %452 : vector<2x32xf32>
    %470 = arith.mulf %465, %467 : vector<2x32xf32>
    %471 = arith.addf %469, %470 : vector<2x32xf32>
    %472 = math.tanh %471 : vector<2x32xf32>
    %473 = arith.mulf %468, %472 : vector<2x32xf32>
    %474 = vector.extract_strided_slice %357 {offsets = [12, 0], sizes = [2, 128], strides = [1, 1]} : vector<32x128xf32> to vector<2x128xf32>
    %cst_93 = arith.constant dense<0.000000e+00> : vector<2x128xf32>
    %475 = tpu.matmul %473, %353, %cst_93 {dimension_numbers = #tpu.dot_dimension_numbers<[1], [0], [0], [1], [0, 0, 1, 1], [], []>} : vector<2x32xf32>, vector<32x128xf32>, vector<2x128xf32> -> vector<2x128xf32>
    %476 = arith.addf %474, %475 : vector<2x128xf32>
    %477 = math.tanh %476 : vector<2x128xf32>
    %478 = arith.negf %476 : vector<2x128xf32>
    %479 = math.exp %478 : vector<2x128xf32>
    %cst_94 = arith.constant 1.000000e+00 : f32
    %480 = vector.broadcast %cst_94 : f32 to vector<2x128xf32>
    %481 = arith.addf %480, %479 : vector<2x128xf32>
    %482 = arith.divf %480, %481 : vector<2x128xf32>
    %483 = arith.select %5, %477, %482 : vector<2x128xi1>, vector<2x128xf32>
    %484 = vector.extract_strided_slice %483 {offsets = [0, 0], sizes = [2, 32], strides = [1, 1]} : vector<2x128xf32> to vector<2x32xf32>
    %485 = vector.extract_strided_slice %483 {offsets = [0, 32], sizes = [2, 32], strides = [1, 1]} : vector<2x128xf32> to vector<2x32xf32>
    %486 = vector.extract_strided_slice %483 {offsets = [0, 64], sizes = [2, 32], strides = [1, 1]} : vector<2x128xf32> to vector<2x32xf32>
    %487 = vector.extract_strided_slice %483 {offsets = [0, 96], sizes = [2, 32], strides = [1, 1]} : vector<2x128xf32> to vector<2x32xf32>
    %488 = arith.mulf %485, %471 : vector<2x32xf32>
    %489 = arith.mulf %484, %486 : vector<2x32xf32>
    %490 = arith.addf %488, %489 : vector<2x32xf32>
    %491 = math.tanh %490 : vector<2x32xf32>
    %492 = arith.mulf %487, %491 : vector<2x32xf32>
    %493 = vector.extract_strided_slice %357 {offsets = [14, 0], sizes = [2, 128], strides = [1, 1]} : vector<32x128xf32> to vector<2x128xf32>
    %cst_95 = arith.constant dense<0.000000e+00> : vector<2x128xf32>
    %494 = tpu.matmul %492, %353, %cst_95 {dimension_numbers = #tpu.dot_dimension_numbers<[1], [0], [0], [1], [0, 0, 1, 1], [], []>} : vector<2x32xf32>, vector<32x128xf32>, vector<2x128xf32> -> vector<2x128xf32>
    %495 = arith.addf %493, %494 : vector<2x128xf32>
    %496 = math.tanh %495 : vector<2x128xf32>
    %497 = arith.negf %495 : vector<2x128xf32>
    %498 = math.exp %497 : vector<2x128xf32>
    %cst_96 = arith.constant 1.000000e+00 : f32
    %499 = vector.broadcast %cst_96 : f32 to vector<2x128xf32>
    %500 = arith.addf %499, %498 : vector<2x128xf32>
    %501 = arith.divf %499, %500 : vector<2x128xf32>
    %502 = arith.select %5, %496, %501 : vector<2x128xi1>, vector<2x128xf32>
    %503 = vector.extract_strided_slice %502 {offsets = [0, 0], sizes = [2, 32], strides = [1, 1]} : vector<2x128xf32> to vector<2x32xf32>
    %504 = vector.extract_strided_slice %502 {offsets = [0, 32], sizes = [2, 32], strides = [1, 1]} : vector<2x128xf32> to vector<2x32xf32>
    %505 = vector.extract_strided_slice %502 {offsets = [0, 64], sizes = [2, 32], strides = [1, 1]} : vector<2x128xf32> to vector<2x32xf32>
    %506 = vector.extract_strided_slice %502 {offsets = [0, 96], sizes = [2, 32], strides = [1, 1]} : vector<2x128xf32> to vector<2x32xf32>
    %507 = arith.mulf %504, %490 : vector<2x32xf32>
    %508 = arith.mulf %503, %505 : vector<2x32xf32>
    %509 = arith.addf %507, %508 : vector<2x32xf32>
    %510 = math.tanh %509 : vector<2x32xf32>
    %511 = arith.mulf %506, %510 : vector<2x32xf32>
    %512 = vector.extract_strided_slice %357 {offsets = [16, 0], sizes = [2, 128], strides = [1, 1]} : vector<32x128xf32> to vector<2x128xf32>
    %cst_97 = arith.constant dense<0.000000e+00> : vector<2x128xf32>
    %513 = tpu.matmul %511, %353, %cst_97 {dimension_numbers = #tpu.dot_dimension_numbers<[1], [0], [0], [1], [0, 0, 1, 1], [], []>} : vector<2x32xf32>, vector<32x128xf32>, vector<2x128xf32> -> vector<2x128xf32>
    %514 = arith.addf %512, %513 : vector<2x128xf32>
    %515 = math.tanh %514 : vector<2x128xf32>
    %516 = arith.negf %514 : vector<2x128xf32>
    %517 = math.exp %516 : vector<2x128xf32>
    %cst_98 = arith.constant 1.000000e+00 : f32
    %518 = vector.broadcast %cst_98 : f32 to vector<2x128xf32>
    %519 = arith.addf %518, %517 : vector<2x128xf32>
    %520 = arith.divf %518, %519 : vector<2x128xf32>
    %521 = arith.select %5, %515, %520 : vector<2x128xi1>, vector<2x128xf32>
    %522 = vector.extract_strided_slice %521 {offsets = [0, 0], sizes = [2, 32], strides = [1, 1]} : vector<2x128xf32> to vector<2x32xf32>
    %523 = vector.extract_strided_slice %521 {offsets = [0, 32], sizes = [2, 32], strides = [1, 1]} : vector<2x128xf32> to vector<2x32xf32>
    %524 = vector.extract_strided_slice %521 {offsets = [0, 64], sizes = [2, 32], strides = [1, 1]} : vector<2x128xf32> to vector<2x32xf32>
    %525 = vector.extract_strided_slice %521 {offsets = [0, 96], sizes = [2, 32], strides = [1, 1]} : vector<2x128xf32> to vector<2x32xf32>
    %526 = arith.mulf %523, %509 : vector<2x32xf32>
    %527 = arith.mulf %522, %524 : vector<2x32xf32>
    %528 = arith.addf %526, %527 : vector<2x32xf32>
    %529 = math.tanh %528 : vector<2x32xf32>
    %530 = arith.mulf %525, %529 : vector<2x32xf32>
    %531 = vector.extract_strided_slice %357 {offsets = [18, 0], sizes = [2, 128], strides = [1, 1]} : vector<32x128xf32> to vector<2x128xf32>
    %cst_99 = arith.constant dense<0.000000e+00> : vector<2x128xf32>
    %532 = tpu.matmul %530, %353, %cst_99 {dimension_numbers = #tpu.dot_dimension_numbers<[1], [0], [0], [1], [0, 0, 1, 1], [], []>} : vector<2x32xf32>, vector<32x128xf32>, vector<2x128xf32> -> vector<2x128xf32>
    %533 = arith.addf %531, %532 : vector<2x128xf32>
    %534 = math.tanh %533 : vector<2x128xf32>
    %535 = arith.negf %533 : vector<2x128xf32>
    %536 = math.exp %535 : vector<2x128xf32>
    %cst_100 = arith.constant 1.000000e+00 : f32
    %537 = vector.broadcast %cst_100 : f32 to vector<2x128xf32>
    %538 = arith.addf %537, %536 : vector<2x128xf32>
    %539 = arith.divf %537, %538 : vector<2x128xf32>
    %540 = arith.select %5, %534, %539 : vector<2x128xi1>, vector<2x128xf32>
    %541 = vector.extract_strided_slice %540 {offsets = [0, 0], sizes = [2, 32], strides = [1, 1]} : vector<2x128xf32> to vector<2x32xf32>
    %542 = vector.extract_strided_slice %540 {offsets = [0, 32], sizes = [2, 32], strides = [1, 1]} : vector<2x128xf32> to vector<2x32xf32>
    %543 = vector.extract_strided_slice %540 {offsets = [0, 64], sizes = [2, 32], strides = [1, 1]} : vector<2x128xf32> to vector<2x32xf32>
    %544 = vector.extract_strided_slice %540 {offsets = [0, 96], sizes = [2, 32], strides = [1, 1]} : vector<2x128xf32> to vector<2x32xf32>
    %545 = arith.mulf %542, %528 : vector<2x32xf32>
    %546 = arith.mulf %541, %543 : vector<2x32xf32>
    %547 = arith.addf %545, %546 : vector<2x32xf32>
    %548 = math.tanh %547 : vector<2x32xf32>
    %549 = arith.mulf %544, %548 : vector<2x32xf32>
    %550 = vector.extract_strided_slice %357 {offsets = [20, 0], sizes = [2, 128], strides = [1, 1]} : vector<32x128xf32> to vector<2x128xf32>
    %cst_101 = arith.constant dense<0.000000e+00> : vector<2x128xf32>
    %551 = tpu.matmul %549, %353, %cst_101 {dimension_numbers = #tpu.dot_dimension_numbers<[1], [0], [0], [1], [0, 0, 1, 1], [], []>} : vector<2x32xf32>, vector<32x128xf32>, vector<2x128xf32> -> vector<2x128xf32>
    %552 = arith.addf %550, %551 : vector<2x128xf32>
    %553 = math.tanh %552 : vector<2x128xf32>
    %554 = arith.negf %552 : vector<2x128xf32>
    %555 = math.exp %554 : vector<2x128xf32>
    %cst_102 = arith.constant 1.000000e+00 : f32
    %556 = vector.broadcast %cst_102 : f32 to vector<2x128xf32>
    %557 = arith.addf %556, %555 : vector<2x128xf32>
    %558 = arith.divf %556, %557 : vector<2x128xf32>
    %559 = arith.select %5, %553, %558 : vector<2x128xi1>, vector<2x128xf32>
    %560 = vector.extract_strided_slice %559 {offsets = [0, 0], sizes = [2, 32], strides = [1, 1]} : vector<2x128xf32> to vector<2x32xf32>
    %561 = vector.extract_strided_slice %559 {offsets = [0, 32], sizes = [2, 32], strides = [1, 1]} : vector<2x128xf32> to vector<2x32xf32>
    %562 = vector.extract_strided_slice %559 {offsets = [0, 64], sizes = [2, 32], strides = [1, 1]} : vector<2x128xf32> to vector<2x32xf32>
    %563 = vector.extract_strided_slice %559 {offsets = [0, 96], sizes = [2, 32], strides = [1, 1]} : vector<2x128xf32> to vector<2x32xf32>
    %564 = arith.mulf %561, %547 : vector<2x32xf32>
    %565 = arith.mulf %560, %562 : vector<2x32xf32>
    %566 = arith.addf %564, %565 : vector<2x32xf32>
    %567 = math.tanh %566 : vector<2x32xf32>
    %568 = arith.mulf %563, %567 : vector<2x32xf32>
    %569 = vector.extract_strided_slice %357 {offsets = [22, 0], sizes = [2, 128], strides = [1, 1]} : vector<32x128xf32> to vector<2x128xf32>
    %cst_103 = arith.constant dense<0.000000e+00> : vector<2x128xf32>
    %570 = tpu.matmul %568, %353, %cst_103 {dimension_numbers = #tpu.dot_dimension_numbers<[1], [0], [0], [1], [0, 0, 1, 1], [], []>} : vector<2x32xf32>, vector<32x128xf32>, vector<2x128xf32> -> vector<2x128xf32>
    %571 = arith.addf %569, %570 : vector<2x128xf32>
    %572 = math.tanh %571 : vector<2x128xf32>
    %573 = arith.negf %571 : vector<2x128xf32>
    %574 = math.exp %573 : vector<2x128xf32>
    %cst_104 = arith.constant 1.000000e+00 : f32
    %575 = vector.broadcast %cst_104 : f32 to vector<2x128xf32>
    %576 = arith.addf %575, %574 : vector<2x128xf32>
    %577 = arith.divf %575, %576 : vector<2x128xf32>
    %578 = arith.select %5, %572, %577 : vector<2x128xi1>, vector<2x128xf32>
    %579 = vector.extract_strided_slice %578 {offsets = [0, 0], sizes = [2, 32], strides = [1, 1]} : vector<2x128xf32> to vector<2x32xf32>
    %580 = vector.extract_strided_slice %578 {offsets = [0, 32], sizes = [2, 32], strides = [1, 1]} : vector<2x128xf32> to vector<2x32xf32>
    %581 = vector.extract_strided_slice %578 {offsets = [0, 64], sizes = [2, 32], strides = [1, 1]} : vector<2x128xf32> to vector<2x32xf32>
    %582 = vector.extract_strided_slice %578 {offsets = [0, 96], sizes = [2, 32], strides = [1, 1]} : vector<2x128xf32> to vector<2x32xf32>
    %583 = arith.mulf %580, %566 : vector<2x32xf32>
    %584 = arith.mulf %579, %581 : vector<2x32xf32>
    %585 = arith.addf %583, %584 : vector<2x32xf32>
    %586 = math.tanh %585 : vector<2x32xf32>
    %587 = arith.mulf %582, %586 : vector<2x32xf32>
    %588 = vector.extract_strided_slice %357 {offsets = [24, 0], sizes = [2, 128], strides = [1, 1]} : vector<32x128xf32> to vector<2x128xf32>
    %cst_105 = arith.constant dense<0.000000e+00> : vector<2x128xf32>
    %589 = tpu.matmul %587, %353, %cst_105 {dimension_numbers = #tpu.dot_dimension_numbers<[1], [0], [0], [1], [0, 0, 1, 1], [], []>} : vector<2x32xf32>, vector<32x128xf32>, vector<2x128xf32> -> vector<2x128xf32>
    %590 = arith.addf %588, %589 : vector<2x128xf32>
    %591 = math.tanh %590 : vector<2x128xf32>
    %592 = arith.negf %590 : vector<2x128xf32>
    %593 = math.exp %592 : vector<2x128xf32>
    %cst_106 = arith.constant 1.000000e+00 : f32
    %594 = vector.broadcast %cst_106 : f32 to vector<2x128xf32>
    %595 = arith.addf %594, %593 : vector<2x128xf32>
    %596 = arith.divf %594, %595 : vector<2x128xf32>
    %597 = arith.select %5, %591, %596 : vector<2x128xi1>, vector<2x128xf32>
    %598 = vector.extract_strided_slice %597 {offsets = [0, 0], sizes = [2, 32], strides = [1, 1]} : vector<2x128xf32> to vector<2x32xf32>
    %599 = vector.extract_strided_slice %597 {offsets = [0, 32], sizes = [2, 32], strides = [1, 1]} : vector<2x128xf32> to vector<2x32xf32>
    %600 = vector.extract_strided_slice %597 {offsets = [0, 64], sizes = [2, 32], strides = [1, 1]} : vector<2x128xf32> to vector<2x32xf32>
    %601 = vector.extract_strided_slice %597 {offsets = [0, 96], sizes = [2, 32], strides = [1, 1]} : vector<2x128xf32> to vector<2x32xf32>
    %602 = arith.mulf %599, %585 : vector<2x32xf32>
    %603 = arith.mulf %598, %600 : vector<2x32xf32>
    %604 = arith.addf %602, %603 : vector<2x32xf32>
    %605 = math.tanh %604 : vector<2x32xf32>
    %606 = arith.mulf %601, %605 : vector<2x32xf32>
    %607 = vector.extract_strided_slice %357 {offsets = [26, 0], sizes = [2, 128], strides = [1, 1]} : vector<32x128xf32> to vector<2x128xf32>
    %cst_107 = arith.constant dense<0.000000e+00> : vector<2x128xf32>
    %608 = tpu.matmul %606, %353, %cst_107 {dimension_numbers = #tpu.dot_dimension_numbers<[1], [0], [0], [1], [0, 0, 1, 1], [], []>} : vector<2x32xf32>, vector<32x128xf32>, vector<2x128xf32> -> vector<2x128xf32>
    %609 = arith.addf %607, %608 : vector<2x128xf32>
    %610 = math.tanh %609 : vector<2x128xf32>
    %611 = arith.negf %609 : vector<2x128xf32>
    %612 = math.exp %611 : vector<2x128xf32>
    %cst_108 = arith.constant 1.000000e+00 : f32
    %613 = vector.broadcast %cst_108 : f32 to vector<2x128xf32>
    %614 = arith.addf %613, %612 : vector<2x128xf32>
    %615 = arith.divf %613, %614 : vector<2x128xf32>
    %616 = arith.select %5, %610, %615 : vector<2x128xi1>, vector<2x128xf32>
    %617 = vector.extract_strided_slice %616 {offsets = [0, 0], sizes = [2, 32], strides = [1, 1]} : vector<2x128xf32> to vector<2x32xf32>
    %618 = vector.extract_strided_slice %616 {offsets = [0, 32], sizes = [2, 32], strides = [1, 1]} : vector<2x128xf32> to vector<2x32xf32>
    %619 = vector.extract_strided_slice %616 {offsets = [0, 64], sizes = [2, 32], strides = [1, 1]} : vector<2x128xf32> to vector<2x32xf32>
    %620 = vector.extract_strided_slice %616 {offsets = [0, 96], sizes = [2, 32], strides = [1, 1]} : vector<2x128xf32> to vector<2x32xf32>
    %621 = arith.mulf %618, %604 : vector<2x32xf32>
    %622 = arith.mulf %617, %619 : vector<2x32xf32>
    %623 = arith.addf %621, %622 : vector<2x32xf32>
    %624 = math.tanh %623 : vector<2x32xf32>
    %625 = arith.mulf %620, %624 : vector<2x32xf32>
    %626 = vector.extract_strided_slice %357 {offsets = [28, 0], sizes = [2, 128], strides = [1, 1]} : vector<32x128xf32> to vector<2x128xf32>
    %cst_109 = arith.constant dense<0.000000e+00> : vector<2x128xf32>
    %627 = tpu.matmul %625, %353, %cst_109 {dimension_numbers = #tpu.dot_dimension_numbers<[1], [0], [0], [1], [0, 0, 1, 1], [], []>} : vector<2x32xf32>, vector<32x128xf32>, vector<2x128xf32> -> vector<2x128xf32>
    %628 = arith.addf %626, %627 : vector<2x128xf32>
    %629 = math.tanh %628 : vector<2x128xf32>
    %630 = arith.negf %628 : vector<2x128xf32>
    %631 = math.exp %630 : vector<2x128xf32>
    %cst_110 = arith.constant 1.000000e+00 : f32
    %632 = vector.broadcast %cst_110 : f32 to vector<2x128xf32>
    %633 = arith.addf %632, %631 : vector<2x128xf32>
    %634 = arith.divf %632, %633 : vector<2x128xf32>
    %635 = arith.select %5, %629, %634 : vector<2x128xi1>, vector<2x128xf32>
    %636 = vector.extract_strided_slice %635 {offsets = [0, 0], sizes = [2, 32], strides = [1, 1]} : vector<2x128xf32> to vector<2x32xf32>
    %637 = vector.extract_strided_slice %635 {offsets = [0, 32], sizes = [2, 32], strides = [1, 1]} : vector<2x128xf32> to vector<2x32xf32>
    %638 = vector.extract_strided_slice %635 {offsets = [0, 64], sizes = [2, 32], strides = [1, 1]} : vector<2x128xf32> to vector<2x32xf32>
    %639 = vector.extract_strided_slice %635 {offsets = [0, 96], sizes = [2, 32], strides = [1, 1]} : vector<2x128xf32> to vector<2x32xf32>
    %640 = arith.mulf %637, %623 : vector<2x32xf32>
    %641 = arith.mulf %636, %638 : vector<2x32xf32>
    %642 = arith.addf %640, %641 : vector<2x32xf32>
    %643 = math.tanh %642 : vector<2x32xf32>
    %644 = arith.mulf %639, %643 : vector<2x32xf32>
    %645 = vector.extract_strided_slice %357 {offsets = [30, 0], sizes = [2, 128], strides = [1, 1]} : vector<32x128xf32> to vector<2x128xf32>
    %cst_111 = arith.constant dense<0.000000e+00> : vector<2x128xf32>
    %646 = tpu.matmul %644, %353, %cst_111 {dimension_numbers = #tpu.dot_dimension_numbers<[1], [0], [0], [1], [0, 0, 1, 1], [], []>} : vector<2x32xf32>, vector<32x128xf32>, vector<2x128xf32> -> vector<2x128xf32>
    %647 = arith.addf %645, %646 : vector<2x128xf32>
    %648 = math.tanh %647 : vector<2x128xf32>
    %649 = arith.negf %647 : vector<2x128xf32>
    %650 = math.exp %649 : vector<2x128xf32>
    %cst_112 = arith.constant 1.000000e+00 : f32
    %651 = vector.broadcast %cst_112 : f32 to vector<2x128xf32>
    %652 = arith.addf %651, %650 : vector<2x128xf32>
    %653 = arith.divf %651, %652 : vector<2x128xf32>
    %654 = arith.select %5, %648, %653 : vector<2x128xi1>, vector<2x128xf32>
    %655 = vector.extract_strided_slice %654 {offsets = [0, 0], sizes = [2, 32], strides = [1, 1]} : vector<2x128xf32> to vector<2x32xf32>
    %656 = vector.extract_strided_slice %654 {offsets = [0, 32], sizes = [2, 32], strides = [1, 1]} : vector<2x128xf32> to vector<2x32xf32>
    %657 = vector.extract_strided_slice %654 {offsets = [0, 64], sizes = [2, 32], strides = [1, 1]} : vector<2x128xf32> to vector<2x32xf32>
    %658 = vector.extract_strided_slice %654 {offsets = [0, 96], sizes = [2, 32], strides = [1, 1]} : vector<2x128xf32> to vector<2x32xf32>
    %659 = arith.mulf %656, %642 : vector<2x32xf32>
    %660 = arith.mulf %655, %657 : vector<2x32xf32>
    %661 = arith.addf %659, %660 : vector<2x32xf32>
    %662 = math.tanh %661 : vector<2x32xf32>
    %663 = arith.mulf %658, %662 : vector<2x32xf32>
    %664 = tpu.concatenate %378, %397, %416, %435, %454, %473, %492, %511, %530, %549, %568, %587, %606, %625, %644, %663 in 1 : vector<2x32xf32>, vector<2x32xf32>, vector<2x32xf32>, vector<2x32xf32>, vector<2x32xf32>, vector<2x32xf32>, vector<2x32xf32>, vector<2x32xf32>, vector<2x32xf32>, vector<2x32xf32>, vector<2x32xf32>, vector<2x32xf32>, vector<2x32xf32>, vector<2x32xf32>, vector<2x32xf32>, vector<2x32xf32> -> vector<2x512xf32>
    %c0_113 = arith.constant 0 : index
    %c0_114 = arith.constant 0 : index
    %665 = vector.load %arg7[%c0_113, %c0_114] : memref<512x32xf32, #tpu.memory_space<vmem>>, vector<512x32xf32>
    %cst_115 = arith.constant dense<0.000000e+00> : vector<2x32xf32>
    %666 = tpu.matmul %664, %665, %cst_115 {dimension_numbers = #tpu.dot_dimension_numbers<[1], [0], [0], [1], [0, 0, 1, 1], [], []>} : vector<2x512xf32>, vector<512x32xf32>, vector<2x32xf32> -> vector<2x32xf32>
    %c0_116 = arith.constant 0 : index
    %c0_117 = arith.constant 0 : index
    %667 = vector.load %arg8[%c0_116, %c0_117] : memref<1x32xf32, #tpu.memory_space<vmem>>, vector<1x32xf32>
    %668 = vector.broadcast %667 : vector<1x32xf32> to vector<2x32xf32>
    %669 = arith.addf %666, %668 : vector<2x32xf32>
    %c0_118 = arith.constant 0 : index
    %c0_119 = arith.constant 0 : index
    %670 = vector.load %arg9[%c0_118, %c0_119] : memref<2x32xf32, #tpu.memory_space<vmem>>, vector<2x32xf32>
    tpu.vector_store %arg9[%c0_118, %c0_119], %669 {strides = array<i32>} : memref<2x32xf32, #tpu.memory_space<vmem>>, vector<2x32xf32>,
    return
  }
}

</mosaic_0001>

<llo_original>
// kernel: pure_lstm_forward.1
$region0: #{pure_lstm_forward.1}
  #allocation0 [shape = 'u32[]', space=smem, size = 0x4, offset = 0x4, fixed_abs, tag = 'smem constant byte address 0x4 - core index']
  #allocation1 [shape = 'u32[144,128]{1,0:T(1,128)}', space=vmem, size = 0x12000, scoped, tag = 'internal scratch']
  %s0 = inlined_call_operand.vmem [shape: f32[2,16,4], index: 0, kind: input, shape index: {}]
  %s1 = inlined_call_operand.vmem [shape: f32[4,128], index: 1, kind: input, shape index: {}]
  %s2 = inlined_call_operand.vmem [shape: f32[32,128], index: 2, kind: input, shape index: {}]
  %s3 = inlined_call_operand.vmem [shape: f32[1,128], index: 3, kind: input, shape index: {}]
  %s4 = inlined_call_operand.vmem [shape: f32[32,128], index: 4, kind: input, shape index: {}]
  %s5 = inlined_call_operand.vmem [shape: f32[32,128], index: 5, kind: input, shape index: {}]
  %s6 = inlined_call_operand.vmem [shape: f32[1,128], index: 6, kind: input, shape index: {}]
  %s7 = inlined_call_operand.vmem [shape: f32[512,32], index: 7, kind: input, shape index: {}]
  %s8 = inlined_call_operand.vmem [shape: f32[1,32], index: 8, kind: input, shape index: {}]
  %s9 = inlined_call_operand.vmem [shape: f32[2,32], index: 9, kind: output, shape index: {}]
  %s10 = sld [smem:[#allocation0]]
  $region46: #{pure_lstm_forward.1} parent=0
    _
  %s12 = ssub.s32 1, %s10
  %s13 = scalar_select 0, %s12, %s10
  // Predicated region
  $region2: #{pure_lstm_forward.1} parent=0 // pred_check
    _
  $region3: #{pure_lstm_forward.1} parent=0 // pred_check_branch
    %15 = sbr.rel (0) target = $region5
  $region4: #{pure_lstm_forward.1} parent=0 // pred_region
    _
  $region5: #{pure_lstm_forward.1} parent=0 // pred_fallthru
    _
  // Predicated region
  $region6: #{pure_lstm_forward.1} parent=0 // pred_check
    _
  $region7: #{pure_lstm_forward.1} parent=0 // pred_check_branch
    %17 = sbr.rel (0) target = $region9
  $region8: #{pure_lstm_forward.1} parent=0 // pred_region
    _
  $region9: #{pure_lstm_forward.1} parent=0 // pred_fallthru
    _
  // Predicated region
  $region10: #{pure_lstm_forward.1} parent=0 // pred_check
    _
  $region11: #{pure_lstm_forward.1} parent=0 // pred_check_branch
    %19 = sbr.rel (0) target = $region13
  $region12: #{pure_lstm_forward.1} parent=0 // pred_region
    _
  $region13: #{pure_lstm_forward.1} parent=0 // pred_fallthru
    _
  // Predicated region
  $region14: #{pure_lstm_forward.1} parent=0 // pred_check
    _
  $region15: #{pure_lstm_forward.1} parent=0 // pred_check_branch
    %21 = sbr.rel (0) target = $region17
  $region16: #{pure_lstm_forward.1} parent=0 // pred_region
    _
  $region17: #{pure_lstm_forward.1} parent=0 // pred_fallthru
    _
  // Predicated region
  $region18: #{pure_lstm_forward.1} parent=0 // pred_check
    _
  $region19: #{pure_lstm_forward.1} parent=0 // pred_check_branch
    %23 = sbr.rel (0) target = $region21
  $region20: #{pure_lstm_forward.1} parent=0 // pred_region
    _
  $region21: #{pure_lstm_forward.1} parent=0 // pred_fallthru
    _
  // Predicated region
  $region22: #{pure_lstm_forward.1} parent=0 // pred_check
    _
  $region23: #{pure_lstm_forward.1} parent=0 // pred_check_branch
    %25 = sbr.rel (0) target = $region25
  $region24: #{pure_lstm_forward.1} parent=0 // pred_region
    _
  $region25: #{pure_lstm_forward.1} parent=0 // pred_fallthru
    _
  // Predicated region
  $region26: #{pure_lstm_forward.1} parent=0 // pred_check
    _
  $region27: #{pure_lstm_forward.1} parent=0 // pred_check_branch
    %27 = sbr.rel (0) target = $region29
  $region28: #{pure_lstm_forward.1} parent=0 // pred_region
    _
  $region29: #{pure_lstm_forward.1} parent=0 // pred_fallthru
    _
  // Predicated region
  $region30: #{pure_lstm_forward.1} parent=0 // pred_check
    _
  $region31: #{pure_lstm_forward.1} parent=0 // pred_check_branch
    %29 = sbr.rel (0) target = $region33
  $region32: #{pure_lstm_forward.1} parent=0 // pred_region
    _
  $region33: #{pure_lstm_forward.1} parent=0 // pred_fallthru
    _
  // Predicated region
  $region34: #{pure_lstm_forward.1} parent=0 // pred_check
    _
  $region35: #{pure_lstm_forward.1} parent=0 // pred_check_branch
    %31 = sbr.rel (0) target = $region37
  $region36: #{pure_lstm_forward.1} parent=0 // pred_region
    _
  $region37: #{pure_lstm_forward.1} parent=0 // pred_fallthru
    _
  %v32 = vlaneseq
  %v33 = vand.u32 %v32, 127
  %vm34 = vcmp.ge.s32.totalorder %v33, 64
  %vm35 = vcmp.lt.s32.totalorder %v33, 96
  %vm36 = vmand %vm34, %vm35
  %v37 = vld [vmem:[%s0] sm:$0x1]
  %v38 = vld [vmem:[%s0 + $0x10] sm:$0x1]
  %v39 = vld [vmem:[%s0 + $0x1] sm:$0x1]
  %v40 = vld [vmem:[%s0 + $0x11] sm:$0x1]
  %v41 = vld [vmem:[%s0 + $0x2] sm:$0x1]
  %v42 = vld [vmem:[%s0 + $0x12] sm:$0x1]
  %v43 = vld [vmem:[%s0 + $0x3] sm:$0x1]
  %v44 = vld [vmem:[%s0 + $0x13] sm:$0x1]
  %v45 = vld [vmem:[%s0 + $0x4] sm:$0x1]
  %v46 = vld [vmem:[%s0 + $0x14] sm:$0x1]
  %v47 = vld [vmem:[%s0 + $0x5] sm:$0x1]
  %v48 = vld [vmem:[%s0 + $0x15] sm:$0x1]
  %v49 = vld [vmem:[%s0 + $0x6] sm:$0x1]
  %v50 = vld [vmem:[%s0 + $0x16] sm:$0x1]
  %v51 = vld [vmem:[%s0 + $0x7] sm:$0x1]
  %v52 = vld [vmem:[%s0 + $0x17] sm:$0x1]
  %v53 = vld [vmem:[%s0 + $0x8] sm:$0x1]
  %v54 = vld [vmem:[%s0 + $0x18] sm:$0x1]
  %v55 = vld [vmem:[%s0 + $0x9] sm:$0x1]
  %v56 = vld [vmem:[%s0 + $0x19] sm:$0x1]
  %v57 = vld [vmem:[%s0 + $0xa] sm:$0x1]
  %v58 = vld [vmem:[%s0 + $0x1a] sm:$0x1]
  %v59 = vld [vmem:[%s0 + $0xb] sm:$0x1]
  %v60 = vld [vmem:[%s0 + $0x1b] sm:$0x1]
  %v61 = vld [vmem:[%s0 + $0xc] sm:$0x1]
  %v62 = vld [vmem:[%s0 + $0x1c] sm:$0x1]
  %v63 = vld [vmem:[%s0 + $0xd] sm:$0x1]
  %v64 = vld [vmem:[%s0 + $0x1d] sm:$0x1]
  %v65 = vld [vmem:[%s0 + $0xe] sm:$0x1]
  %v66 = vld [vmem:[%s0 + $0x1e] sm:$0x1]
  %v67 = vld [vmem:[%s0 + $0xf] sm:$0x1]
  %v68 = vld [vmem:[%s0 + $0x1f] sm:$0x1]
  %v71 = vrot.slane %v38, 7
  %vm72 = vcmask 1041409
  %v73 = vsel %vm72, %v71, %v37
  %v77 = vrot.slane %v39, 6
  %v78 = vrot.slane %v40, 5
  %vm79 = vcmask 1043459
  %v80 = vsel %vm79, %v78, %v77
  %v84 = vrot.slane %v41, 4
  %v85 = vrot.slane %v42, 3
  %vm86 = vcmask 1045509
  %v87 = vsel %vm86, %v85, %v84
  %v91 = vrot.slane %v43, 2
  %v92 = vrot.slane %v44, 1
  %vm93 = vcmask 1047559
  %v94 = vsel %vm93, %v92, %v91
  %v98 = vrot.slane %v46, 7
  %v99 = vsel %vm72, %v98, %v45
  %v103 = vrot.slane %v47, 6
  %v104 = vrot.slane %v48, 5
  %v105 = vsel %vm79, %v104, %v103
  %v109 = vrot.slane %v49, 4
  %v110 = vrot.slane %v50, 3
  %v111 = vsel %vm86, %v110, %v109
  %v115 = vrot.slane %v51, 2
  %v116 = vrot.slane %v52, 1
  %v117 = vsel %vm93, %v116, %v115
  %v121 = vrot.slane %v54, 7
  %v122 = vsel %vm72, %v121, %v53
  %v126 = vrot.slane %v55, 6
  %v127 = vrot.slane %v56, 5
  %v128 = vsel %vm79, %v127, %v126
  %v132 = vrot.slane %v57, 4
  %v133 = vrot.slane %v58, 3
  %v134 = vsel %vm86, %v133, %v132
  %v138 = vrot.slane %v59, 2
  %v139 = vrot.slane %v60, 1
  %v140 = vsel %vm93, %v139, %v138
  %v144 = vrot.slane %v62, 7
  %v145 = vsel %vm72, %v144, %v61
  %v149 = vrot.slane %v63, 6
  %v150 = vrot.slane %v64, 5
  %v151 = vsel %vm79, %v150, %v149
  %v155 = vrot.slane %v65, 4
  %v156 = vrot.slane %v66, 3
  %v157 = vsel %vm86, %v156, %v155
  %v161 = vrot.slane %v67, 2
  %v162 = vrot.slane %v68, 1
  %v163 = vsel %vm93, %v162, %v161
  %vm165 = vcmask 1041408
  %v166 = vsel %vm165, %v73, %v80
  %vm167 = vcmask 1043456
  %v168 = vsel %vm167, %v166, %v87
  %vm169 = vcmask 1045504
  %v170 = vsel %vm169, %v168, %v94
  %v171 = vsel %vm165, %v99, %v105
  %v172 = vsel %vm167, %v171, %v111
  %v173 = vsel %vm169, %v172, %v117
  %v174 = vsel %vm165, %v122, %v128
  %v175 = vsel %vm167, %v174, %v134
  %v176 = vsel %vm169, %v175, %v140
  %v177 = vsel %vm165, %v145, %v151
  %v178 = vsel %vm167, %v177, %v157
  %v179 = vsel %vm169, %v178, %v163
  %v180 = vld [vmem:[%s1] sm:$0xf]
  %v181 = vld [vmem:[%s2] sm:$0xff]
  %v182 = vld [vmem:[%s2 + $0x8] sm:$0xff]
  %v183 = vld [vmem:[%s2 + $0x10] sm:$0xff]
  %v184 = vld [vmem:[%s2 + $0x18] sm:$0xff]
  %v185 = vld [vmem:[%s3] sm:$0x1]
  %v187 = vlaneseq
  %v188 = vshrl.u32 %v187, 7
  %v189 = vsub.s32 0, %v188
  %v190 = vrot.slane %v185, %v189
  %vm192 = vcmask 31744
  %v194 = vsel %vm192, %v170, 0
  %v197 = vsel %vm192, %v173, 0
  %v200 = vsel %vm192, %v176, 0
  %v203 = vsel %vm192, %v179, 0
  %v206 = vsel %vm167, %v180, 0
  %208 = vmatprep.subr.mxu0 0.0
  %209 = vmatpush1.msra.mxu0 %v206
  %210 = vmatprep.subr.mxu0 0.0
  %211 = vmatpush1.msra.mxu0 0.0
  %212 = vmatprep.subr.mxu0 0.0
  %213 = vmatpush1.msra.mxu0 0.0
  %214 = vmatprep.subr.mxu0 0.0
  %215 = vmatpush1.msra.mxu0 0.0
  %216 = vmatprep.subr.mxu0 0.0
  %217 = vmatpush1.msra.mxu0 0.0
  %218 = vmatprep.subr.mxu0 0.0
  %219 = vmatpush1.msra.mxu0 0.0
  %220 = vmatprep.subr.mxu0 0.0
  %221 = vmatpush1.msra.mxu0 0.0
  %222 = vmatprep.subr.mxu0 0.0
  %223 = vmatpush1.msra.mxu0 0.0
  %224 = vmatprep.subr.mxu0 0.0
  %225 = vmatpush1.msra.mxu0 0.0
  %226 = vmatprep.subr.mxu0 0.0
  %227 = vmatpush1.msra.mxu0 0.0
  %228 = vmatprep.subr.mxu0 0.0
  %229 = vmatpush1.msra.mxu0 0.0
  %230 = vmatprep.subr.mxu0 0.0
  %231 = vmatpush1.msra.mxu0 0.0
  %232 = vmatprep.subr.mxu0 0.0
  %233 = vmatpush1.msra.mxu0 0.0
  %234 = vmatprep.subr.mxu0 0.0
  %235 = vmatpush1.msra.mxu0 0.0
  %236 = vmatprep.subr.mxu0 0.0
  %237 = vmatpush1.msra.mxu0 0.0
  %238 = vmatprep.subr.mxu0 0.0
  %239 = vmatpush1.msra.mxu0 0.0
  %240 = vmatprep.subr.mxu0 0.0
  %241 = vmatpush1.msra.mxu0 0.0
  %242 = vmatprep.subr.mxu0 0.0
  %243 = vmatpush1.msra.mxu0 0.0
  %244 = vmatprep.subr.mxu0 0.0
  %245 = vmatpush1.msra.mxu0 0.0
  %246 = vmatprep.subr.mxu0 0.0
  %247 = vmatpush1.msra.mxu0 0.0
  %248 = vmatprep.subr.mxu0 0.0
  %249 = vmatpush1.msra.mxu0 0.0
  %250 = vmatprep.subr.mxu0 0.0
  %251 = vmatpush1.msra.mxu0 0.0
  %252 = vmatprep.subr.mxu0 0.0
  %253 = vmatpush1.msra.mxu0 0.0
  %254 = vmatprep.subr.mxu0 0.0
  %255 = vmatpush1.msra.mxu0 0.0
  %256 = vmatprep.subr.mxu0 0.0
  %257 = vmatpush1.msra.mxu0 0.0
  %258 = vmatprep.subr.mxu0 0.0
  %259 = vmatpush1.msra.mxu0 0.0
  %260 = vmatprep.subr.mxu0 0.0
  %261 = vmatpush1.msra.mxu0 0.0
  %262 = vmatprep.subr.mxu0 0.0
  %263 = vmatpush1.msra.mxu0 0.0
  %264 = vmatprep.subr.mxu0 0.0
  %265 = vmatpush1.msra.mxu0 0.0
  %266 = vmatprep.subr.mxu0 0.0
  %267 = vmatpush1.msra.mxu0 0.0
  %268 = vmatprep.subr.mxu0 0.0
  %269 = vmatpush1.msra.mxu0 0.0
  %270 = vmatprep.subr.mxu0 0.0
  %271 = vmatpush1.msra.mxu0 0.0
  %272 = vmatprep.mubr.f32.mxu0 0.0
  %273 = vmatmul.mubr.f32.gmra.mrb[0].mxu0 %v194
  %v274 = vpop.f32.mrb[0].mxu0
  %v275 = vadd.f32 %v190, %v274
  %v276 = vpop.f32.mrb[0].mxu0
  %277 = vmatprep.mubr.f32.mxu0 0.0
  %278 = vmatmul.mubr.f32.gmra.mrb[0].mxu0 %v197
  %v279 = vpop.f32.mrb[0].mxu0
  %v280 = vadd.f32 %v190, %v279
  %v281 = vpop.f32.mrb[0].mxu0
  %282 = vmatprep.mubr.f32.mxu0 0.0
  %283 = vmatmul.mubr.f32.gmra.mrb[0].mxu0 %v200
  %v284 = vpop.f32.mrb[0].mxu0
  %v285 = vadd.f32 %v190, %v284
  %v286 = vpop.f32.mrb[0].mxu0
  %287 = vmatprep.mubr.f32.mxu0 0.0
  %288 = vmatmul.mubr.f32.gmra.mrb[0].mxu0 %v203
  %v289 = vpop.f32.mrb[0].mxu0
  %v290 = vadd.f32 %v190, %v289
  %v291 = vpop.f32.mrb[0].mxu0
  %292 = vdwg.mxu0
  %vm293 = vcmask 261120
  %v295 = vsel %vm293, 0.0, 0
  %297 = vmatprep.subr.mxu0 0.0
  %298 = vmatpush1.msra.mxu0 %v181
  %299 = vmatprep.subr.mxu0 0.0
  %300 = vmatpush1.msra.mxu0 %v182
  %301 = vmatprep.subr.mxu0 0.0
  %302 = vmatpush1.msra.mxu0 %v183
  %303 = vmatprep.subr.mxu0 0.0
  %304 = vmatpush1.msra.mxu0 %v184
  %305 = vmatprep.subr.mxu0 0.0
  %306 = vmatpush1.msra.mxu0 0.0
  %307 = vmatprep.subr.mxu0 0.0
  %308 = vmatpush1.msra.mxu0 0.0
  %309 = vmatprep.subr.mxu0 0.0
  %310 = vmatpush1.msra.mxu0 0.0
  %311 = vmatprep.subr.mxu0 0.0
  %312 = vmatpush1.msra.mxu0 0.0
  %313 = vmatprep.subr.mxu0 0.0
  %314 = vmatpush1.msra.mxu0 0.0
  %315 = vmatprep.subr.mxu0 0.0
  %316 = vmatpush1.msra.mxu0 0.0
  %317 = vmatprep.subr.mxu0 0.0
  %318 = vmatpush1.msra.mxu0 0.0
  %319 = vmatprep.subr.mxu0 0.0
  %320 = vmatpush1.msra.mxu0 0.0
  %321 = vmatprep.subr.mxu0 0.0
  %322 = vmatpush1.msra.mxu0 0.0
  %323 = vmatprep.subr.mxu0 0.0
  %324 = vmatpush1.msra.mxu0 0.0
  %325 = vmatprep.subr.mxu0 0.0
  %326 = vmatpush1.msra.mxu0 0.0
  %327 = vmatprep.subr.mxu0 0.0
  %328 = vmatpush1.msra.mxu0 0.0
  %329 = vmatprep.subr.mxu0 0.0
  %330 = vmatpush1.msra.mxu0 0.0
  %331 = vmatprep.subr.mxu0 0.0
  %332 = vmatpush1.msra.mxu0 0.0
  %333 = vmatprep.subr.mxu0 0.0
  %334 = vmatpush1.msra.mxu0 0.0
  %335 = vmatprep.subr.mxu0 0.0
  %336 = vmatpush1.msra.mxu0 0.0
  %337 = vmatprep.subr.mxu0 0.0
  %338 = vmatpush1.msra.mxu0 0.0
  %339 = vmatprep.subr.mxu0 0.0
  %340 = vmatpush1.msra.mxu0 0.0
  %341 = vmatprep.subr.mxu0 0.0
  %342 = vmatpush1.msra.mxu0 0.0
  %343 = vmatprep.subr.mxu0 0.0
  %344 = vmatpush1.msra.mxu0 0.0
  %345 = vmatprep.subr.mxu0 0.0
  %346 = vmatpush1.msra.mxu0 0.0
  %347 = vmatprep.subr.mxu0 0.0
  %348 = vmatpush1.msra.mxu0 0.0
  %349 = vmatprep.subr.mxu0 0.0
  %350 = vmatpush1.msra.mxu0 0.0
  %351 = vmatprep.subr.mxu0 0.0
  %352 = vmatpush1.msra.mxu0 0.0
  %353 = vmatprep.subr.mxu0 0.0
  %354 = vmatpush1.msra.mxu0 0.0
  %355 = vmatprep.subr.mxu0 0.0
  %356 = vmatpush1.msra.mxu0 0.0
  %357 = vmatprep.subr.mxu0 0.0
  %358 = vmatpush1.msra.mxu0 0.0
  %359 = vmatprep.subr.mxu0 0.0
  %360 = vmatpush1.msra.mxu0 0.0
  %361 = vmatprep.mubr.f32.mxu0 0.0
  %362 = vmatmul.mubr.f32.gmra.mrb[0].mxu0 %v295
  %v363 = vpop.f32.mrb[0].mxu0
  %v364 = vadd.f32 0.0, %v363
  %v365 = vpop.f32.mrb[0].mxu0
  %366 = vdwg.mxu0
  %v367 = vadd.f32 %v275, %v364
  %v368 = vtanh.pop %v367
  %v369 = vxor.u32 %v367, 2147483648
  %v370 = vmul.f32 %v369, 1.442695
  %v371 = vpow.pop %v370
  %v372 = vadd.f32 %v371, 1.0
  %v373 = vrcp.pop %v372
  %v374 = vmul.f32 1.0, %v373
  %v375 = vsel %vm36, %v368, %v374
  %v376 = vmul.f32 %v375, 0.0
  %378 = vrot.lane.b32.xlu0 %v375, 64
  %v379 = vpop.permute.xlu0 %378
  %v381 = vmul.f32 %v375, %v379
  %383 = vrot.lane.b32.xlu0 %v381, 32
  %v384 = vpop.permute.xlu0 %383
  %v386 = vadd.f32 %v376, %v384
  %v387 = vtanh.pop %v386
  %389 = vrot.lane.b32.xlu0 %v387, 64
  %v390 = vpop.permute.xlu0 %389
  %v392 = vmul.f32 %v375, %v390
  %394 = vrot.lane.b32.xlu0 %v392, 32
  %v395 = vpop.permute.xlu0 %394
  %v396 = vsel %vm293, %v395, 0
  %398 = vmatprep.subr.mxu0 0.0
  %399 = vmatpush1.msra.mxu0 %v181
  %400 = vmatprep.subr.mxu0 0.0
  %401 = vmatpush1.msra.mxu0 %v182
  %402 = vmatprep.subr.mxu0 0.0
  %403 = vmatpush1.msra.mxu0 %v183
  %404 = vmatprep.subr.mxu0 0.0
  %405 = vmatpush1.msra.mxu0 %v184
  %406 = vmatprep.subr.mxu0 0.0
  %407 = vmatpush1.msra.mxu0 0.0
  %408 = vmatprep.subr.mxu0 0.0
  %409 = vmatpush1.msra.mxu0 0.0
  %410 = vmatprep.subr.mxu0 0.0
  %411 = vmatpush1.msra.mxu0 0.0
  %412 = vmatprep.subr.mxu0 0.0
  %413 = vmatpush1.msra.mxu0 0.0
  %414 = vmatprep.subr.mxu0 0.0
  %415 = vmatpush1.msra.mxu0 0.0
  %416 = vmatprep.subr.mxu0 0.0
  %417 = vmatpush1.msra.mxu0 0.0
  %418 = vmatprep.subr.mxu0 0.0
  %419 = vmatpush1.msra.mxu0 0.0
  %420 = vmatprep.subr.mxu0 0.0
  %421 = vmatpush1.msra.mxu0 0.0
  %422 = vmatprep.subr.mxu0 0.0
  %423 = vmatpush1.msra.mxu0 0.0
  %424 = vmatprep.subr.mxu0 0.0
  %425 = vmatpush1.msra.mxu0 0.0
  %426 = vmatprep.subr.mxu0 0.0
  %427 = vmatpush1.msra.mxu0 0.0
  %428 = vmatprep.subr.mxu0 0.0
  %429 = vmatpush1.msra.mxu0 0.0
  %430 = vmatprep.subr.mxu0 0.0
  %431 = vmatpush1.msra.mxu0 0.0
  %432 = vmatprep.subr.mxu0 0.0
  %433 = vmatpush1.msra.mxu0 0.0
  %434 = vmatprep.subr.mxu0 0.0
  %435 = vmatpush1.msra.mxu0 0.0
  %436 = vmatprep.subr.mxu0 0.0
  %437 = vmatpush1.msra.mxu0 0.0
  %438 = vmatprep.subr.mxu0 0.0
  %439 = vmatpush1.msra.mxu0 0.0
  %440 = vmatprep.subr.mxu0 0.0
  %441 = vmatpush1.msra.mxu0 0.0
  %442 = vmatprep.subr.mxu0 0.0
  %443 = vmatpush1.msra.mxu0 0.0
  %444 = vmatprep.subr.mxu0 0.0
  %445 = vmatpush1.msra.mxu0 0.0
  %446 = vmatprep.subr.mxu0 0.0
  %447 = vmatpush1.msra.mxu0 0.0
  %448 = vmatprep.subr.mxu0 0.0
  %449 = vmatpush1.msra.mxu0 0.0
  %450 = vmatprep.subr.mxu0 0.0
  %451 = vmatpush1.msra.mxu0 0.0
  %452 = vmatprep.subr.mxu0 0.0
  %453 = vmatpush1.msra.mxu0 0.0
  %454 = vmatprep.subr.mxu0 0.0
  %455 = vmatpush1.msra.mxu0 0.0
  %456 = vmatprep.subr.mxu0 0.0
  %457 = vmatpush1.msra.mxu0 0.0
  %458 = vmatprep.subr.mxu0 0.0
  %459 = vmatpush1.msra.mxu0 0.0
  %460 = vmatprep.subr.mxu0 0.0
  %461 = vmatpush1.msra.mxu0 0.0
  %462 = vmatprep.mubr.f32.mxu0 0.0
  %463 = vmatmul.mubr.f32.gmra.mrb[0].mxu0 %v396
  %v464 = vpop.f32.mrb[0].mxu0
  %v465 = vadd.f32 0.0, %v464
  %v466 = vpop.f32.mrb[0].mxu0
  %467 = vdwg.mxu0
  %v469 = vrot.slane %v465, 6
  %v471 = vadd.f32 %v275, %v469
  %v472 = vtanh.pop %v471
  %v473 = vxor.u32 %v471, 2147483648
  %v474 = vmul.f32 %v473, 1.442695
  %v475 = vpow.pop %v474
  %v476 = vadd.f32 %v475, 1.0
  %v477 = vrcp.pop %v476
  %v478 = vmul.f32 1.0, %v477
  %v479 = vsel %vm36, %v472, %v478
  %v481 = vrot.slane %v386, 6
  %v483 = vmul.f32 %v479, %v481
  %485 = vrot.lane.b32.xlu0 %v479, 64
  %v486 = vpop.permute.xlu0 %485
  %v488 = vmul.f32 %v479, %v486
  %490 = vrot.lane.b32.xlu0 %v488, 32
  %v491 = vpop.permute.xlu0 %490
  %v493 = vadd.f32 %v483, %v491
  %v494 = vtanh.pop %v493
  %496 = vrot.lane.b32.xlu0 %v494, 64
  %v497 = vpop.permute.xlu0 %496
  %v499 = vmul.f32 %v479, %v497
  %v501 = vrot.slane %v499, 2
  %502 = vrot.lane.b32.xlu0 %v501, 32
  %v503 = vpop.permute.xlu0 %502
  %v504 = vsel %vm293, %v503, 0
  %506 = vmatprep.subr.mxu0 0.0
  %507 = vmatpush1.msra.mxu0 %v181
  %508 = vmatprep.subr.mxu0 0.0
  %509 = vmatpush1.msra.mxu0 %v182
  %510 = vmatprep.subr.mxu0 0.0
  %511 = vmatpush1.msra.mxu0 %v183
  %512 = vmatprep.subr.mxu0 0.0
  %513 = vmatpush1.msra.mxu0 %v184
  %514 = vmatprep.subr.mxu0 0.0
  %515 = vmatpush1.msra.mxu0 0.0
  %516 = vmatprep.subr.mxu0 0.0
  %517 = vmatpush1.msra.mxu0 0.0
  %518 = vmatprep.subr.mxu0 0.0
  %519 = vmatpush1.msra.mxu0 0.0
  %520 = vmatprep.subr.mxu0 0.0
  %521 = vmatpush1.msra.mxu0 0.0
  %522 = vmatprep.subr.mxu0 0.0
  %523 = vmatpush1.msra.mxu0 0.0
  %524 = vmatprep.subr.mxu0 0.0
  %525 = vmatpush1.msra.mxu0 0.0
  %526 = vmatprep.subr.mxu0 0.0
  %527 = vmatpush1.msra.mxu0 0.0
  %528 = vmatprep.subr.mxu0 0.0
  %529 = vmatpush1.msra.mxu0 0.0
  %530 = vmatprep.subr.mxu0 0.0
  %531 = vmatpush1.msra.mxu0 0.0
  %532 = vmatprep.subr.mxu0 0.0
  %533 = vmatpush1.msra.mxu0 0.0
  %534 = vmatprep.subr.mxu0 0.0
  %535 = vmatpush1.msra.mxu0 0.0
  %536 = vmatprep.subr.mxu0 0.0
  %537 = vmatpush1.msra.mxu0 0.0
  %538 = vmatprep.subr.mxu0 0.0
  %539 = vmatpush1.msra.mxu0 0.0
  %540 = vmatprep.subr.mxu0 0.0
  %541 = vmatpush1.msra.mxu0 0.0
  %542 = vmatprep.subr.mxu0 0.0
  %543 = vmatpush1.msra.mxu0 0.0
  %544 = vmatprep.subr.mxu0 0.0
  %545 = vmatpush1.msra.mxu0 0.0
  %546 = vmatprep.subr.mxu0 0.0
  %547 = vmatpush1.msra.mxu0 0.0
  %548 = vmatprep.subr.mxu0 0.0
  %549 = vmatpush1.msra.mxu0 0.0
  %550 = vmatprep.subr.mxu0 0.0
  %551 = vmatpush1.msra.mxu0 0.0
  %552 = vmatprep.subr.mxu0 0.0
  %553 = vmatpush1.msra.mxu0 0.0
  %554 = vmatprep.subr.mxu0 0.0
  %555 = vmatpush1.msra.mxu0 0.0
  %556 = vmatprep.subr.mxu0 0.0
  %557 = vmatpush1.msra.mxu0 0.0
  %558 = vmatprep.subr.mxu0 0.0
  %559 = vmatpush1.msra.mxu0 0.0
  %560 = vmatprep.subr.mxu0 0.0
  %561 = vmatpush1.msra.mxu0 0.0
  %562 = vmatprep.subr.mxu0 0.0
  %563 = vmatpush1.msra.mxu0 0.0
  %564 = vmatprep.subr.mxu0 0.0
  %565 = vmatpush1.msra.mxu0 0.0
  %566 = vmatprep.subr.mxu0 0.0
  %567 = vmatpush1.msra.mxu0 0.0
  %568 = vmatprep.subr.mxu0 0.0
  %569 = vmatpush1.msra.mxu0 0.0
  %570 = vmatprep.mubr.f32.mxu0 0.0
  %571 = vmatmul.mubr.f32.gmra.mrb[0].mxu0 %v504
  %v572 = vpop.f32.mrb[0].mxu0
  %v573 = vadd.f32 0.0, %v572
  %v574 = vpop.f32.mrb[0].mxu0
  %575 = vdwg.mxu0
  %v577 = vrot.slane %v573, 4
  %v579 = vadd.f32 %v275, %v577
  %v580 = vtanh.pop %v579
  %v581 = vxor.u32 %v579, 2147483648
  %v582 = vmul.f32 %v581, 1.442695
  %v583 = vpow.pop %v582
  %v584 = vadd.f32 %v583, 1.0
  %v585 = vrcp.pop %v584
  %v586 = vmul.f32 1.0, %v585
  %v587 = vsel %vm36, %v580, %v586
  %v589 = vrot.slane %v493, 6
  %v591 = vmul.f32 %v587, %v589
  %593 = vrot.lane.b32.xlu0 %v587, 64
  %v594 = vpop.permute.xlu0 %593
  %v596 = vmul.f32 %v587, %v594
  %598 = vrot.lane.b32.xlu0 %v596, 32
  %v599 = vpop.permute.xlu0 %598
  %v601 = vadd.f32 %v591, %v599
  %v602 = vtanh.pop %v601
  %604 = vrot.lane.b32.xlu0 %v602, 64
  %v605 = vpop.permute.xlu0 %604
  %v607 = vmul.f32 %v587, %v605
  %v609 = vrot.slane %v607, 4
  %610 = vrot.lane.b32.xlu0 %v609, 32
  %v611 = vpop.permute.xlu0 %610
  %v612 = vsel %vm293, %v611, 0
  %614 = vmatprep.subr.mxu0 0.0
  %615 = vmatpush1.msra.mxu0 %v181
  %616 = vmatprep.subr.mxu0 0.0
  %617 = vmatpush1.msra.mxu0 %v182
  %618 = vmatprep.subr.mxu0 0.0
  %619 = vmatpush1.msra.mxu0 %v183
  %620 = vmatprep.subr.mxu0 0.0
  %621 = vmatpush1.msra.mxu0 %v184
  %622 = vmatprep.subr.mxu0 0.0
  %623 = vmatpush1.msra.mxu0 0.0
  %624 = vmatprep.subr.mxu0 0.0
  %625 = vmatpush1.msra.mxu0 0.0
  %626 = vmatprep.subr.mxu0 0.0
  %627 = vmatpush1.msra.mxu0 0.0
  %628 = vmatprep.subr.mxu0 0.0
  %629 = vmatpush1.msra.mxu0 0.0
  %630 = vmatprep.subr.mxu0 0.0
  %631 = vmatpush1.msra.mxu0 0.0
  %632 = vmatprep.subr.mxu0 0.0
  %633 = vmatpush1.msra.mxu0 0.0
  %634 = vmatprep.subr.mxu0 0.0
  %635 = vmatpush1.msra.mxu0 0.0
  %636 = vmatprep.subr.mxu0 0.0
  %637 = vmatpush1.msra.mxu0 0.0
  %638 = vmatprep.subr.mxu0 0.0
  %639 = vmatpush1.msra.mxu0 0.0
  %640 = vmatprep.subr.mxu0 0.0
  %641 = vmatpush1.msra.mxu0 0.0
  %642 = vmatprep.subr.mxu0 0.0
  %643 = vmatpush1.msra.mxu0 0.0
  %644 = vmatprep.subr.mxu0 0.0
  %645 = vmatpush1.msra.mxu0 0.0
  %646 = vmatprep.subr.mxu0 0.0
  %647 = vmatpush1.msra.mxu0 0.0
  %648 = vmatprep.subr.mxu0 0.0
  %649 = vmatpush1.msra.mxu0 0.0
  %650 = vmatprep.subr.mxu0 0.0
  %651 = vmatpush1.msra.mxu0 0.0
  %652 = vmatprep.subr.mxu0 0.0
  %653 = vmatpush1.msra.mxu0 0.0
  %654 = vmatprep.subr.mxu0 0.0
  %655 = vmatpush1.msra.mxu0 0.0
  %656 = vmatprep.subr.mxu0 0.0
  %657 = vmatpush1.msra.mxu0 0.0
  %658 = vmatprep.subr.mxu0 0.0
  %659 = vmatpush1.msra.mxu0 0.0
  %660 = vmatprep.subr.mxu0 0.0
  %661 = vmatpush1.msra.mxu0 0.0
  %662 = vmatprep.subr.mxu0 0.0
  %663 = vmatpush1.msra.mxu0 0.0
  %664 = vmatprep.subr.mxu0 0.0
  %665 = vmatpush1.msra.mxu0 0.0
  %666 = vmatprep.subr.mxu0 0.0
  %667 = vmatpush1.msra.mxu0 0.0
  %668 = vmatprep.subr.mxu0 0.0
  %669 = vmatpush1.msra.mxu0 0.0
  %670 = vmatprep.subr.mxu0 0.0
  %671 = vmatpush1.msra.mxu0 0.0
  %672 = vmatprep.subr.mxu0 0.0
  %673 = vmatpush1.msra.mxu0 0.0
  %674 = vmatprep.subr.mxu0 0.0
  %675 = vmatpush1.msra.mxu0 0.0
  %676 = vmatprep.subr.mxu0 0.0
  %677 = vmatpush1.msra.mxu0 0.0
  %678 = vmatprep.mubr.f32.mxu0 0.0
  %679 = vmatmul.mubr.f32.gmra.mrb[0].mxu0 %v612
  %v680 = vpop.f32.mrb[0].mxu0
  %v681 = vadd.f32 0.0, %v680
  %v682 = vpop.f32.mrb[0].mxu0
  %683 = vdwg.mxu0
  %v685 = vrot.slane %v681, 2
  %v687 = vadd.f32 %v275, %v685
  %v688 = vtanh.pop %v687
  %v689 = vxor.u32 %v687, 2147483648
  %v690 = vmul.f32 %v689, 1.442695
  %v691 = vpow.pop %v690
  %v692 = vadd.f32 %v691, 1.0
  %v693 = vrcp.pop %v692
  %v694 = vmul.f32 1.0, %v693
  %v695 = vsel %vm36, %v688, %v694
  %v697 = vrot.slane %v601, 6
  %v699 = vmul.f32 %v695, %v697
  %701 = vrot.lane.b32.xlu0 %v695, 64
  %v702 = vpop.permute.xlu0 %701
  %v704 = vmul.f32 %v695, %v702
  %706 = vrot.lane.b32.xlu0 %v704, 32
  %v707 = vpop.permute.xlu0 %706
  %v709 = vadd.f32 %v699, %v707
  %v710 = vtanh.pop %v709
  %712 = vrot.lane.b32.xlu0 %v710, 64
  %v713 = vpop.permute.xlu0 %712
  %v715 = vmul.f32 %v695, %v713
  %v717 = vrot.slane %v715, 6
  %718 = vrot.lane.b32.xlu0 %v717, 32
  %v719 = vpop.permute.xlu0 %718
  %v720 = vsel %vm293, %v719, 0
  %722 = vmatprep.subr.mxu0 0.0
  %723 = vmatpush1.msra.mxu0 %v181
  %724 = vmatprep.subr.mxu0 0.0
  %725 = vmatpush1.msra.mxu0 %v182
  %726 = vmatprep.subr.mxu0 0.0
  %727 = vmatpush1.msra.mxu0 %v183
  %728 = vmatprep.subr.mxu0 0.0
  %729 = vmatpush1.msra.mxu0 %v184
  %730 = vmatprep.subr.mxu0 0.0
  %731 = vmatpush1.msra.mxu0 0.0
  %732 = vmatprep.subr.mxu0 0.0
  %733 = vmatpush1.msra.mxu0 0.0
  %734 = vmatprep.subr.mxu0 0.0
  %735 = vmatpush1.msra.mxu0 0.0
  %736 = vmatprep.subr.mxu0 0.0
  %737 = vmatpush1.msra.mxu0 0.0
  %738 = vmatprep.subr.mxu0 0.0
  %739 = vmatpush1.msra.mxu0 0.0
  %740 = vmatprep.subr.mxu0 0.0
  %741 = vmatpush1.msra.mxu0 0.0
  %742 = vmatprep.subr.mxu0 0.0
  %743 = vmatpush1.msra.mxu0 0.0
  %744 = vmatprep.subr.mxu0 0.0
  %745 = vmatpush1.msra.mxu0 0.0
  %746 = vmatprep.subr.mxu0 0.0
  %747 = vmatpush1.msra.mxu0 0.0
  %748 = vmatprep.subr.mxu0 0.0
  %749 = vmatpush1.msra.mxu0 0.0
  %750 = vmatprep.subr.mxu0 0.0
  %751 = vmatpush1.msra.mxu0 0.0
  %752 = vmatprep.subr.mxu0 0.0
  %753 = vmatpush1.msra.mxu0 0.0
  %754 = vmatprep.subr.mxu0 0.0
  %755 = vmatpush1.msra.mxu0 0.0
  %756 = vmatprep.subr.mxu0 0.0
  %757 = vmatpush1.msra.mxu0 0.0
  %758 = vmatprep.subr.mxu0 0.0
  %759 = vmatpush1.msra.mxu0 0.0
  %760 = vmatprep.subr.mxu0 0.0
  %761 = vmatpush1.msra.mxu0 0.0
  %762 = vmatprep.subr.mxu0 0.0
  %763 = vmatpush1.msra.mxu0 0.0
  %764 = vmatprep.subr.mxu0 0.0
  %765 = vmatpush1.msra.mxu0 0.0
  %766 = vmatprep.subr.mxu0 0.0
  %767 = vmatpush1.msra.mxu0 0.0
  %768 = vmatprep.subr.mxu0 0.0
  %769 = vmatpush1.msra.mxu0 0.0
  %770 = vmatprep.subr.mxu0 0.0
  %771 = vmatpush1.msra.mxu0 0.0
  %772 = vmatprep.subr.mxu0 0.0
  %773 = vmatpush1.msra.mxu0 0.0
  %774 = vmatprep.subr.mxu0 0.0
  %775 = vmatpush1.msra.mxu0 0.0
  %776 = vmatprep.subr.mxu0 0.0
  %777 = vmatpush1.msra.mxu0 0.0
  %778 = vmatprep.subr.mxu0 0.0
  %779 = vmatpush1.msra.mxu0 0.0
  %780 = vmatprep.subr.mxu0 0.0
  %781 = vmatpush1.msra.mxu0 0.0
  %782 = vmatprep.subr.mxu0 0.0
  %783 = vmatpush1.msra.mxu0 0.0
  %784 = vmatprep.subr.mxu0 0.0
  %785 = vmatpush1.msra.mxu0 0.0
  %786 = vmatprep.mubr.f32.mxu0 0.0
  %787 = vmatmul.mubr.f32.gmra.mrb[0].mxu0 %v720
  %v788 = vpop.f32.mrb[0].mxu0
  %v789 = vadd.f32 0.0, %v788
  %v790 = vpop.f32.mrb[0].mxu0
  %791 = vdwg.mxu0
  %v792 = vadd.f32 %v280, %v789
  %v793 = vtanh.pop %v792
  %v794 = vxor.u32 %v792, 2147483648
  %v795 = vmul.f32 %v794, 1.442695
  %v796 = vpow.pop %v795
  %v797 = vadd.f32 %v796, 1.0
  %v798 = vrcp.pop %v797
  %v799 = vmul.f32 1.0, %v798
  %v800 = vsel %vm36, %v793, %v799
  %v802 = vrot.slane %v709, 6
  %v804 = vmul.f32 %v800, %v802
  %806 = vrot.lane.b32.xlu0 %v800, 64
  %v807 = vpop.permute.xlu0 %806
  %v809 = vmul.f32 %v800, %v807
  %811 = vrot.lane.b32.xlu0 %v809, 32
  %v812 = vpop.permute.xlu0 %811
  %v814 = vadd.f32 %v804, %v812
  %v815 = vtanh.pop %v814
  %817 = vrot.lane.b32.xlu0 %v815, 64
  %v818 = vpop.permute.xlu0 %817
  %v820 = vmul.f32 %v800, %v818
  %822 = vrot.lane.b32.xlu0 %v820, 32
  %v823 = vpop.permute.xlu0 %822
  %v824 = vsel %vm293, %v823, 0
  %826 = vmatprep.subr.mxu0 0.0
  %827 = vmatpush1.msra.mxu0 %v181
  %828 = vmatprep.subr.mxu0 0.0
  %829 = vmatpush1.msra.mxu0 %v182
  %830 = vmatprep.subr.mxu0 0.0
  %831 = vmatpush1.msra.mxu0 %v183
  %832 = vmatprep.subr.mxu0 0.0
  %833 = vmatpush1.msra.mxu0 %v184
  %834 = vmatprep.subr.mxu0 0.0
  %835 = vmatpush1.msra.mxu0 0.0
  %836 = vmatprep.subr.mxu0 0.0
  %837 = vmatpush1.msra.mxu0 0.0
  %838 = vmatprep.subr.mxu0 0.0
  %839 = vmatpush1.msra.mxu0 0.0
  %840 = vmatprep.subr.mxu0 0.0
  %841 = vmatpush1.msra.mxu0 0.0
  %842 = vmatprep.subr.mxu0 0.0
  %843 = vmatpush1.msra.mxu0 0.0
  %844 = vmatprep.subr.mxu0 0.0
  %845 = vmatpush1.msra.mxu0 0.0
  %846 = vmatprep.subr.mxu0 0.0
  %847 = vmatpush1.msra.mxu0 0.0
  %848 = vmatprep.subr.mxu0 0.0
  %849 = vmatpush1.msra.mxu0 0.0
  %850 = vmatprep.subr.mxu0 0.0
  %851 = vmatpush1.msra.mxu0 0.0
  %852 = vmatprep.subr.mxu0 0.0
  %853 = vmatpush1.msra.mxu0 0.0
  %854 = vmatprep.subr.mxu0 0.0
  %855 = vmatpush1.msra.mxu0 0.0
  %856 = vmatprep.subr.mxu0 0.0
  %857 = vmatpush1.msra.mxu0 0.0
  %858 = vmatprep.subr.mxu0 0.0
  %859 = vmatpush1.msra.mxu0 0.0
  %860 = vmatprep.subr.mxu0 0.0
  %861 = vmatpush1.msra.mxu0 0.0
  %862 = vmatprep.subr.mxu0 0.0
  %863 = vmatpush1.msra.mxu0 0.0
  %864 = vmatprep.subr.mxu0 0.0
  %865 = vmatpush1.msra.mxu0 0.0
  %866 = vmatprep.subr.mxu0 0.0
  %867 = vmatpush1.msra.mxu0 0.0
  %868 = vmatprep.subr.mxu0 0.0
  %869 = vmatpush1.msra.mxu0 0.0
  %870 = vmatprep.subr.mxu0 0.0
  %871 = vmatpush1.msra.mxu0 0.0
  %872 = vmatprep.subr.mxu0 0.0
  %873 = vmatpush1.msra.mxu0 0.0
  %874 = vmatprep.subr.mxu0 0.0
  %875 = vmatpush1.msra.mxu0 0.0
  %876 = vmatprep.subr.mxu0 0.0
  %877 = vmatpush1.msra.mxu0 0.0
  %878 = vmatprep.subr.mxu0 0.0
  %879 = vmatpush1.msra.mxu0 0.0
  %880 = vmatprep.subr.mxu0 0.0
  %881 = vmatpush1.msra.mxu0 0.0
  %882 = vmatprep.subr.mxu0 0.0
  %883 = vmatpush1.msra.mxu0 0.0
  %884 = vmatprep.subr.mxu0 0.0
  %885 = vmatpush1.msra.mxu0 0.0
  %886 = vmatprep.subr.mxu0 0.0
  %887 = vmatpush1.msra.mxu0 0.0
  %888 = vmatprep.subr.mxu0 0.0
  %889 = vmatpush1.msra.mxu0 0.0
  %890 = vmatprep.mubr.f32.mxu0 0.0
  %891 = vmatmul.mubr.f32.gmra.mrb[0].mxu0 %v824
  %v892 = vpop.f32.mrb[0].mxu0
  %v893 = vadd.f32 0.0, %v892
  %v894 = vpop.f32.mrb[0].mxu0
  %895 = vdwg.mxu0
  %v897 = vrot.slane %v893, 6
  %v899 = vadd.f32 %v280, %v897
  %v900 = vtanh.pop %v899
  %v901 = vxor.u32 %v899, 2147483648
  %v902 = vmul.f32 %v901, 1.442695
  %v903 = vpow.pop %v902
  %v904 = vadd.f32 %v903, 1.0
  %v905 = vrcp.pop %v904
  %v906 = vmul.f32 1.0, %v905
  %v907 = vsel %vm36, %v900, %v906
  %v909 = vrot.slane %v814, 6
  %v911 = vmul.f32 %v907, %v909
  %913 = vrot.lane.b32.xlu0 %v907, 64
  %v914 = vpop.permute.xlu0 %913
  %v916 = vmul.f32 %v907, %v914
  %918 = vrot.lane.b32.xlu0 %v916, 32
  %v919 = vpop.permute.xlu0 %918
  %v921 = vadd.f32 %v911, %v919
  %v922 = vtanh.pop %v921
  %924 = vrot.lane.b32.xlu0 %v922, 64
  %v925 = vpop.permute.xlu0 %924
  %v927 = vmul.f32 %v907, %v925
  %v929 = vrot.slane %v927, 2
  %930 = vrot.lane.b32.xlu0 %v929, 32
  %v931 = vpop.permute.xlu0 %930
  %v932 = vsel %vm293, %v931, 0
  %934 = vmatprep.subr.mxu0 0.0
  %935 = vmatpush1.msra.mxu0 %v181
  %936 = vmatprep.subr.mxu0 0.0
  %937 = vmatpush1.msra.mxu0 %v182
  %938 = vmatprep.subr.mxu0 0.0
  %939 = vmatpush1.msra.mxu0 %v183
  %940 = vmatprep.subr.mxu0 0.0
  %941 = vmatpush1.msra.mxu0 %v184
  %942 = vmatprep.subr.mxu0 0.0
  %943 = vmatpush1.msra.mxu0 0.0
  %944 = vmatprep.subr.mxu0 0.0
  %945 = vmatpush1.msra.mxu0 0.0
  %946 = vmatprep.subr.mxu0 0.0
  %947 = vmatpush1.msra.mxu0 0.0
  %948 = vmatprep.subr.mxu0 0.0
  %949 = vmatpush1.msra.mxu0 0.0
  %950 = vmatprep.subr.mxu0 0.0
  %951 = vmatpush1.msra.mxu0 0.0
  %952 = vmatprep.subr.mxu0 0.0
  %953 = vmatpush1.msra.mxu0 0.0
  %954 = vmatprep.subr.mxu0 0.0
  %955 = vmatpush1.msra.mxu0 0.0
  %956 = vmatprep.subr.mxu0 0.0
  %957 = vmatpush1.msra.mxu0 0.0
  %958 = vmatprep.subr.mxu0 0.0
  %959 = vmatpush1.msra.mxu0 0.0
  %960 = vmatprep.subr.mxu0 0.0
  %961 = vmatpush1.msra.mxu0 0.0
  %962 = vmatprep.subr.mxu0 0.0
  %963 = vmatpush1.msra.mxu0 0.0
  %964 = vmatprep.subr.mxu0 0.0
  %965 = vmatpush1.msra.mxu0 0.0
  %966 = vmatprep.subr.mxu0 0.0
  %967 = vmatpush1.msra.mxu0 0.0
  %968 = vmatprep.subr.mxu0 0.0
  %969 = vmatpush1.msra.mxu0 0.0
  %970 = vmatprep.subr.mxu0 0.0
  %971 = vmatpush1.msra.mxu0 0.0
  %972 = vmatprep.subr.mxu0 0.0
  %973 = vmatpush1.msra.mxu0 0.0
  %974 = vmatprep.subr.mxu0 0.0
  %975 = vmatpush1.msra.mxu0 0.0
  %976 = vmatprep.subr.mxu0 0.0
  %977 = vmatpush1.msra.mxu0 0.0
  %978 = vmatprep.subr.mxu0 0.0
  %979 = vmatpush1.msra.mxu0 0.0
  %980 = vmatprep.subr.mxu0 0.0
  %981 = vmatpush1.msra.mxu0 0.0
  %982 = vmatprep.subr.mxu0 0.0
  %983 = vmatpush1.msra.mxu0 0.0
  %984 = vmatprep.subr.mxu0 0.0
  %985 = vmatpush1.msra.mxu0 0.0
  %986 = vmatprep.subr.mxu0 0.0
  %987 = vmatpush1.msra.mxu0 0.0
  %988 = vmatprep.subr.mxu0 0.0
  %989 = vmatpush1.msra.mxu0 0.0
  %990 = vmatprep.subr.mxu0 0.0
  %991 = vmatpush1.msra.mxu0 0.0
  %992 = vmatprep.subr.mxu0 0.0
  %993 = vmatpush1.msra.mxu0 0.0
  %994 = vmatprep.subr.mxu0 0.0
  %995 = vmatpush1.msra.mxu0 0.0
  %996 = vmatprep.subr.mxu0 0.0
  %997 = vmatpush1.msra.mxu0 0.0
  %998 = vmatprep.mubr.f32.mxu0 0.0
  %999 = vmatmul.mubr.f32.gmra.mrb[0].mxu0 %v932
  %v1000 = vpop.f32.mrb[0].mxu0
  %v1001 = vadd.f32 0.0, %v1000
  %v1002 = vpop.f32.mrb[0].mxu0
  %1003 = vdwg.mxu0
  %v1005 = vrot.slane %v1001, 4
  %v1007 = vadd.f32 %v280, %v1005
  %v1008 = vtanh.pop %v1007
  %v1009 = vxor.u32 %v1007, 2147483648
  %v1010 = vmul.f32 %v1009, 1.442695
  %v1011 = vpow.pop %v1010
  %v1012 = vadd.f32 %v1011, 1.0
  %v1013 = vrcp.pop %v1012
  %v1014 = vmul.f32 1.0, %v1013
  %v1015 = vsel %vm36, %v1008, %v1014
  %v1017 = vrot.slane %v921, 6
  %v1019 = vmul.f32 %v1015, %v1017
  %1021 = vrot.lane.b32.xlu0 %v1015, 64
  %v1022 = vpop.permute.xlu0 %1021
  %v1024 = vmul.f32 %v1015, %v1022
  %1026 = vrot.lane.b32.xlu0 %v1024, 32
  %v1027 = vpop.permute.xlu0 %1026
  %v1029 = vadd.f32 %v1019, %v1027
  %v1030 = vtanh.pop %v1029
  %1032 = vrot.lane.b32.xlu0 %v1030, 64
  %v1033 = vpop.permute.xlu0 %1032
  %v1035 = vmul.f32 %v1015, %v1033
  %v1037 = vrot.slane %v1035, 4
  %1038 = vrot.lane.b32.xlu0 %v1037, 32
  %v1039 = vpop.permute.xlu0 %1038
  %v1040 = vsel %vm293, %v1039, 0
  %1042 = vmatprep.subr.mxu0 0.0
  %1043 = vmatpush1.msra.mxu0 %v181
  %1044 = vmatprep.subr.mxu0 0.0
  %1045 = vmatpush1.msra.mxu0 %v182
  %1046 = vmatprep.subr.mxu0 0.0
  %1047 = vmatpush1.msra.mxu0 %v183
  %1048 = vmatprep.subr.mxu0 0.0
  %1049 = vmatpush1.msra.mxu0 %v184
  %1050 = vmatprep.subr.mxu0 0.0
  %1051 = vmatpush1.msra.mxu0 0.0
  %1052 = vmatprep.subr.mxu0 0.0
  %1053 = vmatpush1.msra.mxu0 0.0
  %1054 = vmatprep.subr.mxu0 0.0
  %1055 = vmatpush1.msra.mxu0 0.0
  %1056 = vmatprep.subr.mxu0 0.0
  %1057 = vmatpush1.msra.mxu0 0.0
  %1058 = vmatprep.subr.mxu0 0.0
  %1059 = vmatpush1.msra.mxu0 0.0
  %1060 = vmatprep.subr.mxu0 0.0
  %1061 = vmatpush1.msra.mxu0 0.0
  %1062 = vmatprep.subr.mxu0 0.0
  %1063 = vmatpush1.msra.mxu0 0.0
  %1064 = vmatprep.subr.mxu0 0.0
  %1065 = vmatpush1.msra.mxu0 0.0
  %1066 = vmatprep.subr.mxu0 0.0
  %1067 = vmatpush1.msra.mxu0 0.0
  %1068 = vmatprep.subr.mxu0 0.0
  %1069 = vmatpush1.msra.mxu0 0.0
  %1070 = vmatprep.subr.mxu0 0.0
  %1071 = vmatpush1.msra.mxu0 0.0
  %1072 = vmatprep.subr.mxu0 0.0
  %1073 = vmatpush1.msra.mxu0 0.0
  %1074 = vmatprep.subr.mxu0 0.0
  %1075 = vmatpush1.msra.mxu0 0.0
  %1076 = vmatprep.subr.mxu0 0.0
  %1077 = vmatpush1.msra.mxu0 0.0
  %1078 = vmatprep.subr.mxu0 0.0
  %1079 = vmatpush1.msra.mxu0 0.0
  %1080 = vmatprep.subr.mxu0 0.0
  %1081 = vmatpush1.msra.mxu0 0.0
  %1082 = vmatprep.subr.mxu0 0.0
  %1083 = vmatpush1.msra.mxu0 0.0
  %1084 = vmatprep.subr.mxu0 0.0
  %1085 = vmatpush1.msra.mxu0 0.0
  %1086 = vmatprep.subr.mxu0 0.0
  %1087 = vmatpush1.msra.mxu0 0.0
  %1088 = vmatprep.subr.mxu0 0.0
  %1089 = vmatpush1.msra.mxu0 0.0
  %1090 = vmatprep.subr.mxu0 0.0
  %1091 = vmatpush1.msra.mxu0 0.0
  %1092 = vmatprep.subr.mxu0 0.0
  %1093 = vmatpush1.msra.mxu0 0.0
  %1094 = vmatprep.subr.mxu0 0.0
  %1095 = vmatpush1.msra.mxu0 0.0
  %1096 = vmatprep.subr.mxu0 0.0
  %1097 = vmatpush1.msra.mxu0 0.0
  %1098 = vmatprep.subr.mxu0 0.0
  %1099 = vmatpush1.msra.mxu0 0.0
  %1100 = vmatprep.subr.mxu0 0.0
  %1101 = vmatpush1.msra.mxu0 0.0
  %1102 = vmatprep.subr.mxu0 0.0
  %1103 = vmatpush1.msra.mxu0 0.0
  %1104 = vmatprep.subr.mxu0 0.0
  %1105 = vmatpush1.msra.mxu0 0.0
  %1106 = vmatprep.mubr.f32.mxu0 0.0
  %1107 = vmatmul.mubr.f32.gmra.mrb[0].mxu0 %v1040
  %v1108 = vpop.f32.mrb[0].mxu0
  %v1109 = vadd.f32 0.0, %v1108
  %v1110 = vpop.f32.mrb[0].mxu0
  %1111 = vdwg.mxu0
  %v1113 = vrot.slane %v1109, 2
  %v1115 = vadd.f32 %v280, %v1113
  %v1116 = vtanh.pop %v1115
  %v1117 = vxor.u32 %v1115, 2147483648
  %v1118 = vmul.f32 %v1117, 1.442695
  %v1119 = vpow.pop %v1118
  %v1120 = vadd.f32 %v1119, 1.0
  %v1121 = vrcp.pop %v1120
  %v1122 = vmul.f32 1.0, %v1121
  %v1123 = vsel %vm36, %v1116, %v1122
  %v1125 = vrot.slane %v1029, 6
  %v1127 = vmul.f32 %v1123, %v1125
  %1129 = vrot.lane.b32.xlu0 %v1123, 64
  %v1130 = vpop.permute.xlu0 %1129
  %v1132 = vmul.f32 %v1123, %v1130
  %1134 = vrot.lane.b32.xlu0 %v1132, 32
  %v1135 = vpop.permute.xlu0 %1134
  %v1137 = vadd.f32 %v1127, %v1135
  %v1138 = vtanh.pop %v1137
  %1140 = vrot.lane.b32.xlu0 %v1138, 64
  %v1141 = vpop.permute.xlu0 %1140
  %v1143 = vmul.f32 %v1123, %v1141
  %v1145 = vrot.slane %v1143, 6
  %1146 = vrot.lane.b32.xlu0 %v1145, 32
  %v1147 = vpop.permute.xlu0 %1146
  %v1148 = vsel %vm293, %v1147, 0
  %1150 = vmatprep.subr.mxu0 0.0
  %1151 = vmatpush1.msra.mxu0 %v181
  %1152 = vmatprep.subr.mxu0 0.0
  %1153 = vmatpush1.msra.mxu0 %v182
  %1154 = vmatprep.subr.mxu0 0.0
  %1155 = vmatpush1.msra.mxu0 %v183
  %1156 = vmatprep.subr.mxu0 0.0
  %1157 = vmatpush1.msra.mxu0 %v184
  %1158 = vmatprep.subr.mxu0 0.0
  %1159 = vmatpush1.msra.mxu0 0.0
  %1160 = vmatprep.subr.mxu0 0.0
  %1161 = vmatpush1.msra.mxu0 0.0
  %1162 = vmatprep.subr.mxu0 0.0
  %1163 = vmatpush1.msra.mxu0 0.0
  %1164 = vmatprep.subr.mxu0 0.0
  %1165 = vmatpush1.msra.mxu0 0.0
  %1166 = vmatprep.subr.mxu0 0.0
  %1167 = vmatpush1.msra.mxu0 0.0
  %1168 = vmatprep.subr.mxu0 0.0
  %1169 = vmatpush1.msra.mxu0 0.0
  %1170 = vmatprep.subr.mxu0 0.0
  %1171 = vmatpush1.msra.mxu0 0.0
  %1172 = vmatprep.subr.mxu0 0.0
  %1173 = vmatpush1.msra.mxu0 0.0
  %1174 = vmatprep.subr.mxu0 0.0
  %1175 = vmatpush1.msra.mxu0 0.0
  %1176 = vmatprep.subr.mxu0 0.0
  %1177 = vmatpush1.msra.mxu0 0.0
  %1178 = vmatprep.subr.mxu0 0.0
  %1179 = vmatpush1.msra.mxu0 0.0
  %1180 = vmatprep.subr.mxu0 0.0
  %1181 = vmatpush1.msra.mxu0 0.0
  %1182 = vmatprep.subr.mxu0 0.0
  %1183 = vmatpush1.msra.mxu0 0.0
  %1184 = vmatprep.subr.mxu0 0.0
  %1185 = vmatpush1.msra.mxu0 0.0
  %1186 = vmatprep.subr.mxu0 0.0
  %1187 = vmatpush1.msra.mxu0 0.0
  %1188 = vmatprep.subr.mxu0 0.0
  %1189 = vmatpush1.msra.mxu0 0.0
  %1190 = vmatprep.subr.mxu0 0.0
  %1191 = vmatpush1.msra.mxu0 0.0
  %1192 = vmatprep.subr.mxu0 0.0
  %1193 = vmatpush1.msra.mxu0 0.0
  %1194 = vmatprep.subr.mxu0 0.0
  %1195 = vmatpush1.msra.mxu0 0.0
  %1196 = vmatprep.subr.mxu0 0.0
  %1197 = vmatpush1.msra.mxu0 0.0
  %1198 = vmatprep.subr.mxu0 0.0
  %1199 = vmatpush1.msra.mxu0 0.0
  %1200 = vmatprep.subr.mxu0 0.0
  %1201 = vmatpush1.msra.mxu0 0.0
  %1202 = vmatprep.subr.mxu0 0.0
  %1203 = vmatpush1.msra.mxu0 0.0
  %1204 = vmatprep.subr.mxu0 0.0
  %1205 = vmatpush1.msra.mxu0 0.0
  %1206 = vmatprep.subr.mxu0 0.0
  %1207 = vmatpush1.msra.mxu0 0.0
  %1208 = vmatprep.subr.mxu0 0.0
  %1209 = vmatpush1.msra.mxu0 0.0
  %1210 = vmatprep.subr.mxu0 0.0
  %1211 = vmatpush1.msra.mxu0 0.0
  %1212 = vmatprep.subr.mxu0 0.0
  %1213 = vmatpush1.msra.mxu0 0.0
  %1214 = vmatprep.mubr.f32.mxu0 0.0
  %1215 = vmatmul.mubr.f32.gmra.mrb[0].mxu0 %v1148
  %v1216 = vpop.f32.mrb[0].mxu0
  %v1217 = vadd.f32 0.0, %v1216
  %v1218 = vpop.f32.mrb[0].mxu0
  %1219 = vdwg.mxu0
  %v1220 = vadd.f32 %v285, %v1217
  %v1221 = vtanh.pop %v1220
  %v1222 = vxor.u32 %v1220, 2147483648
  %v1223 = vmul.f32 %v1222, 1.442695
  %v1224 = vpow.pop %v1223
  %v1225 = vadd.f32 %v1224, 1.0
  %v1226 = vrcp.pop %v1225
  %v1227 = vmul.f32 1.0, %v1226
  %v1228 = vsel %vm36, %v1221, %v1227
  %v1230 = vrot.slane %v1137, 6
  %v1232 = vmul.f32 %v1228, %v1230
  %1234 = vrot.lane.b32.xlu0 %v1228, 64
  %v1235 = vpop.permute.xlu0 %1234
  %v1237 = vmul.f32 %v1228, %v1235
  %1239 = vrot.lane.b32.xlu0 %v1237, 32
  %v1240 = vpop.permute.xlu0 %1239
  %v1242 = vadd.f32 %v1232, %v1240
  %v1243 = vtanh.pop %v1242
  %1245 = vrot.lane.b32.xlu0 %v1243, 64
  %v1246 = vpop.permute.xlu0 %1245
  %v1248 = vmul.f32 %v1228, %v1246
  %1250 = vrot.lane.b32.xlu0 %v1248, 32
  %v1251 = vpop.permute.xlu0 %1250
  %v1252 = vsel %vm293, %v1251, 0
  %1254 = vmatprep.subr.mxu0 0.0
  %1255 = vmatpush1.msra.mxu0 %v181
  %1256 = vmatprep.subr.mxu0 0.0
  %1257 = vmatpush1.msra.mxu0 %v182
  %1258 = vmatprep.subr.mxu0 0.0
  %1259 = vmatpush1.msra.mxu0 %v183
  %1260 = vmatprep.subr.mxu0 0.0
  %1261 = vmatpush1.msra.mxu0 %v184
  %1262 = vmatprep.subr.mxu0 0.0
  %1263 = vmatpush1.msra.mxu0 0.0
  %1264 = vmatprep.subr.mxu0 0.0
  %1265 = vmatpush1.msra.mxu0 0.0
  %1266 = vmatprep.subr.mxu0 0.0
  %1267 = vmatpush1.msra.mxu0 0.0
  %1268 = vmatprep.subr.mxu0 0.0
  %1269 = vmatpush1.msra.mxu0 0.0
  %1270 = vmatprep.subr.mxu0 0.0
  %1271 = vmatpush1.msra.mxu0 0.0
  %1272 = vmatprep.subr.mxu0 0.0
  %1273 = vmatpush1.msra.mxu0 0.0
  %1274 = vmatprep.subr.mxu0 0.0
  %1275 = vmatpush1.msra.mxu0 0.0
  %1276 = vmatprep.subr.mxu0 0.0
  %1277 = vmatpush1.msra.mxu0 0.0
  %1278 = vmatprep.subr.mxu0 0.0
  %1279 = vmatpush1.msra.mxu0 0.0
  %1280 = vmatprep.subr.mxu0 0.0
  %1281 = vmatpush1.msra.mxu0 0.0
  %1282 = vmatprep.subr.mxu0 0.0
  %1283 = vmatpush1.msra.mxu0 0.0
  %1284 = vmatprep.subr.mxu0 0.0
  %1285 = vmatpush1.msra.mxu0 0.0
  %1286 = vmatprep.subr.mxu0 0.0
  %1287 = vmatpush1.msra.mxu0 0.0
  %1288 = vmatprep.subr.mxu0 0.0
  %1289 = vmatpush1.msra.mxu0 0.0
  %1290 = vmatprep.subr.mxu0 0.0
  %1291 = vmatpush1.msra.mxu0 0.0
  %1292 = vmatprep.subr.mxu0 0.0
  %1293 = vmatpush1.msra.mxu0 0.0
  %1294 = vmatprep.subr.mxu0 0.0
  %1295 = vmatpush1.msra.mxu0 0.0
  %1296 = vmatprep.subr.mxu0 0.0
  %1297 = vmatpush1.msra.mxu0 0.0
  %1298 = vmatprep.subr.mxu0 0.0
  %1299 = vmatpush1.msra.mxu0 0.0
  %1300 = vmatprep.subr.mxu0 0.0
  %1301 = vmatpush1.msra.mxu0 0.0
  %1302 = vmatprep.subr.mxu0 0.0
  %1303 = vmatpush1.msra.mxu0 0.0
  %1304 = vmatprep.subr.mxu0 0.0
  %1305 = vmatpush1.msra.mxu0 0.0
  %1306 = vmatprep.subr.mxu0 0.0
  %1307 = vmatpush1.msra.mxu0 0.0
  %1308 = vmatprep.subr.mxu0 0.0
  %1309 = vmatpush1.msra.mxu0 0.0
  %1310 = vmatprep.subr.mxu0 0.0
  %1311 = vmatpush1.msra.mxu0 0.0
  %1312 = vmatprep.subr.mxu0 0.0
  %1313 = vmatpush1.msra.mxu0 0.0
  %1314 = vmatprep.subr.mxu0 0.0
  %1315 = vmatpush1.msra.mxu0 0.0
  %1316 = vmatprep.subr.mxu0 0.0
  %1317 = vmatpush1.msra.mxu0 0.0
  %1318 = vmatprep.mubr.f32.mxu0 0.0
  %1319 = vmatmul.mubr.f32.gmra.mrb[0].mxu0 %v1252
  %v1320 = vpop.f32.mrb[0].mxu0
  %v1321 = vadd.f32 0.0, %v1320
  %v1322 = vpop.f32.mrb[0].mxu0
  %1323 = vdwg.mxu0
  %v1325 = vrot.slane %v1321, 6
  %v1327 = vadd.f32 %v285, %v1325
  %v1328 = vtanh.pop %v1327
  %v1329 = vxor.u32 %v1327, 2147483648
  %v1330 = vmul.f32 %v1329, 1.442695
  %v1331 = vpow.pop %v1330
  %v1332 = vadd.f32 %v1331, 1.0
  %v1333 = vrcp.pop %v1332
  %v1334 = vmul.f32 1.0, %v1333
  %v1335 = vsel %vm36, %v1328, %v1334
  %v1337 = vrot.slane %v1242, 6
  %v1339 = vmul.f32 %v1335, %v1337
  %1341 = vrot.lane.b32.xlu0 %v1335, 64
  %v1342 = vpop.permute.xlu0 %1341
  %v1344 = vmul.f32 %v1335, %v1342
  %1346 = vrot.lane.b32.xlu0 %v1344, 32
  %v1347 = vpop.permute.xlu0 %1346
  %v1349 = vadd.f32 %v1339, %v1347
  %v1350 = vtanh.pop %v1349
  %1352 = vrot.lane.b32.xlu0 %v1350, 64
  %v1353 = vpop.permute.xlu0 %1352
  %v1355 = vmul.f32 %v1335, %v1353
  %v1357 = vrot.slane %v1355, 2
  %1358 = vrot.lane.b32.xlu0 %v1357, 32
  %v1359 = vpop.permute.xlu0 %1358
  %v1360 = vsel %vm293, %v1359, 0
  %1362 = vmatprep.subr.mxu0 0.0
  %1363 = vmatpush1.msra.mxu0 %v181
  %1364 = vmatprep.subr.mxu0 0.0
  %1365 = vmatpush1.msra.mxu0 %v182
  %1366 = vmatprep.subr.mxu0 0.0
  %1367 = vmatpush1.msra.mxu0 %v183
  %1368 = vmatprep.subr.mxu0 0.0
  %1369 = vmatpush1.msra.mxu0 %v184
  %1370 = vmatprep.subr.mxu0 0.0
  %1371 = vmatpush1.msra.mxu0 0.0
  %1372 = vmatprep.subr.mxu0 0.0
  %1373 = vmatpush1.msra.mxu0 0.0
  %1374 = vmatprep.subr.mxu0 0.0
  %1375 = vmatpush1.msra.mxu0 0.0
  %1376 = vmatprep.subr.mxu0 0.0
  %1377 = vmatpush1.msra.mxu0 0.0
  %1378 = vmatprep.subr.mxu0 0.0
  %1379 = vmatpush1.msra.mxu0 0.0
  %1380 = vmatprep.subr.mxu0 0.0
  %1381 = vmatpush1.msra.mxu0 0.0
  %1382 = vmatprep.subr.mxu0 0.0
  %1383 = vmatpush1.msra.mxu0 0.0
  %1384 = vmatprep.subr.mxu0 0.0
  %1385 = vmatpush1.msra.mxu0 0.0
  %1386 = vmatprep.subr.mxu0 0.0
  %1387 = vmatpush1.msra.mxu0 0.0
  %1388 = vmatprep.subr.mxu0 0.0
  %1389 = vmatpush1.msra.mxu0 0.0
  %1390 = vmatprep.subr.mxu0 0.0
  %1391 = vmatpush1.msra.mxu0 0.0
  %1392 = vmatprep.subr.mxu0 0.0
  %1393 = vmatpush1.msra.mxu0 0.0
  %1394 = vmatprep.subr.mxu0 0.0
  %1395 = vmatpush1.msra.mxu0 0.0
  %1396 = vmatprep.subr.mxu0 0.0
  %1397 = vmatpush1.msra.mxu0 0.0
  %1398 = vmatprep.subr.mxu0 0.0
  %1399 = vmatpush1.msra.mxu0 0.0
  %1400 = vmatprep.subr.mxu0 0.0
  %1401 = vmatpush1.msra.mxu0 0.0
  %1402 = vmatprep.subr.mxu0 0.0
  %1403 = vmatpush1.msra.mxu0 0.0
  %1404 = vmatprep.subr.mxu0 0.0
  %1405 = vmatpush1.msra.mxu0 0.0
  %1406 = vmatprep.subr.mxu0 0.0
  %1407 = vmatpush1.msra.mxu0 0.0
  %1408 = vmatprep.subr.mxu0 0.0
  %1409 = vmatpush1.msra.mxu0 0.0
  %1410 = vmatprep.subr.mxu0 0.0
  %1411 = vmatpush1.msra.mxu0 0.0
  %1412 = vmatprep.subr.mxu0 0.0
  %1413 = vmatpush1.msra.mxu0 0.0
  %1414 = vmatprep.subr.mxu0 0.0
  %1415 = vmatpush1.msra.mxu0 0.0
  %1416 = vmatprep.subr.mxu0 0.0
  %1417 = vmatpush1.msra.mxu0 0.0
  %1418 = vmatprep.subr.mxu0 0.0
  %1419 = vmatpush1.msra.mxu0 0.0
  %1420 = vmatprep.subr.mxu0 0.0
  %1421 = vmatpush1.msra.mxu0 0.0
  %1422 = vmatprep.subr.mxu0 0.0
  %1423 = vmatpush1.msra.mxu0 0.0
  %1424 = vmatprep.subr.mxu0 0.0
  %1425 = vmatpush1.msra.mxu0 0.0
  %1426 = vmatprep.mubr.f32.mxu0 0.0
  %1427 = vmatmul.mubr.f32.gmra.mrb[0].mxu0 %v1360
  %v1428 = vpop.f32.mrb[0].mxu0
  %v1429 = vadd.f32 0.0, %v1428
  %v1430 = vpop.f32.mrb[0].mxu0
  %1431 = vdwg.mxu0
  %v1433 = vrot.slane %v1429, 4
  %v1435 = vadd.f32 %v285, %v1433
  %v1436 = vtanh.pop %v1435
  %v1437 = vxor.u32 %v1435, 2147483648
  %v1438 = vmul.f32 %v1437, 1.442695
  %v1439 = vpow.pop %v1438
  %v1440 = vadd.f32 %v1439, 1.0
  %v1441 = vrcp.pop %v1440
  %v1442 = vmul.f32 1.0, %v1441
  %v1443 = vsel %vm36, %v1436, %v1442
  %v1445 = vrot.slane %v1349, 6
  %v1447 = vmul.f32 %v1443, %v1445
  %1449 = vrot.lane.b32.xlu0 %v1443, 64
  %v1450 = vpop.permute.xlu0 %1449
  %v1452 = vmul.f32 %v1443, %v1450
  %1454 = vrot.lane.b32.xlu0 %v1452, 32
  %v1455 = vpop.permute.xlu0 %1454
  %v1457 = vadd.f32 %v1447, %v1455
  %v1458 = vtanh.pop %v1457
  %1460 = vrot.lane.b32.xlu0 %v1458, 64
  %v1461 = vpop.permute.xlu0 %1460
  %v1463 = vmul.f32 %v1443, %v1461
  %v1465 = vrot.slane %v1463, 4
  %1466 = vrot.lane.b32.xlu0 %v1465, 32
  %v1467 = vpop.permute.xlu0 %1466
  %v1468 = vsel %vm293, %v1467, 0
  %1470 = vmatprep.subr.mxu0 0.0
  %1471 = vmatpush1.msra.mxu0 %v181
  %1472 = vmatprep.subr.mxu0 0.0
  %1473 = vmatpush1.msra.mxu0 %v182
  %1474 = vmatprep.subr.mxu0 0.0
  %1475 = vmatpush1.msra.mxu0 %v183
  %1476 = vmatprep.subr.mxu0 0.0
  %1477 = vmatpush1.msra.mxu0 %v184
  %1478 = vmatprep.subr.mxu0 0.0
  %1479 = vmatpush1.msra.mxu0 0.0
  %1480 = vmatprep.subr.mxu0 0.0
  %1481 = vmatpush1.msra.mxu0 0.0
  %1482 = vmatprep.subr.mxu0 0.0
  %1483 = vmatpush1.msra.mxu0 0.0
  %1484 = vmatprep.subr.mxu0 0.0
  %1485 = vmatpush1.msra.mxu0 0.0
  %1486 = vmatprep.subr.mxu0 0.0
  %1487 = vmatpush1.msra.mxu0 0.0
  %1488 = vmatprep.subr.mxu0 0.0
  %1489 = vmatpush1.msra.mxu0 0.0
  %1490 = vmatprep.subr.mxu0 0.0
  %1491 = vmatpush1.msra.mxu0 0.0
  %1492 = vmatprep.subr.mxu0 0.0
  %1493 = vmatpush1.msra.mxu0 0.0
  %1494 = vmatprep.subr.mxu0 0.0
  %1495 = vmatpush1.msra.mxu0 0.0
  %1496 = vmatprep.subr.mxu0 0.0
  %1497 = vmatpush1.msra.mxu0 0.0
  %1498 = vmatprep.subr.mxu0 0.0
  %1499 = vmatpush1.msra.mxu0 0.0
  %1500 = vmatprep.subr.mxu0 0.0
  %1501 = vmatpush1.msra.mxu0 0.0
  %1502 = vmatprep.subr.mxu0 0.0
  %1503 = vmatpush1.msra.mxu0 0.0
  %1504 = vmatprep.subr.mxu0 0.0
  %1505 = vmatpush1.msra.mxu0 0.0
  %1506 = vmatprep.subr.mxu0 0.0
  %1507 = vmatpush1.msra.mxu0 0.0
  %1508 = vmatprep.subr.mxu0 0.0
  %1509 = vmatpush1.msra.mxu0 0.0
  %1510 = vmatprep.subr.mxu0 0.0
  %1511 = vmatpush1.msra.mxu0 0.0
  %1512 = vmatprep.subr.mxu0 0.0
  %1513 = vmatpush1.msra.mxu0 0.0
  %1514 = vmatprep.subr.mxu0 0.0
  %1515 = vmatpush1.msra.mxu0 0.0
  %1516 = vmatprep.subr.mxu0 0.0
  %1517 = vmatpush1.msra.mxu0 0.0
  %1518 = vmatprep.subr.mxu0 0.0
  %1519 = vmatpush1.msra.mxu0 0.0
  %1520 = vmatprep.subr.mxu0 0.0
  %1521 = vmatpush1.msra.mxu0 0.0
  %1522 = vmatprep.subr.mxu0 0.0
  %1523 = vmatpush1.msra.mxu0 0.0
  %1524 = vmatprep.subr.mxu0 0.0
  %1525 = vmatpush1.msra.mxu0 0.0
  %1526 = vmatprep.subr.mxu0 0.0
  %1527 = vmatpush1.msra.mxu0 0.0
  %1528 = vmatprep.subr.mxu0 0.0
  %1529 = vmatpush1.msra.mxu0 0.0
  %1530 = vmatprep.subr.mxu0 0.0
  %1531 = vmatpush1.msra.mxu0 0.0
  %1532 = vmatprep.subr.mxu0 0.0
  %1533 = vmatpush1.msra.mxu0 0.0
  %1534 = vmatprep.mubr.f32.mxu0 0.0
  %1535 = vmatmul.mubr.f32.gmra.mrb[0].mxu0 %v1468
  %v1536 = vpop.f32.mrb[0].mxu0
  %v1537 = vadd.f32 0.0, %v1536
  %v1538 = vpop.f32.mrb[0].mxu0
  %1539 = vdwg.mxu0
  %v1541 = vrot.slane %v1537, 2
  %v1543 = vadd.f32 %v285, %v1541
  %v1544 = vtanh.pop %v1543
  %v1545 = vxor.u32 %v1543, 2147483648
  %v1546 = vmul.f32 %v1545, 1.442695
  %v1547 = vpow.pop %v1546
  %v1548 = vadd.f32 %v1547, 1.0
  %v1549 = vrcp.pop %v1548
  %v1550 = vmul.f32 1.0, %v1549
  %v1551 = vsel %vm36, %v1544, %v1550
  %v1553 = vrot.slane %v1457, 6
  %v1555 = vmul.f32 %v1551, %v1553
  %1557 = vrot.lane.b32.xlu0 %v1551, 64
  %v1558 = vpop.permute.xlu0 %1557
  %v1560 = vmul.f32 %v1551, %v1558
  %1562 = vrot.lane.b32.xlu0 %v1560, 32
  %v1563 = vpop.permute.xlu0 %1562
  %v1565 = vadd.f32 %v1555, %v1563
  %v1566 = vtanh.pop %v1565
  %1568 = vrot.lane.b32.xlu0 %v1566, 64
  %v1569 = vpop.permute.xlu0 %1568
  %v1571 = vmul.f32 %v1551, %v1569
  %v1573 = vrot.slane %v1571, 6
  %1574 = vrot.lane.b32.xlu0 %v1573, 32
  %v1575 = vpop.permute.xlu0 %1574
  %v1576 = vsel %vm293, %v1575, 0
  %1578 = vmatprep.subr.mxu0 0.0
  %1579 = vmatpush1.msra.mxu0 %v181
  %1580 = vmatprep.subr.mxu0 0.0
  %1581 = vmatpush1.msra.mxu0 %v182
  %1582 = vmatprep.subr.mxu0 0.0
  %1583 = vmatpush1.msra.mxu0 %v183
  %1584 = vmatprep.subr.mxu0 0.0
  %1585 = vmatpush1.msra.mxu0 %v184
  %1586 = vmatprep.subr.mxu0 0.0
  %1587 = vmatpush1.msra.mxu0 0.0
  %1588 = vmatprep.subr.mxu0 0.0
  %1589 = vmatpush1.msra.mxu0 0.0
  %1590 = vmatprep.subr.mxu0 0.0
  %1591 = vmatpush1.msra.mxu0 0.0
  %1592 = vmatprep.subr.mxu0 0.0
  %1593 = vmatpush1.msra.mxu0 0.0
  %1594 = vmatprep.subr.mxu0 0.0
  %1595 = vmatpush1.msra.mxu0 0.0
  %1596 = vmatprep.subr.mxu0 0.0
  %1597 = vmatpush1.msra.mxu0 0.0
  %1598 = vmatprep.subr.mxu0 0.0
  %1599 = vmatpush1.msra.mxu0 0.0
  %1600 = vmatprep.subr.mxu0 0.0
  %1601 = vmatpush1.msra.mxu0 0.0
  %1602 = vmatprep.subr.mxu0 0.0
  %1603 = vmatpush1.msra.mxu0 0.0
  %1604 = vmatprep.subr.mxu0 0.0
  %1605 = vmatpush1.msra.mxu0 0.0
  %1606 = vmatprep.subr.mxu0 0.0
  %1607 = vmatpush1.msra.mxu0 0.0
  %1608 = vmatprep.subr.mxu0 0.0
  %1609 = vmatpush1.msra.mxu0 0.0
  %1610 = vmatprep.subr.mxu0 0.0
  %1611 = vmatpush1.msra.mxu0 0.0
  %1612 = vmatprep.subr.mxu0 0.0
  %1613 = vmatpush1.msra.mxu0 0.0
  %1614 = vmatprep.subr.mxu0 0.0
  %1615 = vmatpush1.msra.mxu0 0.0
  %1616 = vmatprep.subr.mxu0 0.0
  %1617 = vmatpush1.msra.mxu0 0.0
  %1618 = vmatprep.subr.mxu0 0.0
  %1619 = vmatpush1.msra.mxu0 0.0
  %1620 = vmatprep.subr.mxu0 0.0
  %1621 = vmatpush1.msra.mxu0 0.0
  %1622 = vmatprep.subr.mxu0 0.0
  %1623 = vmatpush1.msra.mxu0 0.0
  %1624 = vmatprep.subr.mxu0 0.0
  %1625 = vmatpush1.msra.mxu0 0.0
  %1626 = vmatprep.subr.mxu0 0.0
  %1627 = vmatpush1.msra.mxu0 0.0
  %1628 = vmatprep.subr.mxu0 0.0
  %1629 = vmatpush1.msra.mxu0 0.0
  %1630 = vmatprep.subr.mxu0 0.0
  %1631 = vmatpush1.msra.mxu0 0.0
  %1632 = vmatprep.subr.mxu0 0.0
  %1633 = vmatpush1.msra.mxu0 0.0
  %1634 = vmatprep.subr.mxu0 0.0
  %1635 = vmatpush1.msra.mxu0 0.0
  %1636 = vmatprep.subr.mxu0 0.0
  %1637 = vmatpush1.msra.mxu0 0.0
  %1638 = vmatprep.subr.mxu0 0.0
  %1639 = vmatpush1.msra.mxu0 0.0
  %1640 = vmatprep.subr.mxu0 0.0
  %1641 = vmatpush1.msra.mxu0 0.0
  %1642 = vmatprep.mubr.f32.mxu0 0.0
  %1643 = vmatmul.mubr.f32.gmra.mrb[0].mxu0 %v1576
  %v1644 = vpop.f32.mrb[0].mxu0
  %v1645 = vadd.f32 0.0, %v1644
  %v1646 = vpop.f32.mrb[0].mxu0
  %1647 = vdwg.mxu0
  %v1648 = vadd.f32 %v290, %v1645
  %v1649 = vtanh.pop %v1648
  %v1650 = vxor.u32 %v1648, 2147483648
  %v1651 = vmul.f32 %v1650, 1.442695
  %v1652 = vpow.pop %v1651
  %v1653 = vadd.f32 %v1652, 1.0
  %v1654 = vrcp.pop %v1653
  %v1655 = vmul.f32 1.0, %v1654
  %v1656 = vsel %vm36, %v1649, %v1655
  %v1658 = vrot.slane %v1565, 6
  %v1660 = vmul.f32 %v1656, %v1658
  %1662 = vrot.lane.b32.xlu0 %v1656, 64
  %v1663 = vpop.permute.xlu0 %1662
  %v1665 = vmul.f32 %v1656, %v1663
  %1667 = vrot.lane.b32.xlu0 %v1665, 32
  %v1668 = vpop.permute.xlu0 %1667
  %v1670 = vadd.f32 %v1660, %v1668
  %v1671 = vtanh.pop %v1670
  %1673 = vrot.lane.b32.xlu0 %v1671, 64
  %v1674 = vpop.permute.xlu0 %1673
  %v1676 = vmul.f32 %v1656, %v1674
  %1678 = vrot.lane.b32.xlu0 %v1676, 32
  %v1679 = vpop.permute.xlu0 %1678
  %v1680 = vsel %vm293, %v1679, 0
  %1682 = vmatprep.subr.mxu0 0.0
  %1683 = vmatpush1.msra.mxu0 %v181
  %1684 = vmatprep.subr.mxu0 0.0
  %1685 = vmatpush1.msra.mxu0 %v182
  %1686 = vmatprep.subr.mxu0 0.0
  %1687 = vmatpush1.msra.mxu0 %v183
  %1688 = vmatprep.subr.mxu0 0.0
  %1689 = vmatpush1.msra.mxu0 %v184
  %1690 = vmatprep.subr.mxu0 0.0
  %1691 = vmatpush1.msra.mxu0 0.0
  %1692 = vmatprep.subr.mxu0 0.0
  %1693 = vmatpush1.msra.mxu0 0.0
  %1694 = vmatprep.subr.mxu0 0.0
  %1695 = vmatpush1.msra.mxu0 0.0
  %1696 = vmatprep.subr.mxu0 0.0
  %1697 = vmatpush1.msra.mxu0 0.0
  %1698 = vmatprep.subr.mxu0 0.0
  %1699 = vmatpush1.msra.mxu0 0.0
  %1700 = vmatprep.subr.mxu0 0.0
  %1701 = vmatpush1.msra.mxu0 0.0
  %1702 = vmatprep.subr.mxu0 0.0
  %1703 = vmatpush1.msra.mxu0 0.0
  %1704 = vmatprep.subr.mxu0 0.0
  %1705 = vmatpush1.msra.mxu0 0.0
  %1706 = vmatprep.subr.mxu0 0.0
  %1707 = vmatpush1.msra.mxu0 0.0
  %1708 = vmatprep.subr.mxu0 0.0
  %1709 = vmatpush1.msra.mxu0 0.0
  %1710 = vmatprep.subr.mxu0 0.0
  %1711 = vmatpush1.msra.mxu0 0.0
  %1712 = vmatprep.subr.mxu0 0.0
  %1713 = vmatpush1.msra.mxu0 0.0
  %1714 = vmatprep.subr.mxu0 0.0
  %1715 = vmatpush1.msra.mxu0 0.0
  %1716 = vmatprep.subr.mxu0 0.0
  %1717 = vmatpush1.msra.mxu0 0.0
  %1718 = vmatprep.subr.mxu0 0.0
  %1719 = vmatpush1.msra.mxu0 0.0
  %1720 = vmatprep.subr.mxu0 0.0
  %1721 = vmatpush1.msra.mxu0 0.0
  %1722 = vmatprep.subr.mxu0 0.0
  %1723 = vmatpush1.msra.mxu0 0.0
  %1724 = vmatprep.subr.mxu0 0.0
  %1725 = vmatpush1.msra.mxu0 0.0
  %1726 = vmatprep.subr.mxu0 0.0
  %1727 = vmatpush1.msra.mxu0 0.0
  %1728 = vmatprep.subr.mxu0 0.0
  %1729 = vmatpush1.msra.mxu0 0.0
  %1730 = vmatprep.subr.mxu0 0.0
  %1731 = vmatpush1.msra.mxu0 0.0
  %1732 = vmatprep.subr.mxu0 0.0
  %1733 = vmatpush1.msra.mxu0 0.0
  %1734 = vmatprep.subr.mxu0 0.0
  %1735 = vmatpush1.msra.mxu0 0.0
  %1736 = vmatprep.subr.mxu0 0.0
  %1737 = vmatpush1.msra.mxu0 0.0
  %1738 = vmatprep.subr.mxu0 0.0
  %1739 = vmatpush1.msra.mxu0 0.0
  %1740 = vmatprep.subr.mxu0 0.0
  %1741 = vmatpush1.msra.mxu0 0.0
  %1742 = vmatprep.subr.mxu0 0.0
  %1743 = vmatpush1.msra.mxu0 0.0
  %1744 = vmatprep.subr.mxu0 0.0
  %1745 = vmatpush1.msra.mxu0 0.0
  %1746 = vmatprep.mubr.f32.mxu0 0.0
  %1747 = vmatmul.mubr.f32.gmra.mrb[0].mxu0 %v1680
  %v1748 = vpop.f32.mrb[0].mxu0
  %v1749 = vadd.f32 0.0, %v1748
  %v1750 = vpop.f32.mrb[0].mxu0
  %1751 = vdwg.mxu0
  %v1753 = vrot.slane %v1749, 6
  %v1755 = vadd.f32 %v290, %v1753
  %v1756 = vtanh.pop %v1755
  %v1757 = vxor.u32 %v1755, 2147483648
  %v1758 = vmul.f32 %v1757, 1.442695
  %v1759 = vpow.pop %v1758
  %v1760 = vadd.f32 %v1759, 1.0
  %v1761 = vrcp.pop %v1760
  %v1762 = vmul.f32 1.0, %v1761
  %v1763 = vsel %vm36, %v1756, %v1762
  %v1765 = vrot.slane %v1670, 6
  %v1767 = vmul.f32 %v1763, %v1765
  %1769 = vrot.lane.b32.xlu0 %v1763, 64
  %v1770 = vpop.permute.xlu0 %1769
  %v1772 = vmul.f32 %v1763, %v1770
  %1774 = vrot.lane.b32.xlu0 %v1772, 32
  %v1775 = vpop.permute.xlu0 %1774
  %v1777 = vadd.f32 %v1767, %v1775
  %v1778 = vtanh.pop %v1777
  %1780 = vrot.lane.b32.xlu0 %v1778, 64
  %v1781 = vpop.permute.xlu0 %1780
  %v1783 = vmul.f32 %v1763, %v1781
  %v1785 = vrot.slane %v1783, 2
  %1786 = vrot.lane.b32.xlu0 %v1785, 32
  %v1787 = vpop.permute.xlu0 %1786
  %v1788 = vsel %vm293, %v1787, 0
  %1790 = vmatprep.subr.mxu0 0.0
  %1791 = vmatpush1.msra.mxu0 %v181
  %1792 = vmatprep.subr.mxu0 0.0
  %1793 = vmatpush1.msra.mxu0 %v182
  %1794 = vmatprep.subr.mxu0 0.0
  %1795 = vmatpush1.msra.mxu0 %v183
  %1796 = vmatprep.subr.mxu0 0.0
  %1797 = vmatpush1.msra.mxu0 %v184
  %1798 = vmatprep.subr.mxu0 0.0
  %1799 = vmatpush1.msra.mxu0 0.0
  %1800 = vmatprep.subr.mxu0 0.0
  %1801 = vmatpush1.msra.mxu0 0.0
  %1802 = vmatprep.subr.mxu0 0.0
  %1803 = vmatpush1.msra.mxu0 0.0
  %1804 = vmatprep.subr.mxu0 0.0
  %1805 = vmatpush1.msra.mxu0 0.0
  %1806 = vmatprep.subr.mxu0 0.0
  %1807 = vmatpush1.msra.mxu0 0.0
  %1808 = vmatprep.subr.mxu0 0.0
  %1809 = vmatpush1.msra.mxu0 0.0
  %1810 = vmatprep.subr.mxu0 0.0
  %1811 = vmatpush1.msra.mxu0 0.0
  %1812 = vmatprep.subr.mxu0 0.0
  %1813 = vmatpush1.msra.mxu0 0.0
  %1814 = vmatprep.subr.mxu0 0.0
  %1815 = vmatpush1.msra.mxu0 0.0
  %1816 = vmatprep.subr.mxu0 0.0
  %1817 = vmatpush1.msra.mxu0 0.0
  %1818 = vmatprep.subr.mxu0 0.0
  %1819 = vmatpush1.msra.mxu0 0.0
  %1820 = vmatprep.subr.mxu0 0.0
  %1821 = vmatpush1.msra.mxu0 0.0
  %1822 = vmatprep.subr.mxu0 0.0
  %1823 = vmatpush1.msra.mxu0 0.0
  %1824 = vmatprep.subr.mxu0 0.0
  %1825 = vmatpush1.msra.mxu0 0.0
  %1826 = vmatprep.subr.mxu0 0.0
  %1827 = vmatpush1.msra.mxu0 0.0
  %1828 = vmatprep.subr.mxu0 0.0
  %1829 = vmatpush1.msra.mxu0 0.0
  %1830 = vmatprep.subr.mxu0 0.0
  %1831 = vmatpush1.msra.mxu0 0.0
  %1832 = vmatprep.subr.mxu0 0.0
  %1833 = vmatpush1.msra.mxu0 0.0
  %1834 = vmatprep.subr.mxu0 0.0
  %1835 = vmatpush1.msra.mxu0 0.0
  %1836 = vmatprep.subr.mxu0 0.0
  %1837 = vmatpush1.msra.mxu0 0.0
  %1838 = vmatprep.subr.mxu0 0.0
  %1839 = vmatpush1.msra.mxu0 0.0
  %1840 = vmatprep.subr.mxu0 0.0
  %1841 = vmatpush1.msra.mxu0 0.0
  %1842 = vmatprep.subr.mxu0 0.0
  %1843 = vmatpush1.msra.mxu0 0.0
  %1844 = vmatprep.subr.mxu0 0.0
  %1845 = vmatpush1.msra.mxu0 0.0
  %1846 = vmatprep.subr.mxu0 0.0
  %1847 = vmatpush1.msra.mxu0 0.0
  %1848 = vmatprep.subr.mxu0 0.0
  %1849 = vmatpush1.msra.mxu0 0.0
  %1850 = vmatprep.subr.mxu0 0.0
  %1851 = vmatpush1.msra.mxu0 0.0
  %1852 = vmatprep.subr.mxu0 0.0
  %1853 = vmatpush1.msra.mxu0 0.0
  %1854 = vmatprep.mubr.f32.mxu0 0.0
  %1855 = vmatmul.mubr.f32.gmra.mrb[0].mxu0 %v1788
  %v1856 = vpop.f32.mrb[0].mxu0
  %v1857 = vadd.f32 0.0, %v1856
  %v1858 = vpop.f32.mrb[0].mxu0
  %1859 = vdwg.mxu0
  %v1861 = vrot.slane %v1857, 4
  %v1863 = vadd.f32 %v290, %v1861
  %v1864 = vtanh.pop %v1863
  %v1865 = vxor.u32 %v1863, 2147483648
  %v1866 = vmul.f32 %v1865, 1.442695
  %v1867 = vpow.pop %v1866
  %v1868 = vadd.f32 %v1867, 1.0
  %v1869 = vrcp.pop %v1868
  %v1870 = vmul.f32 1.0, %v1869
  %v1871 = vsel %vm36, %v1864, %v1870
  %v1873 = vrot.slane %v1777, 6
  %v1875 = vmul.f32 %v1871, %v1873
  %1877 = vrot.lane.b32.xlu0 %v1871, 64
  %v1878 = vpop.permute.xlu0 %1877
  %v1880 = vmul.f32 %v1871, %v1878
  %1882 = vrot.lane.b32.xlu0 %v1880, 32
  %v1883 = vpop.permute.xlu0 %1882
  %v1885 = vadd.f32 %v1875, %v1883
  %v1886 = vtanh.pop %v1885
  %1888 = vrot.lane.b32.xlu0 %v1886, 64
  %v1889 = vpop.permute.xlu0 %1888
  %v1891 = vmul.f32 %v1871, %v1889
  %v1893 = vrot.slane %v1891, 4
  %1894 = vrot.lane.b32.xlu0 %v1893, 32
  %v1895 = vpop.permute.xlu0 %1894
  %v1896 = vsel %vm293, %v1895, 0
  %1898 = vmatprep.subr.mxu0 0.0
  %1899 = vmatpush1.msra.mxu0 %v181
  %1900 = vmatprep.subr.mxu0 0.0
  %1901 = vmatpush1.msra.mxu0 %v182
  %1902 = vmatprep.subr.mxu0 0.0
  %1903 = vmatpush1.msra.mxu0 %v183
  %1904 = vmatprep.subr.mxu0 0.0
  %1905 = vmatpush1.msra.mxu0 %v184
  %1906 = vmatprep.subr.mxu0 0.0
  %1907 = vmatpush1.msra.mxu0 0.0
  %1908 = vmatprep.subr.mxu0 0.0
  %1909 = vmatpush1.msra.mxu0 0.0
  %1910 = vmatprep.subr.mxu0 0.0
  %1911 = vmatpush1.msra.mxu0 0.0
  %1912 = vmatprep.subr.mxu0 0.0
  %1913 = vmatpush1.msra.mxu0 0.0
  %1914 = vmatprep.subr.mxu0 0.0
  %1915 = vmatpush1.msra.mxu0 0.0
  %1916 = vmatprep.subr.mxu0 0.0
  %1917 = vmatpush1.msra.mxu0 0.0
  %1918 = vmatprep.subr.mxu0 0.0
  %1919 = vmatpush1.msra.mxu0 0.0
  %1920 = vmatprep.subr.mxu0 0.0
  %1921 = vmatpush1.msra.mxu0 0.0
  %1922 = vmatprep.subr.mxu0 0.0
  %1923 = vmatpush1.msra.mxu0 0.0
  %1924 = vmatprep.subr.mxu0 0.0
  %1925 = vmatpush1.msra.mxu0 0.0
  %1926 = vmatprep.subr.mxu0 0.0
  %1927 = vmatpush1.msra.mxu0 0.0
  %1928 = vmatprep.subr.mxu0 0.0
  %1929 = vmatpush1.msra.mxu0 0.0
  %1930 = vmatprep.subr.mxu0 0.0
  %1931 = vmatpush1.msra.mxu0 0.0
  %1932 = vmatprep.subr.mxu0 0.0
  %1933 = vmatpush1.msra.mxu0 0.0
  %1934 = vmatprep.subr.mxu0 0.0
  %1935 = vmatpush1.msra.mxu0 0.0
  %1936 = vmatprep.subr.mxu0 0.0
  %1937 = vmatpush1.msra.mxu0 0.0
  %1938 = vmatprep.subr.mxu0 0.0
  %1939 = vmatpush1.msra.mxu0 0.0
  %1940 = vmatprep.subr.mxu0 0.0
  %1941 = vmatpush1.msra.mxu0 0.0
  %1942 = vmatprep.subr.mxu0 0.0
  %1943 = vmatpush1.msra.mxu0 0.0
  %1944 = vmatprep.subr.mxu0 0.0
  %1945 = vmatpush1.msra.mxu0 0.0
  %1946 = vmatprep.subr.mxu0 0.0
  %1947 = vmatpush1.msra.mxu0 0.0
  %1948 = vmatprep.subr.mxu0 0.0
  %1949 = vmatpush1.msra.mxu0 0.0
  %1950 = vmatprep.subr.mxu0 0.0
  %1951 = vmatpush1.msra.mxu0 0.0
  %1952 = vmatprep.subr.mxu0 0.0
  %1953 = vmatpush1.msra.mxu0 0.0
  %1954 = vmatprep.subr.mxu0 0.0
  %1955 = vmatpush1.msra.mxu0 0.0
  %1956 = vmatprep.subr.mxu0 0.0
  %1957 = vmatpush1.msra.mxu0 0.0
  %1958 = vmatprep.subr.mxu0 0.0
  %1959 = vmatpush1.msra.mxu0 0.0
  %1960 = vmatprep.subr.mxu0 0.0
  %1961 = vmatpush1.msra.mxu0 0.0
  %1962 = vmatprep.mubr.f32.mxu0 0.0
  %1963 = vmatmul.mubr.f32.gmra.mrb[0].mxu0 %v1896
  %v1964 = vpop.f32.mrb[0].mxu0
  %v1965 = vadd.f32 0.0, %v1964
  %v1966 = vpop.f32.mrb[0].mxu0
  %1967 = vdwg.mxu0
  %v1969 = vrot.slane %v1965, 2
  %v1971 = vadd.f32 %v290, %v1969
  %v1972 = vtanh.pop %v1971
  %v1973 = vxor.u32 %v1971, 2147483648
  %v1974 = vmul.f32 %v1973, 1.442695
  %v1975 = vpow.pop %v1974
  %v1976 = vadd.f32 %v1975, 1.0
  %v1977 = vrcp.pop %v1976
  %v1978 = vmul.f32 1.0, %v1977
  %v1979 = vsel %vm36, %v1972, %v1978
  %v1981 = vrot.slane %v1885, 6
  %v1983 = vmul.f32 %v1979, %v1981
  %1985 = vrot.lane.b32.xlu0 %v1979, 64
  %v1986 = vpop.permute.xlu0 %1985
  %v1988 = vmul.f32 %v1979, %v1986
  %1990 = vrot.lane.b32.xlu0 %v1988, 32
  %v1991 = vpop.permute.xlu0 %1990
  %v1993 = vadd.f32 %v1983, %v1991
  %v1994 = vtanh.pop %v1993
  %1996 = vrot.lane.b32.xlu0 %v1994, 64
  %v1997 = vpop.permute.xlu0 %1996
  %v1999 = vmul.f32 %v1979, %v1997
  %v2000 = vsel %vm165, %v392, %v499
  %v2001 = vsel %vm167, %v2000, %v607
  %v2002 = vsel %vm169, %v2001, %v715
  %v2003 = vsel %vm165, %v820, %v927
  %v2004 = vsel %vm167, %v2003, %v1035
  %v2005 = vsel %vm169, %v2004, %v1143
  %v2006 = vsel %vm165, %v1248, %v1355
  %v2007 = vsel %vm167, %v2006, %v1463
  %v2008 = vsel %vm169, %v2007, %v1571
  %v2009 = vsel %vm165, %v1676, %v1783
  %v2010 = vsel %vm167, %v2009, %v1891
  %v2011 = vsel %vm169, %v2010, %v1999
  %v2012 = vld [vmem:[%s4] sm:$0xff]
  %v2013 = vld [vmem:[%s4 + $0x8] sm:$0xff]
  %v2014 = vld [vmem:[%s4 + $0x10] sm:$0xff]
  %v2015 = vld [vmem:[%s4 + $0x18] sm:$0xff]
  %v2016 = vld [vmem:[%s5] sm:$0xff]
  %v2017 = vld [vmem:[%s5 + $0x8] sm:$0xff]
  %v2018 = vld [vmem:[%s5 + $0x10] sm:$0xff]
  %v2019 = vld [vmem:[%s5 + $0x18] sm:$0xff]
  %v2020 = vld [vmem:[%s6] sm:$0x1]
  %v2022 = vlaneseq
  %v2023 = vshrl.u32 %v2022, 7
  %v2024 = vsub.s32 0, %v2023
  %v2025 = vrot.slane %v2020, %v2024
  %2031 = vrot.lane.b32.xlu0 %v2002, 32
  %v2032 = vpop.permute.xlu0 %2031
  %2033 = vrot.lane.b32.xlu0 %v2005, 32
  %v2034 = vpop.permute.xlu0 %2033
  %2035 = vrot.lane.b32.xlu0 %v2008, 32
  %v2036 = vpop.permute.xlu0 %2035
  %2037 = vrot.lane.b32.xlu0 %v2011, 32
  %v2038 = vpop.permute.xlu0 %2037
  %v2039 = vsel %vm293, %v2032, 0
  %v2041 = vsel %vm293, %v2034, 0
  %v2043 = vsel %vm293, %v2036, 0
  %v2045 = vsel %vm293, %v2038, 0
  %2047 = vmatprep.subr.mxu0 0.0
  %2048 = vmatpush1.msra.mxu0 %v2012
  %2049 = vmatprep.subr.mxu0 0.0
  %2050 = vmatpush1.msra.mxu0 %v2013
  %2051 = vmatprep.subr.mxu0 0.0
  %2052 = vmatpush1.msra.mxu0 %v2014
  %2053 = vmatprep.subr.mxu0 0.0
  %2054 = vmatpush1.msra.mxu0 %v2015
  %2055 = vmatprep.subr.mxu0 0.0
  %2056 = vmatpush1.msra.mxu0 0.0
  %2057 = vmatprep.subr.mxu0 0.0
  %2058 = vmatpush1.msra.mxu0 0.0
  %2059 = vmatprep.subr.mxu0 0.0
  %2060 = vmatpush1.msra.mxu0 0.0
  %2061 = vmatprep.subr.mxu0 0.0
  %2062 = vmatpush1.msra.mxu0 0.0
  %2063 = vmatprep.subr.mxu0 0.0
  %2064 = vmatpush1.msra.mxu0 0.0
  %2065 = vmatprep.subr.mxu0 0.0
  %2066 = vmatpush1.msra.mxu0 0.0
  %2067 = vmatprep.subr.mxu0 0.0
  %2068 = vmatpush1.msra.mxu0 0.0
  %2069 = vmatprep.subr.mxu0 0.0
  %2070 = vmatpush1.msra.mxu0 0.0
  %2071 = vmatprep.subr.mxu0 0.0
  %2072 = vmatpush1.msra.mxu0 0.0
  %2073 = vmatprep.subr.mxu0 0.0
  %2074 = vmatpush1.msra.mxu0 0.0
  %2075 = vmatprep.subr.mxu0 0.0
  %2076 = vmatpush1.msra.mxu0 0.0
  %2077 = vmatprep.subr.mxu0 0.0
  %2078 = vmatpush1.msra.mxu0 0.0
  %2079 = vmatprep.subr.mxu0 0.0
  %2080 = vmatpush1.msra.mxu0 0.0
  %2081 = vmatprep.subr.mxu0 0.0
  %2082 = vmatpush1.msra.mxu0 0.0
  %2083 = vmatprep.subr.mxu0 0.0
  %2084 = vmatpush1.msra.mxu0 0.0
  %2085 = vmatprep.subr.mxu0 0.0
  %2086 = vmatpush1.msra.mxu0 0.0
  %2087 = vmatprep.subr.mxu0 0.0
  %2088 = vmatpush1.msra.mxu0 0.0
  %2089 = vmatprep.subr.mxu0 0.0
  %2090 = vmatpush1.msra.mxu0 0.0
  %2091 = vmatprep.subr.mxu0 0.0
  %2092 = vmatpush1.msra.mxu0 0.0
  %2093 = vmatprep.subr.mxu0 0.0
  %2094 = vmatpush1.msra.mxu0 0.0
  %2095 = vmatprep.subr.mxu0 0.0
  %2096 = vmatpush1.msra.mxu0 0.0
  %2097 = vmatprep.subr.mxu0 0.0
  %2098 = vmatpush1.msra.mxu0 0.0
  %2099 = vmatprep.subr.mxu0 0.0
  %2100 = vmatpush1.msra.mxu0 0.0
  %2101 = vmatprep.subr.mxu0 0.0
  %2102 = vmatpush1.msra.mxu0 0.0
  %2103 = vmatprep.subr.mxu0 0.0
  %2104 = vmatpush1.msra.mxu0 0.0
  %2105 = vmatprep.subr.mxu0 0.0
  %2106 = vmatpush1.msra.mxu0 0.0
  %2107 = vmatprep.subr.mxu0 0.0
  %2108 = vmatpush1.msra.mxu0 0.0
  %2109 = vmatprep.subr.mxu0 0.0
  %2110 = vmatpush1.msra.mxu0 0.0
  %2111 = vmatprep.mubr.f32.mxu0 0.0
  %2112 = vmatmul.mubr.f32.gmra.mrb[0].mxu0 %v2039
  %v2113 = vpop.f32.mrb[0].mxu0
  %v2114 = vadd.f32 %v2025, %v2113
  %v2115 = vpop.f32.mrb[0].mxu0
  %2116 = vmatprep.mubr.f32.mxu0 0.0
  %2117 = vmatmul.mubr.f32.gmra.mrb[0].mxu0 %v2041
  %v2118 = vpop.f32.mrb[0].mxu0
  %v2119 = vadd.f32 %v2025, %v2118
  %v2120 = vpop.f32.mrb[0].mxu0
  %2121 = vmatprep.mubr.f32.mxu0 0.0
  %2122 = vmatmul.mubr.f32.gmra.mrb[0].mxu0 %v2043
  %v2123 = vpop.f32.mrb[0].mxu0
  %v2124 = vadd.f32 %v2025, %v2123
  %v2125 = vpop.f32.mrb[0].mxu0
  %2126 = vmatprep.mubr.f32.mxu0 0.0
  %2127 = vmatmul.mubr.f32.gmra.mrb[0].mxu0 %v2045
  %v2128 = vpop.f32.mrb[0].mxu0
  %v2129 = vadd.f32 %v2025, %v2128
  %v2130 = vpop.f32.mrb[0].mxu0
  %2131 = vdwg.mxu0
  %2132 = vmatprep.subr.mxu0 0.0
  %2133 = vmatpush1.msra.mxu0 %v2016
  %2134 = vmatprep.subr.mxu0 0.0
  %2135 = vmatpush1.msra.mxu0 %v2017
  %2136 = vmatprep.subr.mxu0 0.0
  %2137 = vmatpush1.msra.mxu0 %v2018
  %2138 = vmatprep.subr.mxu0 0.0
  %2139 = vmatpush1.msra.mxu0 %v2019
  %2140 = vmatprep.subr.mxu0 0.0
  %2141 = vmatpush1.msra.mxu0 0.0
  %2142 = vmatprep.subr.mxu0 0.0
  %2143 = vmatpush1.msra.mxu0 0.0
  %2144 = vmatprep.subr.mxu0 0.0
  %2145 = vmatpush1.msra.mxu0 0.0
  %2146 = vmatprep.subr.mxu0 0.0
  %2147 = vmatpush1.msra.mxu0 0.0
  %2148 = vmatprep.subr.mxu0 0.0
  %2149 = vmatpush1.msra.mxu0 0.0
  %2150 = vmatprep.subr.mxu0 0.0
  %2151 = vmatpush1.msra.mxu0 0.0
  %2152 = vmatprep.subr.mxu0 0.0
  %2153 = vmatpush1.msra.mxu0 0.0
  %2154 = vmatprep.subr.mxu0 0.0
  %2155 = vmatpush1.msra.mxu0 0.0
  %2156 = vmatprep.subr.mxu0 0.0
  %2157 = vmatpush1.msra.mxu0 0.0
  %2158 = vmatprep.subr.mxu0 0.0
  %2159 = vmatpush1.msra.mxu0 0.0
  %2160 = vmatprep.subr.mxu0 0.0
  %2161 = vmatpush1.msra.mxu0 0.0
  %2162 = vmatprep.subr.mxu0 0.0
  %2163 = vmatpush1.msra.mxu0 0.0
  %2164 = vmatprep.subr.mxu0 0.0
  %2165 = vmatpush1.msra.mxu0 0.0
  %2166 = vmatprep.subr.mxu0 0.0
  %2167 = vmatpush1.msra.mxu0 0.0
  %2168 = vmatprep.subr.mxu0 0.0
  %2169 = vmatpush1.msra.mxu0 0.0
  %2170 = vmatprep.subr.mxu0 0.0
  %2171 = vmatpush1.msra.mxu0 0.0
  %2172 = vmatprep.subr.mxu0 0.0
  %2173 = vmatpush1.msra.mxu0 0.0
  %2174 = vmatprep.subr.mxu0 0.0
  %2175 = vmatpush1.msra.mxu0 0.0
  %2176 = vmatprep.subr.mxu0 0.0
  %2177 = vmatpush1.msra.mxu0 0.0
  %2178 = vmatprep.subr.mxu0 0.0
  %2179 = vmatpush1.msra.mxu0 0.0
  %2180 = vmatprep.subr.mxu0 0.0
  %2181 = vmatpush1.msra.mxu0 0.0
  %2182 = vmatprep.subr.mxu0 0.0
  %2183 = vmatpush1.msra.mxu0 0.0
  %2184 = vmatprep.subr.mxu0 0.0
  %2185 = vmatpush1.msra.mxu0 0.0
  %2186 = vmatprep.subr.mxu0 0.0
  %2187 = vmatpush1.msra.mxu0 0.0
  %2188 = vmatprep.subr.mxu0 0.0
  %2189 = vmatpush1.msra.mxu0 0.0
  %2190 = vmatprep.subr.mxu0 0.0
  %2191 = vmatpush1.msra.mxu0 0.0
  %2192 = vmatprep.subr.mxu0 0.0
  %2193 = vmatpush1.msra.mxu0 0.0
  %2194 = vmatprep.subr.mxu0 0.0
  %2195 = vmatpush1.msra.mxu0 0.0
  %2196 = vmatprep.mubr.f32.mxu0 0.0
  %2197 = vmatmul.mubr.f32.gmra.mrb[0].mxu0 %v295
  %v2198 = vpop.f32.mrb[0].mxu0
  %v2199 = vadd.f32 0.0, %v2198
  %v2200 = vpop.f32.mrb[0].mxu0
  %2201 = vdwg.mxu0
  %v2202 = vadd.f32 %v2114, %v2199
  %v2203 = vtanh.pop %v2202
  %v2204 = vxor.u32 %v2202, 2147483648
  %v2205 = vmul.f32 %v2204, 1.442695
  %v2206 = vpow.pop %v2205
  %v2207 = vadd.f32 %v2206, 1.0
  %v2208 = vrcp.pop %v2207
  %v2209 = vmul.f32 1.0, %v2208
  %v2210 = vsel %vm36, %v2203, %v2209
  %v2211 = vmul.f32 %v2210, 0.0
  %2213 = vrot.lane.b32.xlu0 %v2210, 64
  %v2214 = vpop.permute.xlu0 %2213
  %v2216 = vmul.f32 %v2210, %v2214
  %2218 = vrot.lane.b32.xlu0 %v2216, 32
  %v2219 = vpop.permute.xlu0 %2218
  %v2221 = vadd.f32 %v2211, %v2219
  %v2222 = vtanh.pop %v2221
  %2224 = vrot.lane.b32.xlu0 %v2222, 64
  %v2225 = vpop.permute.xlu0 %2224
  %v2227 = vmul.f32 %v2210, %v2225
  %2229 = vrot.lane.b32.xlu0 %v2227, 32
  %v2230 = vpop.permute.xlu0 %2229
  %v2231 = vsel %vm293, %v2230, 0
  %2233 = vmatprep.subr.mxu0 0.0
  %2234 = vmatpush1.msra.mxu0 %v2016
  %2235 = vmatprep.subr.mxu0 0.0
  %2236 = vmatpush1.msra.mxu0 %v2017
  %2237 = vmatprep.subr.mxu0 0.0
  %2238 = vmatpush1.msra.mxu0 %v2018
  %2239 = vmatprep.subr.mxu0 0.0
  %2240 = vmatpush1.msra.mxu0 %v2019
  %2241 = vmatprep.subr.mxu0 0.0
  %2242 = vmatpush1.msra.mxu0 0.0
  %2243 = vmatprep.subr.mxu0 0.0
  %2244 = vmatpush1.msra.mxu0 0.0
  %2245 = vmatprep.subr.mxu0 0.0
  %2246 = vmatpush1.msra.mxu0 0.0
  %2247 = vmatprep.subr.mxu0 0.0
  %2248 = vmatpush1.msra.mxu0 0.0
  %2249 = vmatprep.subr.mxu0 0.0
  %2250 = vmatpush1.msra.mxu0 0.0
  %2251 = vmatprep.subr.mxu0 0.0
  %2252 = vmatpush1.msra.mxu0 0.0
  %2253 = vmatprep.subr.mxu0 0.0
  %2254 = vmatpush1.msra.mxu0 0.0
  %2255 = vmatprep.subr.mxu0 0.0
  %2256 = vmatpush1.msra.mxu0 0.0
  %2257 = vmatprep.subr.mxu0 0.0
  %2258 = vmatpush1.msra.mxu0 0.0
  %2259 = vmatprep.subr.mxu0 0.0
  %2260 = vmatpush1.msra.mxu0 0.0
  %2261 = vmatprep.subr.mxu0 0.0
  %2262 = vmatpush1.msra.mxu0 0.0
  %2263 = vmatprep.subr.mxu0 0.0
  %2264 = vmatpush1.msra.mxu0 0.0
  %2265 = vmatprep.subr.mxu0 0.0
  %2266 = vmatpush1.msra.mxu0 0.0
  %2267 = vmatprep.subr.mxu0 0.0
  %2268 = vmatpush1.msra.mxu0 0.0
  %2269 = vmatprep.subr.mxu0 0.0
  %2270 = vmatpush1.msra.mxu0 0.0
  %2271 = vmatprep.subr.mxu0 0.0
  %2272 = vmatpush1.msra.mxu0 0.0
  %2273 = vmatprep.subr.mxu0 0.0
  %2274 = vmatpush1.msra.mxu0 0.0
  %2275 = vmatprep.subr.mxu0 0.0
  %2276 = vmatpush1.msra.mxu0 0.0
  %2277 = vmatprep.subr.mxu0 0.0
  %2278 = vmatpush1.msra.mxu0 0.0
  %2279 = vmatprep.subr.mxu0 0.0
  %2280 = vmatpush1.msra.mxu0 0.0
  %2281 = vmatprep.subr.mxu0 0.0
  %2282 = vmatpush1.msra.mxu0 0.0
  %2283 = vmatprep.subr.mxu0 0.0
  %2284 = vmatpush1.msra.mxu0 0.0
  %2285 = vmatprep.subr.mxu0 0.0
  %2286 = vmatpush1.msra.mxu0 0.0
  %2287 = vmatprep.subr.mxu0 0.0
  %2288 = vmatpush1.msra.mxu0 0.0
  %2289 = vmatprep.subr.mxu0 0.0
  %2290 = vmatpush1.msra.mxu0 0.0
  %2291 = vmatprep.subr.mxu0 0.0
  %2292 = vmatpush1.msra.mxu0 0.0
  %2293 = vmatprep.subr.mxu0 0.0
  %2294 = vmatpush1.msra.mxu0 0.0
  %2295 = vmatprep.subr.mxu0 0.0
  %2296 = vmatpush1.msra.mxu0 0.0
  %2297 = vmatprep.mubr.f32.mxu0 0.0
  %2298 = vmatmul.mubr.f32.gmra.mrb[0].mxu0 %v2231
  %v2299 = vpop.f32.mrb[0].mxu0
  %v2300 = vadd.f32 0.0, %v2299
  %v2301 = vpop.f32.mrb[0].mxu0
  %2302 = vdwg.mxu0
  %v2304 = vrot.slane %v2300, 6
  %v2306 = vadd.f32 %v2114, %v2304
  %v2307 = vtanh.pop %v2306
  %v2308 = vxor.u32 %v2306, 2147483648
  %v2309 = vmul.f32 %v2308, 1.442695
  %v2310 = vpow.pop %v2309
  %v2311 = vadd.f32 %v2310, 1.0
  %v2312 = vrcp.pop %v2311
  %v2313 = vmul.f32 1.0, %v2312
  %v2314 = vsel %vm36, %v2307, %v2313
  %v2316 = vrot.slane %v2221, 6
  %v2318 = vmul.f32 %v2314, %v2316
  %2320 = vrot.lane.b32.xlu0 %v2314, 64
  %v2321 = vpop.permute.xlu0 %2320
  %v2323 = vmul.f32 %v2314, %v2321
  %2325 = vrot.lane.b32.xlu0 %v2323, 32
  %v2326 = vpop.permute.xlu0 %2325
  %v2328 = vadd.f32 %v2318, %v2326
  %v2329 = vtanh.pop %v2328
  %2331 = vrot.lane.b32.xlu0 %v2329, 64
  %v2332 = vpop.permute.xlu0 %2331
  %v2334 = vmul.f32 %v2314, %v2332
  %v2336 = vrot.slane %v2334, 2
  %2337 = vrot.lane.b32.xlu0 %v2336, 32
  %v2338 = vpop.permute.xlu0 %2337
  %v2339 = vsel %vm293, %v2338, 0
  %2341 = vmatprep.subr.mxu0 0.0
  %2342 = vmatpush1.msra.mxu0 %v2016
  %2343 = vmatprep.subr.mxu0 0.0
  %2344 = vmatpush1.msra.mxu0 %v2017
  %2345 = vmatprep.subr.mxu0 0.0
  %2346 = vmatpush1.msra.mxu0 %v2018
  %2347 = vmatprep.subr.mxu0 0.0
  %2348 = vmatpush1.msra.mxu0 %v2019
  %2349 = vmatprep.subr.mxu0 0.0
  %2350 = vmatpush1.msra.mxu0 0.0
  %2351 = vmatprep.subr.mxu0 0.0
  %2352 = vmatpush1.msra.mxu0 0.0
  %2353 = vmatprep.subr.mxu0 0.0
  %2354 = vmatpush1.msra.mxu0 0.0
  %2355 = vmatprep.subr.mxu0 0.0
  %2356 = vmatpush1.msra.mxu0 0.0
  %2357 = vmatprep.subr.mxu0 0.0
  %2358 = vmatpush1.msra.mxu0 0.0
  %2359 = vmatprep.subr.mxu0 0.0
  %2360 = vmatpush1.msra.mxu0 0.0
  %2361 = vmatprep.subr.mxu0 0.0
  %2362 = vmatpush1.msra.mxu0 0.0
  %2363 = vmatprep.subr.mxu0 0.0
  %2364 = vmatpush1.msra.mxu0 0.0
  %2365 = vmatprep.subr.mxu0 0.0
  %2366 = vmatpush1.msra.mxu0 0.0
  %2367 = vmatprep.subr.mxu0 0.0
  %2368 = vmatpush1.msra.mxu0 0.0
  %2369 = vmatprep.subr.mxu0 0.0
  %2370 = vmatpush1.msra.mxu0 0.0
  %2371 = vmatprep.subr.mxu0 0.0
  %2372 = vmatpush1.msra.mxu0 0.0
  %2373 = vmatprep.subr.mxu0 0.0
  %2374 = vmatpush1.msra.mxu0 0.0
  %2375 = vmatprep.subr.mxu0 0.0
  %2376 = vmatpush1.msra.mxu0 0.0
  %2377 = vmatprep.subr.mxu0 0.0
  %2378 = vmatpush1.msra.mxu0 0.0
  %2379 = vmatprep.subr.mxu0 0.0
  %2380 = vmatpush1.msra.mxu0 0.0
  %2381 = vmatprep.subr.mxu0 0.0
  %2382 = vmatpush1.msra.mxu0 0.0
  %2383 = vmatprep.subr.mxu0 0.0
  %2384 = vmatpush1.msra.mxu0 0.0
  %2385 = vmatprep.subr.mxu0 0.0
  %2386 = vmatpush1.msra.mxu0 0.0
  %2387 = vmatprep.subr.mxu0 0.0
  %2388 = vmatpush1.msra.mxu0 0.0
  %2389 = vmatprep.subr.mxu0 0.0
  %2390 = vmatpush1.msra.mxu0 0.0
  %2391 = vmatprep.subr.mxu0 0.0
  %2392 = vmatpush1.msra.mxu0 0.0
  %2393 = vmatprep.subr.mxu0 0.0
  %2394 = vmatpush1.msra.mxu0 0.0
  %2395 = vmatprep.subr.mxu0 0.0
  %2396 = vmatpush1.msra.mxu0 0.0
  %2397 = vmatprep.subr.mxu0 0.0
  %2398 = vmatpush1.msra.mxu0 0.0
  %2399 = vmatprep.subr.mxu0 0.0
  %2400 = vmatpush1.msra.mxu0 0.0
  %2401 = vmatprep.subr.mxu0 0.0
  %2402 = vmatpush1.msra.mxu0 0.0
  %2403 = vmatprep.subr.mxu0 0.0
  %2404 = vmatpush1.msra.mxu0 0.0
  %2405 = vmatprep.mubr.f32.mxu0 0.0
  %2406 = vmatmul.mubr.f32.gmra.mrb[0].mxu0 %v2339
  %v2407 = vpop.f32.mrb[0].mxu0
  %v2408 = vadd.f32 0.0, %v2407
  %v2409 = vpop.f32.mrb[0].mxu0
  %2410 = vdwg.mxu0
  %v2412 = vrot.slane %v2408, 4
  %v2414 = vadd.f32 %v2114, %v2412
  %v2415 = vtanh.pop %v2414
  %v2416 = vxor.u32 %v2414, 2147483648
  %v2417 = vmul.f32 %v2416, 1.442695
  %v2418 = vpow.pop %v2417
  %v2419 = vadd.f32 %v2418, 1.0
  %v2420 = vrcp.pop %v2419
  %v2421 = vmul.f32 1.0, %v2420
  %v2422 = vsel %vm36, %v2415, %v2421
  %v2424 = vrot.slane %v2328, 6
  %v2426 = vmul.f32 %v2422, %v2424
  %2428 = vrot.lane.b32.xlu0 %v2422, 64
  %v2429 = vpop.permute.xlu0 %2428
  %v2431 = vmul.f32 %v2422, %v2429
  %2433 = vrot.lane.b32.xlu0 %v2431, 32
  %v2434 = vpop.permute.xlu0 %2433
  %v2436 = vadd.f32 %v2426, %v2434
  %v2437 = vtanh.pop %v2436
  %2439 = vrot.lane.b32.xlu0 %v2437, 64
  %v2440 = vpop.permute.xlu0 %2439
  %v2442 = vmul.f32 %v2422, %v2440
  %v2444 = vrot.slane %v2442, 4
  %2445 = vrot.lane.b32.xlu0 %v2444, 32
  %v2446 = vpop.permute.xlu0 %2445
  %v2447 = vsel %vm293, %v2446, 0
  %2449 = vmatprep.subr.mxu0 0.0
  %2450 = vmatpush1.msra.mxu0 %v2016
  %2451 = vmatprep.subr.mxu0 0.0
  %2452 = vmatpush1.msra.mxu0 %v2017
  %2453 = vmatprep.subr.mxu0 0.0
  %2454 = vmatpush1.msra.mxu0 %v2018
  %2455 = vmatprep.subr.mxu0 0.0
  %2456 = vmatpush1.msra.mxu0 %v2019
  %2457 = vmatprep.subr.mxu0 0.0
  %2458 = vmatpush1.msra.mxu0 0.0
  %2459 = vmatprep.subr.mxu0 0.0
  %2460 = vmatpush1.msra.mxu0 0.0
  %2461 = vmatprep.subr.mxu0 0.0
  %2462 = vmatpush1.msra.mxu0 0.0
  %2463 = vmatprep.subr.mxu0 0.0
  %2464 = vmatpush1.msra.mxu0 0.0
  %2465 = vmatprep.subr.mxu0 0.0
  %2466 = vmatpush1.msra.mxu0 0.0
  %2467 = vmatprep.subr.mxu0 0.0
  %2468 = vmatpush1.msra.mxu0 0.0
  %2469 = vmatprep.subr.mxu0 0.0
  %2470 = vmatpush1.msra.mxu0 0.0
  %2471 = vmatprep.subr.mxu0 0.0
  %2472 = vmatpush1.msra.mxu0 0.0
  %2473 = vmatprep.subr.mxu0 0.0
  %2474 = vmatpush1.msra.mxu0 0.0
  %2475 = vmatprep.subr.mxu0 0.0
  %2476 = vmatpush1.msra.mxu0 0.0
  %2477 = vmatprep.subr.mxu0 0.0
  %2478 = vmatpush1.msra.mxu0 0.0
  %2479 = vmatprep.subr.mxu0 0.0
  %2480 = vmatpush1.msra.mxu0 0.0
  %2481 = vmatprep.subr.mxu0 0.0
  %2482 = vmatpush1.msra.mxu0 0.0
  %2483 = vmatprep.subr.mxu0 0.0
  %2484 = vmatpush1.msra.mxu0 0.0
  %2485 = vmatprep.subr.mxu0 0.0
  %2486 = vmatpush1.msra.mxu0 0.0
  %2487 = vmatprep.subr.mxu0 0.0
  %2488 = vmatpush1.msra.mxu0 0.0
  %2489 = vmatprep.subr.mxu0 0.0
  %2490 = vmatpush1.msra.mxu0 0.0
  %2491 = vmatprep.subr.mxu0 0.0
  %2492 = vmatpush1.msra.mxu0 0.0
  %2493 = vmatprep.subr.mxu0 0.0
  %2494 = vmatpush1.msra.mxu0 0.0
  %2495 = vmatprep.subr.mxu0 0.0
  %2496 = vmatpush1.msra.mxu0 0.0
  %2497 = vmatprep.subr.mxu0 0.0
  %2498 = vmatpush1.msra.mxu0 0.0
  %2499 = vmatprep.subr.mxu0 0.0
  %2500 = vmatpush1.msra.mxu0 0.0
  %2501 = vmatprep.subr.mxu0 0.0
  %2502 = vmatpush1.msra.mxu0 0.0
  %2503 = vmatprep.subr.mxu0 0.0
  %2504 = vmatpush1.msra.mxu0 0.0
  %2505 = vmatprep.subr.mxu0 0.0
  %2506 = vmatpush1.msra.mxu0 0.0
  %2507 = vmatprep.subr.mxu0 0.0
  %2508 = vmatpush1.msra.mxu0 0.0
  %2509 = vmatprep.subr.mxu0 0.0
  %2510 = vmatpush1.msra.mxu0 0.0
  %2511 = vmatprep.subr.mxu0 0.0
  %2512 = vmatpush1.msra.mxu0 0.0
  %2513 = vmatprep.mubr.f32.mxu0 0.0
  %2514 = vmatmul.mubr.f32.gmra.mrb[0].mxu0 %v2447
  %v2515 = vpop.f32.mrb[0].mxu0
  %v2516 = vadd.f32 0.0, %v2515
  %v2517 = vpop.f32.mrb[0].mxu0
  %2518 = vdwg.mxu0
  %v2520 = vrot.slane %v2516, 2
  %v2522 = vadd.f32 %v2114, %v2520
  %v2523 = vtanh.pop %v2522
  %v2524 = vxor.u32 %v2522, 2147483648
  %v2525 = vmul.f32 %v2524, 1.442695
  %v2526 = vpow.pop %v2525
  %v2527 = vadd.f32 %v2526, 1.0
  %v2528 = vrcp.pop %v2527
  %v2529 = vmul.f32 1.0, %v2528
  %v2530 = vsel %vm36, %v2523, %v2529
  %v2532 = vrot.slane %v2436, 6
  %v2534 = vmul.f32 %v2530, %v2532
  %2536 = vrot.lane.b32.xlu0 %v2530, 64
  %v2537 = vpop.permute.xlu0 %2536
  %v2539 = vmul.f32 %v2530, %v2537
  %2541 = vrot.lane.b32.xlu0 %v2539, 32
  %v2542 = vpop.permute.xlu0 %2541
  %v2544 = vadd.f32 %v2534, %v2542
  %v2545 = vtanh.pop %v2544
  %2547 = vrot.lane.b32.xlu0 %v2545, 64
  %v2548 = vpop.permute.xlu0 %2547
  %v2550 = vmul.f32 %v2530, %v2548
  %v2552 = vrot.slane %v2550, 6
  %2553 = vrot.lane.b32.xlu0 %v2552, 32
  %v2554 = vpop.permute.xlu0 %2553
  %v2555 = vsel %vm293, %v2554, 0
  %2557 = vmatprep.subr.mxu0 0.0
  %2558 = vmatpush1.msra.mxu0 %v2016
  %2559 = vmatprep.subr.mxu0 0.0
  %2560 = vmatpush1.msra.mxu0 %v2017
  %2561 = vmatprep.subr.mxu0 0.0
  %2562 = vmatpush1.msra.mxu0 %v2018
  %2563 = vmatprep.subr.mxu0 0.0
  %2564 = vmatpush1.msra.mxu0 %v2019
  %2565 = vmatprep.subr.mxu0 0.0
  %2566 = vmatpush1.msra.mxu0 0.0
  %2567 = vmatprep.subr.mxu0 0.0
  %2568 = vmatpush1.msra.mxu0 0.0
  %2569 = vmatprep.subr.mxu0 0.0
  %2570 = vmatpush1.msra.mxu0 0.0
  %2571 = vmatprep.subr.mxu0 0.0
  %2572 = vmatpush1.msra.mxu0 0.0
  %2573 = vmatprep.subr.mxu0 0.0
  %2574 = vmatpush1.msra.mxu0 0.0
  %2575 = vmatprep.subr.mxu0 0.0
  %2576 = vmatpush1.msra.mxu0 0.0
  %2577 = vmatprep.subr.mxu0 0.0
  %2578 = vmatpush1.msra.mxu0 0.0
  %2579 = vmatprep.subr.mxu0 0.0
  %2580 = vmatpush1.msra.mxu0 0.0
  %2581 = vmatprep.subr.mxu0 0.0
  %2582 = vmatpush1.msra.mxu0 0.0
  %2583 = vmatprep.subr.mxu0 0.0
  %2584 = vmatpush1.msra.mxu0 0.0
  %2585 = vmatprep.subr.mxu0 0.0
  %2586 = vmatpush1.msra.mxu0 0.0
  %2587 = vmatprep.subr.mxu0 0.0
  %2588 = vmatpush1.msra.mxu0 0.0
  %2589 = vmatprep.subr.mxu0 0.0
  %2590 = vmatpush1.msra.mxu0 0.0
  %2591 = vmatprep.subr.mxu0 0.0
  %2592 = vmatpush1.msra.mxu0 0.0
  %2593 = vmatprep.subr.mxu0 0.0
  %2594 = vmatpush1.msra.mxu0 0.0
  %2595 = vmatprep.subr.mxu0 0.0
  %2596 = vmatpush1.msra.mxu0 0.0
  %2597 = vmatprep.subr.mxu0 0.0
  %2598 = vmatpush1.msra.mxu0 0.0
  %2599 = vmatprep.subr.mxu0 0.0
  %2600 = vmatpush1.msra.mxu0 0.0
  %2601 = vmatprep.subr.mxu0 0.0
  %2602 = vmatpush1.msra.mxu0 0.0
  %2603 = vmatprep.subr.mxu0 0.0
  %2604 = vmatpush1.msra.mxu0 0.0
  %2605 = vmatprep.subr.mxu0 0.0
  %2606 = vmatpush1.msra.mxu0 0.0
  %2607 = vmatprep.subr.mxu0 0.0
  %2608 = vmatpush1.msra.mxu0 0.0
  %2609 = vmatprep.subr.mxu0 0.0
  %2610 = vmatpush1.msra.mxu0 0.0
  %2611 = vmatprep.subr.mxu0 0.0
  %2612 = vmatpush1.msra.mxu0 0.0
  %2613 = vmatprep.subr.mxu0 0.0
  %2614 = vmatpush1.msra.mxu0 0.0
  %2615 = vmatprep.subr.mxu0 0.0
  %2616 = vmatpush1.msra.mxu0 0.0
  %2617 = vmatprep.subr.mxu0 0.0
  %2618 = vmatpush1.msra.mxu0 0.0
  %2619 = vmatprep.subr.mxu0 0.0
  %2620 = vmatpush1.msra.mxu0 0.0
  %2621 = vmatprep.mubr.f32.mxu0 0.0
  %2622 = vmatmul.mubr.f32.gmra.mrb[0].mxu0 %v2555
  %v2623 = vpop.f32.mrb[0].mxu0
  %v2624 = vadd.f32 0.0, %v2623
  %v2625 = vpop.f32.mrb[0].mxu0
  %2626 = vdwg.mxu0
  %v2627 = vadd.f32 %v2119, %v2624
  %v2628 = vtanh.pop %v2627
  %v2629 = vxor.u32 %v2627, 2147483648
  %v2630 = vmul.f32 %v2629, 1.442695
  %v2631 = vpow.pop %v2630
  %v2632 = vadd.f32 %v2631, 1.0
  %v2633 = vrcp.pop %v2632
  %v2634 = vmul.f32 1.0, %v2633
  %v2635 = vsel %vm36, %v2628, %v2634
  %v2637 = vrot.slane %v2544, 6
  %v2639 = vmul.f32 %v2635, %v2637
  %2641 = vrot.lane.b32.xlu0 %v2635, 64
  %v2642 = vpop.permute.xlu0 %2641
  %v2644 = vmul.f32 %v2635, %v2642
  %2646 = vrot.lane.b32.xlu0 %v2644, 32
  %v2647 = vpop.permute.xlu0 %2646
  %v2649 = vadd.f32 %v2639, %v2647
  %v2650 = vtanh.pop %v2649
  %2652 = vrot.lane.b32.xlu0 %v2650, 64
  %v2653 = vpop.permute.xlu0 %2652
  %v2655 = vmul.f32 %v2635, %v2653
  %2657 = vrot.lane.b32.xlu0 %v2655, 32
  %v2658 = vpop.permute.xlu0 %2657
  %v2659 = vsel %vm293, %v2658, 0
  %2661 = vmatprep.subr.mxu0 0.0
  %2662 = vmatpush1.msra.mxu0 %v2016
  %2663 = vmatprep.subr.mxu0 0.0
  %2664 = vmatpush1.msra.mxu0 %v2017
  %2665 = vmatprep.subr.mxu0 0.0
  %2666 = vmatpush1.msra.mxu0 %v2018
  %2667 = vmatprep.subr.mxu0 0.0
  %2668 = vmatpush1.msra.mxu0 %v2019
  %2669 = vmatprep.subr.mxu0 0.0
  %2670 = vmatpush1.msra.mxu0 0.0
  %2671 = vmatprep.subr.mxu0 0.0
  %2672 = vmatpush1.msra.mxu0 0.0
  %2673 = vmatprep.subr.mxu0 0.0
  %2674 = vmatpush1.msra.mxu0 0.0
  %2675 = vmatprep.subr.mxu0 0.0
  %2676 = vmatpush1.msra.mxu0 0.0
  %2677 = vmatprep.subr.mxu0 0.0
  %2678 = vmatpush1.msra.mxu0 0.0
  %2679 = vmatprep.subr.mxu0 0.0
  %2680 = vmatpush1.msra.mxu0 0.0
  %2681 = vmatprep.subr.mxu0 0.0
  %2682 = vmatpush1.msra.mxu0 0.0
  %2683 = vmatprep.subr.mxu0 0.0
  %2684 = vmatpush1.msra.mxu0 0.0
  %2685 = vmatprep.subr.mxu0 0.0
  %2686 = vmatpush1.msra.mxu0 0.0
  %2687 = vmatprep.subr.mxu0 0.0
  %2688 = vmatpush1.msra.mxu0 0.0
  %2689 = vmatprep.subr.mxu0 0.0
  %2690 = vmatpush1.msra.mxu0 0.0
  %2691 = vmatprep.subr.mxu0 0.0
  %2692 = vmatpush1.msra.mxu0 0.0
  %2693 = vmatprep.subr.mxu0 0.0
  %2694 = vmatpush1.msra.mxu0 0.0
  %2695 = vmatprep.subr.mxu0 0.0
  %2696 = vmatpush1.msra.mxu0 0.0
  %2697 = vmatprep.subr.mxu0 0.0
  %2698 = vmatpush1.msra.mxu0 0.0
  %2699 = vmatprep.subr.mxu0 0.0
  %2700 = vmatpush1.msra.mxu0 0.0
  %2701 = vmatprep.subr.mxu0 0.0
  %2702 = vmatpush1.msra.mxu0 0.0
  %2703 = vmatprep.subr.mxu0 0.0
  %2704 = vmatpush1.msra.mxu0 0.0
  %2705 = vmatprep.subr.mxu0 0.0
  %2706 = vmatpush1.msra.mxu0 0.0
  %2707 = vmatprep.subr.mxu0 0.0
  %2708 = vmatpush1.msra.mxu0 0.0
  %2709 = vmatprep.subr.mxu0 0.0
  %2710 = vmatpush1.msra.mxu0 0.0
  %2711 = vmatprep.subr.mxu0 0.0
  %2712 = vmatpush1.msra.mxu0 0.0
  %2713 = vmatprep.subr.mxu0 0.0
  %2714 = vmatpush1.msra.mxu0 0.0
  %2715 = vmatprep.subr.mxu0 0.0
  %2716 = vmatpush1.msra.mxu0 0.0
  %2717 = vmatprep.subr.mxu0 0.0
  %2718 = vmatpush1.msra.mxu0 0.0
  %2719 = vmatprep.subr.mxu0 0.0
  %2720 = vmatpush1.msra.mxu0 0.0
  %2721 = vmatprep.subr.mxu0 0.0
  %2722 = vmatpush1.msra.mxu0 0.0
  %2723 = vmatprep.subr.mxu0 0.0
  %2724 = vmatpush1.msra.mxu0 0.0
  %2725 = vmatprep.mubr.f32.mxu0 0.0
  %2726 = vmatmul.mubr.f32.gmra.mrb[0].mxu0 %v2659
  %v2727 = vpop.f32.mrb[0].mxu0
  %v2728 = vadd.f32 0.0, %v2727
  %v2729 = vpop.f32.mrb[0].mxu0
  %2730 = vdwg.mxu0
  %v2732 = vrot.slane %v2728, 6
  %v2734 = vadd.f32 %v2119, %v2732
  %v2735 = vtanh.pop %v2734
  %v2736 = vxor.u32 %v2734, 2147483648
  %v2737 = vmul.f32 %v2736, 1.442695
  %v2738 = vpow.pop %v2737
  %v2739 = vadd.f32 %v2738, 1.0
  %v2740 = vrcp.pop %v2739
  %v2741 = vmul.f32 1.0, %v2740
  %v2742 = vsel %vm36, %v2735, %v2741
  %v2744 = vrot.slane %v2649, 6
  %v2746 = vmul.f32 %v2742, %v2744
  %2748 = vrot.lane.b32.xlu0 %v2742, 64
  %v2749 = vpop.permute.xlu0 %2748
  %v2751 = vmul.f32 %v2742, %v2749
  %2753 = vrot.lane.b32.xlu0 %v2751, 32
  %v2754 = vpop.permute.xlu0 %2753
  %v2756 = vadd.f32 %v2746, %v2754
  %v2757 = vtanh.pop %v2756
  %2759 = vrot.lane.b32.xlu0 %v2757, 64
  %v2760 = vpop.permute.xlu0 %2759
  %v2762 = vmul.f32 %v2742, %v2760
  %v2764 = vrot.slane %v2762, 2
  %2765 = vrot.lane.b32.xlu0 %v2764, 32
  %v2766 = vpop.permute.xlu0 %2765
  %v2767 = vsel %vm293, %v2766, 0
  %2769 = vmatprep.subr.mxu0 0.0
  %2770 = vmatpush1.msra.mxu0 %v2016
  %2771 = vmatprep.subr.mxu0 0.0
  %2772 = vmatpush1.msra.mxu0 %v2017
  %2773 = vmatprep.subr.mxu0 0.0
  %2774 = vmatpush1.msra.mxu0 %v2018
  %2775 = vmatprep.subr.mxu0 0.0
  %2776 = vmatpush1.msra.mxu0 %v2019
  %2777 = vmatprep.subr.mxu0 0.0
  %2778 = vmatpush1.msra.mxu0 0.0
  %2779 = vmatprep.subr.mxu0 0.0
  %2780 = vmatpush1.msra.mxu0 0.0
  %2781 = vmatprep.subr.mxu0 0.0
  %2782 = vmatpush1.msra.mxu0 0.0
  %2783 = vmatprep.subr.mxu0 0.0
  %2784 = vmatpush1.msra.mxu0 0.0
  %2785 = vmatprep.subr.mxu0 0.0
  %2786 = vmatpush1.msra.mxu0 0.0
  %2787 = vmatprep.subr.mxu0 0.0
  %2788 = vmatpush1.msra.mxu0 0.0
  %2789 = vmatprep.subr.mxu0 0.0
  %2790 = vmatpush1.msra.mxu0 0.0
  %2791 = vmatprep.subr.mxu0 0.0
  %2792 = vmatpush1.msra.mxu0 0.0
  %2793 = vmatprep.subr.mxu0 0.0
  %2794 = vmatpush1.msra.mxu0 0.0
  %2795 = vmatprep.subr.mxu0 0.0
  %2796 = vmatpush1.msra.mxu0 0.0
  %2797 = vmatprep.subr.mxu0 0.0
  %2798 = vmatpush1.msra.mxu0 0.0
  %2799 = vmatprep.subr.mxu0 0.0
  %2800 = vmatpush1.msra.mxu0 0.0
  %2801 = vmatprep.subr.mxu0 0.0
  %2802 = vmatpush1.msra.mxu0 0.0
  %2803 = vmatprep.subr.mxu0 0.0
  %2804 = vmatpush1.msra.mxu0 0.0
  %2805 = vmatprep.subr.mxu0 0.0
  %2806 = vmatpush1.msra.mxu0 0.0
  %2807 = vmatprep.subr.mxu0 0.0
  %2808 = vmatpush1.msra.mxu0 0.0
  %2809 = vmatprep.subr.mxu0 0.0
  %2810 = vmatpush1.msra.mxu0 0.0
  %2811 = vmatprep.subr.mxu0 0.0
  %2812 = vmatpush1.msra.mxu0 0.0
  %2813 = vmatprep.subr.mxu0 0.0
  %2814 = vmatpush1.msra.mxu0 0.0
  %2815 = vmatprep.subr.mxu0 0.0
  %2816 = vmatpush1.msra.mxu0 0.0
  %2817 = vmatprep.subr.mxu0 0.0
  %2818 = vmatpush1.msra.mxu0 0.0
  %2819 = vmatprep.subr.mxu0 0.0
  %2820 = vmatpush1.msra.mxu0 0.0
  %2821 = vmatprep.subr.mxu0 0.0
  %2822 = vmatpush1.msra.mxu0 0.0
  %2823 = vmatprep.subr.mxu0 0.0
  %2824 = vmatpush1.msra.mxu0 0.0
  %2825 = vmatprep.subr.mxu0 0.0
  %2826 = vmatpush1.msra.mxu0 0.0
  %2827 = vmatprep.subr.mxu0 0.0
  %2828 = vmatpush1.msra.mxu0 0.0
  %2829 = vmatprep.subr.mxu0 0.0
  %2830 = vmatpush1.msra.mxu0 0.0
  %2831 = vmatprep.subr.mxu0 0.0
  %2832 = vmatpush1.msra.mxu0 0.0
  %2833 = vmatprep.mubr.f32.mxu0 0.0
  %2834 = vmatmul.mubr.f32.gmra.mrb[0].mxu0 %v2767
  %v2835 = vpop.f32.mrb[0].mxu0
  %v2836 = vadd.f32 0.0, %v2835
  %v2837 = vpop.f32.mrb[0].mxu0
  %2838 = vdwg.mxu0
  %v2840 = vrot.slane %v2836, 4
  %v2842 = vadd.f32 %v2119, %v2840
  %v2843 = vtanh.pop %v2842
  %v2844 = vxor.u32 %v2842, 2147483648
  %v2845 = vmul.f32 %v2844, 1.442695
  %v2846 = vpow.pop %v2845
  %v2847 = vadd.f32 %v2846, 1.0
  %v2848 = vrcp.pop %v2847
  %v2849 = vmul.f32 1.0, %v2848
  %v2850 = vsel %vm36, %v2843, %v2849
  %v2852 = vrot.slane %v2756, 6
  %v2854 = vmul.f32 %v2850, %v2852
  %2856 = vrot.lane.b32.xlu0 %v2850, 64
  %v2857 = vpop.permute.xlu0 %2856
  %v2859 = vmul.f32 %v2850, %v2857
  %2861 = vrot.lane.b32.xlu0 %v2859, 32
  %v2862 = vpop.permute.xlu0 %2861
  %v2864 = vadd.f32 %v2854, %v2862
  %v2865 = vtanh.pop %v2864
  %2867 = vrot.lane.b32.xlu0 %v2865, 64
  %v2868 = vpop.permute.xlu0 %2867
  %v2870 = vmul.f32 %v2850, %v2868
  %v2872 = vrot.slane %v2870, 4
  %2873 = vrot.lane.b32.xlu0 %v2872, 32
  %v2874 = vpop.permute.xlu0 %2873
  %v2875 = vsel %vm293, %v2874, 0
  %2877 = vmatprep.subr.mxu0 0.0
  %2878 = vmatpush1.msra.mxu0 %v2016
  %2879 = vmatprep.subr.mxu0 0.0
  %2880 = vmatpush1.msra.mxu0 %v2017
  %2881 = vmatprep.subr.mxu0 0.0
  %2882 = vmatpush1.msra.mxu0 %v2018
  %2883 = vmatprep.subr.mxu0 0.0
  %2884 = vmatpush1.msra.mxu0 %v2019
  %2885 = vmatprep.subr.mxu0 0.0
  %2886 = vmatpush1.msra.mxu0 0.0
  %2887 = vmatprep.subr.mxu0 0.0
  %2888 = vmatpush1.msra.mxu0 0.0
  %2889 = vmatprep.subr.mxu0 0.0
  %2890 = vmatpush1.msra.mxu0 0.0
  %2891 = vmatprep.subr.mxu0 0.0
  %2892 = vmatpush1.msra.mxu0 0.0
  %2893 = vmatprep.subr.mxu0 0.0
  %2894 = vmatpush1.msra.mxu0 0.0
  %2895 = vmatprep.subr.mxu0 0.0
  %2896 = vmatpush1.msra.mxu0 0.0
  %2897 = vmatprep.subr.mxu0 0.0
  %2898 = vmatpush1.msra.mxu0 0.0
  %2899 = vmatprep.subr.mxu0 0.0
  %2900 = vmatpush1.msra.mxu0 0.0
  %2901 = vmatprep.subr.mxu0 0.0
  %2902 = vmatpush1.msra.mxu0 0.0
  %2903 = vmatprep.subr.mxu0 0.0
  %2904 = vmatpush1.msra.mxu0 0.0
  %2905 = vmatprep.subr.mxu0 0.0
  %2906 = vmatpush1.msra.mxu0 0.0
  %2907 = vmatprep.subr.mxu0 0.0
  %2908 = vmatpush1.msra.mxu0 0.0
  %2909 = vmatprep.subr.mxu0 0.0
  %2910 = vmatpush1.msra.mxu0 0.0
  %2911 = vmatprep.subr.mxu0 0.0
  %2912 = vmatpush1.msra.mxu0 0.0
  %2913 = vmatprep.subr.mxu0 0.0
  %2914 = vmatpush1.msra.mxu0 0.0
  %2915 = vmatprep.subr.mxu0 0.0
  %2916 = vmatpush1.msra.mxu0 0.0
  %2917 = vmatprep.subr.mxu0 0.0
  %2918 = vmatpush1.msra.mxu0 0.0
  %2919 = vmatprep.subr.mxu0 0.0
  %2920 = vmatpush1.msra.mxu0 0.0
  %2921 = vmatprep.subr.mxu0 0.0
  %2922 = vmatpush1.msra.mxu0 0.0
  %2923 = vmatprep.subr.mxu0 0.0
  %2924 = vmatpush1.msra.mxu0 0.0
  %2925 = vmatprep.subr.mxu0 0.0
  %2926 = vmatpush1.msra.mxu0 0.0
  %2927 = vmatprep.subr.mxu0 0.0
  %2928 = vmatpush1.msra.mxu0 0.0
  %2929 = vmatprep.subr.mxu0 0.0
  %2930 = vmatpush1.msra.mxu0 0.0
  %2931 = vmatprep.subr.mxu0 0.0
  %2932 = vmatpush1.msra.mxu0 0.0
  %2933 = vmatprep.subr.mxu0 0.0
  %2934 = vmatpush1.msra.mxu0 0.0
  %2935 = vmatprep.subr.mxu0 0.0
  %2936 = vmatpush1.msra.mxu0 0.0
  %2937 = vmatprep.subr.mxu0 0.0
  %2938 = vmatpush1.msra.mxu0 0.0
  %2939 = vmatprep.subr.mxu0 0.0
  %2940 = vmatpush1.msra.mxu0 0.0
  %2941 = vmatprep.mubr.f32.mxu0 0.0
  %2942 = vmatmul.mubr.f32.gmra.mrb[0].mxu0 %v2875
  %v2943 = vpop.f32.mrb[0].mxu0
  %v2944 = vadd.f32 0.0, %v2943
  %v2945 = vpop.f32.mrb[0].mxu0
  %2946 = vdwg.mxu0
  %v2948 = vrot.slane %v2944, 2
  %v2950 = vadd.f32 %v2119, %v2948
  %v2951 = vtanh.pop %v2950
  %v2952 = vxor.u32 %v2950, 2147483648
  %v2953 = vmul.f32 %v2952, 1.442695
  %v2954 = vpow.pop %v2953
  %v2955 = vadd.f32 %v2954, 1.0
  %v2956 = vrcp.pop %v2955
  %v2957 = vmul.f32 1.0, %v2956
  %v2958 = vsel %vm36, %v2951, %v2957
  %v2960 = vrot.slane %v2864, 6
  %v2962 = vmul.f32 %v2958, %v2960
  %2964 = vrot.lane.b32.xlu0 %v2958, 64
  %v2965 = vpop.permute.xlu0 %2964
  %v2967 = vmul.f32 %v2958, %v2965
  %2969 = vrot.lane.b32.xlu0 %v2967, 32
  %v2970 = vpop.permute.xlu0 %2969
  %v2972 = vadd.f32 %v2962, %v2970
  %v2973 = vtanh.pop %v2972
  %2975 = vrot.lane.b32.xlu0 %v2973, 64
  %v2976 = vpop.permute.xlu0 %2975
  %v2978 = vmul.f32 %v2958, %v2976
  %v2980 = vrot.slane %v2978, 6
  %2981 = vrot.lane.b32.xlu0 %v2980, 32
  %v2982 = vpop.permute.xlu0 %2981
  %v2983 = vsel %vm293, %v2982, 0
  %2985 = vmatprep.subr.mxu0 0.0
  %2986 = vmatpush1.msra.mxu0 %v2016
  %2987 = vmatprep.subr.mxu0 0.0
  %2988 = vmatpush1.msra.mxu0 %v2017
  %2989 = vmatprep.subr.mxu0 0.0
  %2990 = vmatpush1.msra.mxu0 %v2018
  %2991 = vmatprep.subr.mxu0 0.0
  %2992 = vmatpush1.msra.mxu0 %v2019
  %2993 = vmatprep.subr.mxu0 0.0
  %2994 = vmatpush1.msra.mxu0 0.0
  %2995 = vmatprep.subr.mxu0 0.0
  %2996 = vmatpush1.msra.mxu0 0.0
  %2997 = vmatprep.subr.mxu0 0.0
  %2998 = vmatpush1.msra.mxu0 0.0
  %2999 = vmatprep.subr.mxu0 0.0
  %3000 = vmatpush1.msra.mxu0 0.0
  %3001 = vmatprep.subr.mxu0 0.0
  %3002 = vmatpush1.msra.mxu0 0.0
  %3003 = vmatprep.subr.mxu0 0.0
  %3004 = vmatpush1.msra.mxu0 0.0
  %3005 = vmatprep.subr.mxu0 0.0
  %3006 = vmatpush1.msra.mxu0 0.0
  %3007 = vmatprep.subr.mxu0 0.0
  %3008 = vmatpush1.msra.mxu0 0.0
  %3009 = vmatprep.subr.mxu0 0.0
  %3010 = vmatpush1.msra.mxu0 0.0
  %3011 = vmatprep.subr.mxu0 0.0
  %3012 = vmatpush1.msra.mxu0 0.0
  %3013 = vmatprep.subr.mxu0 0.0
  %3014 = vmatpush1.msra.mxu0 0.0
  %3015 = vmatprep.subr.mxu0 0.0
  %3016 = vmatpush1.msra.mxu0 0.0
  %3017 = vmatprep.subr.mxu0 0.0
  %3018 = vmatpush1.msra.mxu0 0.0
  %3019 = vmatprep.subr.mxu0 0.0
  %3020 = vmatpush1.msra.mxu0 0.0
  %3021 = vmatprep.subr.mxu0 0.0
  %3022 = vmatpush1.msra.mxu0 0.0
  %3023 = vmatprep.subr.mxu0 0.0
  %3024 = vmatpush1.msra.mxu0 0.0
  %3025 = vmatprep.subr.mxu0 0.0
  %3026 = vmatpush1.msra.mxu0 0.0
  %3027 = vmatprep.subr.mxu0 0.0
  %3028 = vmatpush1.msra.mxu0 0.0
  %3029 = vmatprep.subr.mxu0 0.0
  %3030 = vmatpush1.msra.mxu0 0.0
  %3031 = vmatprep.subr.mxu0 0.0
  %3032 = vmatpush1.msra.mxu0 0.0
  %3033 = vmatprep.subr.mxu0 0.0
  %3034 = vmatpush1.msra.mxu0 0.0
  %3035 = vmatprep.subr.mxu0 0.0
  %3036 = vmatpush1.msra.mxu0 0.0
  %3037 = vmatprep.subr.mxu0 0.0
  %3038 = vmatpush1.msra.mxu0 0.0
  %3039 = vmatprep.subr.mxu0 0.0
  %3040 = vmatpush1.msra.mxu0 0.0
  %3041 = vmatprep.subr.mxu0 0.0
  %3042 = vmatpush1.msra.mxu0 0.0
  %3043 = vmatprep.subr.mxu0 0.0
  %3044 = vmatpush1.msra.mxu0 0.0
  %3045 = vmatprep.subr.mxu0 0.0
  %3046 = vmatpush1.msra.mxu0 0.0
  %3047 = vmatprep.subr.mxu0 0.0
  %3048 = vmatpush1.msra.mxu0 0.0
  %3049 = vmatprep.mubr.f32.mxu0 0.0
  %3050 = vmatmul.mubr.f32.gmra.mrb[0].mxu0 %v2983
  %v3051 = vpop.f32.mrb[0].mxu0
  %v3052 = vadd.f32 0.0, %v3051
  %v3053 = vpop.f32.mrb[0].mxu0
  %3054 = vdwg.mxu0
  %v3055 = vadd.f32 %v2124, %v3052
  %v3056 = vtanh.pop %v3055
  %v3057 = vxor.u32 %v3055, 2147483648
  %v3058 = vmul.f32 %v3057, 1.442695
  %v3059 = vpow.pop %v3058
  %v3060 = vadd.f32 %v3059, 1.0
  %v3061 = vrcp.pop %v3060
  %v3062 = vmul.f32 1.0, %v3061
  %v3063 = vsel %vm36, %v3056, %v3062
  %v3065 = vrot.slane %v2972, 6
  %v3067 = vmul.f32 %v3063, %v3065
  %3069 = vrot.lane.b32.xlu0 %v3063, 64
  %v3070 = vpop.permute.xlu0 %3069
  %v3072 = vmul.f32 %v3063, %v3070
  %3074 = vrot.lane.b32.xlu0 %v3072, 32
  %v3075 = vpop.permute.xlu0 %3074
  %v3077 = vadd.f32 %v3067, %v3075
  %v3078 = vtanh.pop %v3077
  %3080 = vrot.lane.b32.xlu0 %v3078, 64
  %v3081 = vpop.permute.xlu0 %3080
  %v3083 = vmul.f32 %v3063, %v3081
  %3085 = vrot.lane.b32.xlu0 %v3083, 32
  %v3086 = vpop.permute.xlu0 %3085
  %v3087 = vsel %vm293, %v3086, 0
  %3089 = vmatprep.subr.mxu0 0.0
  %3090 = vmatpush1.msra.mxu0 %v2016
  %3091 = vmatprep.subr.mxu0 0.0
  %3092 = vmatpush1.msra.mxu0 %v2017
  %3093 = vmatprep.subr.mxu0 0.0
  %3094 = vmatpush1.msra.mxu0 %v2018
  %3095 = vmatprep.subr.mxu0 0.0
  %3096 = vmatpush1.msra.mxu0 %v2019
  %3097 = vmatprep.subr.mxu0 0.0
  %3098 = vmatpush1.msra.mxu0 0.0
  %3099 = vmatprep.subr.mxu0 0.0
  %3100 = vmatpush1.msra.mxu0 0.0
  %3101 = vmatprep.subr.mxu0 0.0
  %3102 = vmatpush1.msra.mxu0 0.0
  %3103 = vmatprep.subr.mxu0 0.0
  %3104 = vmatpush1.msra.mxu0 0.0
  %3105 = vmatprep.subr.mxu0 0.0
  %3106 = vmatpush1.msra.mxu0 0.0
  %3107 = vmatprep.subr.mxu0 0.0
  %3108 = vmatpush1.msra.mxu0 0.0
  %3109 = vmatprep.subr.mxu0 0.0
  %3110 = vmatpush1.msra.mxu0 0.0
  %3111 = vmatprep.subr.mxu0 0.0
  %3112 = vmatpush1.msra.mxu0 0.0
  %3113 = vmatprep.subr.mxu0 0.0
  %3114 = vmatpush1.msra.mxu0 0.0
  %3115 = vmatprep.subr.mxu0 0.0
  %3116 = vmatpush1.msra.mxu0 0.0
  %3117 = vmatprep.subr.mxu0 0.0
  %3118 = vmatpush1.msra.mxu0 0.0
  %3119 = vmatprep.subr.mxu0 0.0
  %3120 = vmatpush1.msra.mxu0 0.0
  %3121 = vmatprep.subr.mxu0 0.0
  %3122 = vmatpush1.msra.mxu0 0.0
  %3123 = vmatprep.subr.mxu0 0.0
  %3124 = vmatpush1.msra.mxu0 0.0
  %3125 = vmatprep.subr.mxu0 0.0
  %3126 = vmatpush1.msra.mxu0 0.0
  %3127 = vmatprep.subr.mxu0 0.0
  %3128 = vmatpush1.msra.mxu0 0.0
  %3129 = vmatprep.subr.mxu0 0.0
  %3130 = vmatpush1.msra.mxu0 0.0
  %3131 = vmatprep.subr.mxu0 0.0
  %3132 = vmatpush1.msra.mxu0 0.0
  %3133 = vmatprep.subr.mxu0 0.0
  %3134 = vmatpush1.msra.mxu0 0.0
  %3135 = vmatprep.subr.mxu0 0.0
  %3136 = vmatpush1.msra.mxu0 0.0
  %3137 = vmatprep.subr.mxu0 0.0
  %3138 = vmatpush1.msra.mxu0 0.0
  %3139 = vmatprep.subr.mxu0 0.0
  %3140 = vmatpush1.msra.mxu0 0.0
  %3141 = vmatprep.subr.mxu0 0.0
  %3142 = vmatpush1.msra.mxu0 0.0
  %3143 = vmatprep.subr.mxu0 0.0
  %3144 = vmatpush1.msra.mxu0 0.0
  %3145 = vmatprep.subr.mxu0 0.0
  %3146 = vmatpush1.msra.mxu0 0.0
  %3147 = vmatprep.subr.mxu0 0.0
  %3148 = vmatpush1.msra.mxu0 0.0
  %3149 = vmatprep.subr.mxu0 0.0
  %3150 = vmatpush1.msra.mxu0 0.0
  %3151 = vmatprep.subr.mxu0 0.0
  %3152 = vmatpush1.msra.mxu0 0.0
  %3153 = vmatprep.mubr.f32.mxu0 0.0
  %3154 = vmatmul.mubr.f32.gmra.mrb[0].mxu0 %v3087
  %v3155 = vpop.f32.mrb[0].mxu0
  %v3156 = vadd.f32 0.0, %v3155
  %v3157 = vpop.f32.mrb[0].mxu0
  %3158 = vdwg.mxu0
  %v3160 = vrot.slane %v3156, 6
  %v3162 = vadd.f32 %v2124, %v3160
  %v3163 = vtanh.pop %v3162
  %v3164 = vxor.u32 %v3162, 2147483648
  %v3165 = vmul.f32 %v3164, 1.442695
  %v3166 = vpow.pop %v3165
  %v3167 = vadd.f32 %v3166, 1.0
  %v3168 = vrcp.pop %v3167
  %v3169 = vmul.f32 1.0, %v3168
  %v3170 = vsel %vm36, %v3163, %v3169
  %v3172 = vrot.slane %v3077, 6
  %v3174 = vmul.f32 %v3170, %v3172
  %3176 = vrot.lane.b32.xlu0 %v3170, 64
  %v3177 = vpop.permute.xlu0 %3176
  %v3179 = vmul.f32 %v3170, %v3177
  %3181 = vrot.lane.b32.xlu0 %v3179, 32
  %v3182 = vpop.permute.xlu0 %3181
  %v3184 = vadd.f32 %v3174, %v3182
  %v3185 = vtanh.pop %v3184
  %3187 = vrot.lane.b32.xlu0 %v3185, 64
  %v3188 = vpop.permute.xlu0 %3187
  %v3190 = vmul.f32 %v3170, %v3188
  %v3192 = vrot.slane %v3190, 2
  %3193 = vrot.lane.b32.xlu0 %v3192, 32
  %v3194 = vpop.permute.xlu0 %3193
  %v3195 = vsel %vm293, %v3194, 0
  %3197 = vmatprep.subr.mxu0 0.0
  %3198 = vmatpush1.msra.mxu0 %v2016
  %3199 = vmatprep.subr.mxu0 0.0
  %3200 = vmatpush1.msra.mxu0 %v2017
  %3201 = vmatprep.subr.mxu0 0.0
  %3202 = vmatpush1.msra.mxu0 %v2018
  %3203 = vmatprep.subr.mxu0 0.0
  %3204 = vmatpush1.msra.mxu0 %v2019
  %3205 = vmatprep.subr.mxu0 0.0
  %3206 = vmatpush1.msra.mxu0 0.0
  %3207 = vmatprep.subr.mxu0 0.0
  %3208 = vmatpush1.msra.mxu0 0.0
  %3209 = vmatprep.subr.mxu0 0.0
  %3210 = vmatpush1.msra.mxu0 0.0
  %3211 = vmatprep.subr.mxu0 0.0
  %3212 = vmatpush1.msra.mxu0 0.0
  %3213 = vmatprep.subr.mxu0 0.0
  %3214 = vmatpush1.msra.mxu0 0.0
  %3215 = vmatprep.subr.mxu0 0.0
  %3216 = vmatpush1.msra.mxu0 0.0
  %3217 = vmatprep.subr.mxu0 0.0
  %3218 = vmatpush1.msra.mxu0 0.0
  %3219 = vmatprep.subr.mxu0 0.0
  %3220 = vmatpush1.msra.mxu0 0.0
  %3221 = vmatprep.subr.mxu0 0.0
  %3222 = vmatpush1.msra.mxu0 0.0
  %3223 = vmatprep.subr.mxu0 0.0
  %3224 = vmatpush1.msra.mxu0 0.0
  %3225 = vmatprep.subr.mxu0 0.0
  %3226 = vmatpush1.msra.mxu0 0.0
  %3227 = vmatprep.subr.mxu0 0.0
  %3228 = vmatpush1.msra.mxu0 0.0
  %3229 = vmatprep.subr.mxu0 0.0
  %3230 = vmatpush1.msra.mxu0 0.0
  %3231 = vmatprep.subr.mxu0 0.0
  %3232 = vmatpush1.msra.mxu0 0.0
  %3233 = vmatprep.subr.mxu0 0.0
  %3234 = vmatpush1.msra.mxu0 0.0
  %3235 = vmatprep.subr.mxu0 0.0
  %3236 = vmatpush1.msra.mxu0 0.0
  %3237 = vmatprep.subr.mxu0 0.0
  %3238 = vmatpush1.msra.mxu0 0.0
  %3239 = vmatprep.subr.mxu0 0.0
  %3240 = vmatpush1.msra.mxu0 0.0
  %3241 = vmatprep.subr.mxu0 0.0
  %3242 = vmatpush1.msra.mxu0 0.0
  %3243 = vmatprep.subr.mxu0 0.0
  %3244 = vmatpush1.msra.mxu0 0.0
  %3245 = vmatprep.subr.mxu0 0.0
  %3246 = vmatpush1.msra.mxu0 0.0
  %3247 = vmatprep.subr.mxu0 0.0
  %3248 = vmatpush1.msra.mxu0 0.0
  %3249 = vmatprep.subr.mxu0 0.0
  %3250 = vmatpush1.msra.mxu0 0.0
  %3251 = vmatprep.subr.mxu0 0.0
  %3252 = vmatpush1.msra.mxu0 0.0
  %3253 = vmatprep.subr.mxu0 0.0
  %3254 = vmatpush1.msra.mxu0 0.0
  %3255 = vmatprep.subr.mxu0 0.0
  %3256 = vmatpush1.msra.mxu0 0.0
  %3257 = vmatprep.subr.mxu0 0.0
  %3258 = vmatpush1.msra.mxu0 0.0
  %3259 = vmatprep.subr.mxu0 0.0
  %3260 = vmatpush1.msra.mxu0 0.0
  %3261 = vmatprep.mubr.f32.mxu0 0.0
  %3262 = vmatmul.mubr.f32.gmra.mrb[0].mxu0 %v3195
  %v3263 = vpop.f32.mrb[0].mxu0
  %v3264 = vadd.f32 0.0, %v3263
  %v3265 = vpop.f32.mrb[0].mxu0
  %3266 = vdwg.mxu0
  %v3268 = vrot.slane %v3264, 4
  %v3270 = vadd.f32 %v2124, %v3268
  %v3271 = vtanh.pop %v3270
  %v3272 = vxor.u32 %v3270, 2147483648
  %v3273 = vmul.f32 %v3272, 1.442695
  %v3274 = vpow.pop %v3273
  %v3275 = vadd.f32 %v3274, 1.0
  %v3276 = vrcp.pop %v3275
  %v3277 = vmul.f32 1.0, %v3276
  %v3278 = vsel %vm36, %v3271, %v3277
  %v3280 = vrot.slane %v3184, 6
  %v3282 = vmul.f32 %v3278, %v3280
  %3284 = vrot.lane.b32.xlu0 %v3278, 64
  %v3285 = vpop.permute.xlu0 %3284
  %v3287 = vmul.f32 %v3278, %v3285
  %3289 = vrot.lane.b32.xlu0 %v3287, 32
  %v3290 = vpop.permute.xlu0 %3289
  %v3292 = vadd.f32 %v3282, %v3290
  %v3293 = vtanh.pop %v3292
  %3295 = vrot.lane.b32.xlu0 %v3293, 64
  %v3296 = vpop.permute.xlu0 %3295
  %v3298 = vmul.f32 %v3278, %v3296
  %v3300 = vrot.slane %v3298, 4
  %3301 = vrot.lane.b32.xlu0 %v3300, 32
  %v3302 = vpop.permute.xlu0 %3301
  %v3303 = vsel %vm293, %v3302, 0
  %3305 = vmatprep.subr.mxu0 0.0
  %3306 = vmatpush1.msra.mxu0 %v2016
  %3307 = vmatprep.subr.mxu0 0.0
  %3308 = vmatpush1.msra.mxu0 %v2017
  %3309 = vmatprep.subr.mxu0 0.0
  %3310 = vmatpush1.msra.mxu0 %v2018
  %3311 = vmatprep.subr.mxu0 0.0
  %3312 = vmatpush1.msra.mxu0 %v2019
  %3313 = vmatprep.subr.mxu0 0.0
  %3314 = vmatpush1.msra.mxu0 0.0
  %3315 = vmatprep.subr.mxu0 0.0
  %3316 = vmatpush1.msra.mxu0 0.0
  %3317 = vmatprep.subr.mxu0 0.0
  %3318 = vmatpush1.msra.mxu0 0.0
  %3319 = vmatprep.subr.mxu0 0.0
  %3320 = vmatpush1.msra.mxu0 0.0
  %3321 = vmatprep.subr.mxu0 0.0
  %3322 = vmatpush1.msra.mxu0 0.0
  %3323 = vmatprep.subr.mxu0 0.0
  %3324 = vmatpush1.msra.mxu0 0.0
  %3325 = vmatprep.subr.mxu0 0.0
  %3326 = vmatpush1.msra.mxu0 0.0
  %3327 = vmatprep.subr.mxu0 0.0
  %3328 = vmatpush1.msra.mxu0 0.0
  %3329 = vmatprep.subr.mxu0 0.0
  %3330 = vmatpush1.msra.mxu0 0.0
  %3331 = vmatprep.subr.mxu0 0.0
  %3332 = vmatpush1.msra.mxu0 0.0
  %3333 = vmatprep.subr.mxu0 0.0
  %3334 = vmatpush1.msra.mxu0 0.0
  %3335 = vmatprep.subr.mxu0 0.0
  %3336 = vmatpush1.msra.mxu0 0.0
  %3337 = vmatprep.subr.mxu0 0.0
  %3338 = vmatpush1.msra.mxu0 0.0
  %3339 = vmatprep.subr.mxu0 0.0
  %3340 = vmatpush1.msra.mxu0 0.0
  %3341 = vmatprep.subr.mxu0 0.0
  %3342 = vmatpush1.msra.mxu0 0.0
  %3343 = vmatprep.subr.mxu0 0.0
  %3344 = vmatpush1.msra.mxu0 0.0
  %3345 = vmatprep.subr.mxu0 0.0
  %3346 = vmatpush1.msra.mxu0 0.0
  %3347 = vmatprep.subr.mxu0 0.0
  %3348 = vmatpush1.msra.mxu0 0.0
  %3349 = vmatprep.subr.mxu0 0.0
  %3350 = vmatpush1.msra.mxu0 0.0
  %3351 = vmatprep.subr.mxu0 0.0
  %3352 = vmatpush1.msra.mxu0 0.0
  %3353 = vmatprep.subr.mxu0 0.0
  %3354 = vmatpush1.msra.mxu0 0.0
  %3355 = vmatprep.subr.mxu0 0.0
  %3356 = vmatpush1.msra.mxu0 0.0
  %3357 = vmatprep.subr.mxu0 0.0
  %3358 = vmatpush1.msra.mxu0 0.0
  %3359 = vmatprep.subr.mxu0 0.0
  %3360 = vmatpush1.msra.mxu0 0.0
  %3361 = vmatprep.subr.mxu0 0.0
  %3362 = vmatpush1.msra.mxu0 0.0
  %3363 = vmatprep.subr.mxu0 0.0
  %3364 = vmatpush1.msra.mxu0 0.0
  %3365 = vmatprep.subr.mxu0 0.0
  %3366 = vmatpush1.msra.mxu0 0.0
  %3367 = vmatprep.subr.mxu0 0.0
  %3368 = vmatpush1.msra.mxu0 0.0
  %3369 = vmatprep.mubr.f32.mxu0 0.0
  %3370 = vmatmul.mubr.f32.gmra.mrb[0].mxu0 %v3303
  %v3371 = vpop.f32.mrb[0].mxu0
  %v3372 = vadd.f32 0.0, %v3371
  %v3373 = vpop.f32.mrb[0].mxu0
  %3374 = vdwg.mxu0
  %v3376 = vrot.slane %v3372, 2
  %v3378 = vadd.f32 %v2124, %v3376
  %v3379 = vtanh.pop %v3378
  %v3380 = vxor.u32 %v3378, 2147483648
  %v3381 = vmul.f32 %v3380, 1.442695
  %v3382 = vpow.pop %v3381
  %v3383 = vadd.f32 %v3382, 1.0
  %v3384 = vrcp.pop %v3383
  %v3385 = vmul.f32 1.0, %v3384
  %v3386 = vsel %vm36, %v3379, %v3385
  %v3388 = vrot.slane %v3292, 6
  %v3390 = vmul.f32 %v3386, %v3388
  %3392 = vrot.lane.b32.xlu0 %v3386, 64
  %v3393 = vpop.permute.xlu0 %3392
  %v3395 = vmul.f32 %v3386, %v3393
  %3397 = vrot.lane.b32.xlu0 %v3395, 32
  %v3398 = vpop.permute.xlu0 %3397
  %v3400 = vadd.f32 %v3390, %v3398
  %v3401 = vtanh.pop %v3400
  %3403 = vrot.lane.b32.xlu0 %v3401, 64
  %v3404 = vpop.permute.xlu0 %3403
  %v3406 = vmul.f32 %v3386, %v3404
  %v3408 = vrot.slane %v3406, 6
  %3409 = vrot.lane.b32.xlu0 %v3408, 32
  %v3410 = vpop.permute.xlu0 %3409
  %v3411 = vsel %vm293, %v3410, 0
  %3413 = vmatprep.subr.mxu0 0.0
  %3414 = vmatpush1.msra.mxu0 %v2016
  %3415 = vmatprep.subr.mxu0 0.0
  %3416 = vmatpush1.msra.mxu0 %v2017
  %3417 = vmatprep.subr.mxu0 0.0
  %3418 = vmatpush1.msra.mxu0 %v2018
  %3419 = vmatprep.subr.mxu0 0.0
  %3420 = vmatpush1.msra.mxu0 %v2019
  %3421 = vmatprep.subr.mxu0 0.0
  %3422 = vmatpush1.msra.mxu0 0.0
  %3423 = vmatprep.subr.mxu0 0.0
  %3424 = vmatpush1.msra.mxu0 0.0
  %3425 = vmatprep.subr.mxu0 0.0
  %3426 = vmatpush1.msra.mxu0 0.0
  %3427 = vmatprep.subr.mxu0 0.0
  %3428 = vmatpush1.msra.mxu0 0.0
  %3429 = vmatprep.subr.mxu0 0.0
  %3430 = vmatpush1.msra.mxu0 0.0
  %3431 = vmatprep.subr.mxu0 0.0
  %3432 = vmatpush1.msra.mxu0 0.0
  %3433 = vmatprep.subr.mxu0 0.0
  %3434 = vmatpush1.msra.mxu0 0.0
  %3435 = vmatprep.subr.mxu0 0.0
  %3436 = vmatpush1.msra.mxu0 0.0
  %3437 = vmatprep.subr.mxu0 0.0
  %3438 = vmatpush1.msra.mxu0 0.0
  %3439 = vmatprep.subr.mxu0 0.0
  %3440 = vmatpush1.msra.mxu0 0.0
  %3441 = vmatprep.subr.mxu0 0.0
  %3442 = vmatpush1.msra.mxu0 0.0
  %3443 = vmatprep.subr.mxu0 0.0
  %3444 = vmatpush1.msra.mxu0 0.0
  %3445 = vmatprep.subr.mxu0 0.0
  %3446 = vmatpush1.msra.mxu0 0.0
  %3447 = vmatprep.subr.mxu0 0.0
  %3448 = vmatpush1.msra.mxu0 0.0
  %3449 = vmatprep.subr.mxu0 0.0
  %3450 = vmatpush1.msra.mxu0 0.0
  %3451 = vmatprep.subr.mxu0 0.0
  %3452 = vmatpush1.msra.mxu0 0.0
  %3453 = vmatprep.subr.mxu0 0.0
  %3454 = vmatpush1.msra.mxu0 0.0
  %3455 = vmatprep.subr.mxu0 0.0
  %3456 = vmatpush1.msra.mxu0 0.0
  %3457 = vmatprep.subr.mxu0 0.0
  %3458 = vmatpush1.msra.mxu0 0.0
  %3459 = vmatprep.subr.mxu0 0.0
  %3460 = vmatpush1.msra.mxu0 0.0
  %3461 = vmatprep.subr.mxu0 0.0
  %3462 = vmatpush1.msra.mxu0 0.0
  %3463 = vmatprep.subr.mxu0 0.0
  %3464 = vmatpush1.msra.mxu0 0.0
  %3465 = vmatprep.subr.mxu0 0.0
  %3466 = vmatpush1.msra.mxu0 0.0
  %3467 = vmatprep.subr.mxu0 0.0
  %3468 = vmatpush1.msra.mxu0 0.0
  %3469 = vmatprep.subr.mxu0 0.0
  %3470 = vmatpush1.msra.mxu0 0.0
  %3471 = vmatprep.subr.mxu0 0.0
  %3472 = vmatpush1.msra.mxu0 0.0
  %3473 = vmatprep.subr.mxu0 0.0
  %3474 = vmatpush1.msra.mxu0 0.0
  %3475 = vmatprep.subr.mxu0 0.0
  %3476 = vmatpush1.msra.mxu0 0.0
  %3477 = vmatprep.mubr.f32.mxu0 0.0
  %3478 = vmatmul.mubr.f32.gmra.mrb[0].mxu0 %v3411
  %v3479 = vpop.f32.mrb[0].mxu0
  %v3480 = vadd.f32 0.0, %v3479
  %v3481 = vpop.f32.mrb[0].mxu0
  %3482 = vdwg.mxu0
  %v3483 = vadd.f32 %v2129, %v3480
  %v3484 = vtanh.pop %v3483
  %v3485 = vxor.u32 %v3483, 2147483648
  %v3486 = vmul.f32 %v3485, 1.442695
  %v3487 = vpow.pop %v3486
  %v3488 = vadd.f32 %v3487, 1.0
  %v3489 = vrcp.pop %v3488
  %v3490 = vmul.f32 1.0, %v3489
  %v3491 = vsel %vm36, %v3484, %v3490
  %v3493 = vrot.slane %v3400, 6
  %v3495 = vmul.f32 %v3491, %v3493
  %3497 = vrot.lane.b32.xlu0 %v3491, 64
  %v3498 = vpop.permute.xlu0 %3497
  %v3500 = vmul.f32 %v3491, %v3498
  %3502 = vrot.lane.b32.xlu0 %v3500, 32
  %v3503 = vpop.permute.xlu0 %3502
  %v3505 = vadd.f32 %v3495, %v3503
  %v3506 = vtanh.pop %v3505
  %3508 = vrot.lane.b32.xlu0 %v3506, 64
  %v3509 = vpop.permute.xlu0 %3508
  %v3511 = vmul.f32 %v3491, %v3509
  %3513 = vrot.lane.b32.xlu0 %v3511, 32
  %v3514 = vpop.permute.xlu0 %3513
  %v3515 = vsel %vm293, %v3514, 0
  %3517 = vmatprep.subr.mxu0 0.0
  %3518 = vmatpush1.msra.mxu0 %v2016
  %3519 = vmatprep.subr.mxu0 0.0
  %3520 = vmatpush1.msra.mxu0 %v2017
  %3521 = vmatprep.subr.mxu0 0.0
  %3522 = vmatpush1.msra.mxu0 %v2018
  %3523 = vmatprep.subr.mxu0 0.0
  %3524 = vmatpush1.msra.mxu0 %v2019
  %3525 = vmatprep.subr.mxu0 0.0
  %3526 = vmatpush1.msra.mxu0 0.0
  %3527 = vmatprep.subr.mxu0 0.0
  %3528 = vmatpush1.msra.mxu0 0.0
  %3529 = vmatprep.subr.mxu0 0.0
  %3530 = vmatpush1.msra.mxu0 0.0
  %3531 = vmatprep.subr.mxu0 0.0
  %3532 = vmatpush1.msra.mxu0 0.0
  %3533 = vmatprep.subr.mxu0 0.0
  %3534 = vmatpush1.msra.mxu0 0.0
  %3535 = vmatprep.subr.mxu0 0.0
  %3536 = vmatpush1.msra.mxu0 0.0
  %3537 = vmatprep.subr.mxu0 0.0
  %3538 = vmatpush1.msra.mxu0 0.0
  %3539 = vmatprep.subr.mxu0 0.0
  %3540 = vmatpush1.msra.mxu0 0.0
  %3541 = vmatprep.subr.mxu0 0.0
  %3542 = vmatpush1.msra.mxu0 0.0
  %3543 = vmatprep.subr.mxu0 0.0
  %3544 = vmatpush1.msra.mxu0 0.0
  %3545 = vmatprep.subr.mxu0 0.0
  %3546 = vmatpush1.msra.mxu0 0.0
  %3547 = vmatprep.subr.mxu0 0.0
  %3548 = vmatpush1.msra.mxu0 0.0
  %3549 = vmatprep.subr.mxu0 0.0
  %3550 = vmatpush1.msra.mxu0 0.0
  %3551 = vmatprep.subr.mxu0 0.0
  %3552 = vmatpush1.msra.mxu0 0.0
  %3553 = vmatprep.subr.mxu0 0.0
  %3554 = vmatpush1.msra.mxu0 0.0
  %3555 = vmatprep.subr.mxu0 0.0
  %3556 = vmatpush1.msra.mxu0 0.0
  %3557 = vmatprep.subr.mxu0 0.0
  %3558 = vmatpush1.msra.mxu0 0.0
  %3559 = vmatprep.subr.mxu0 0.0
  %3560 = vmatpush1.msra.mxu0 0.0
  %3561 = vmatprep.subr.mxu0 0.0
  %3562 = vmatpush1.msra.mxu0 0.0
  %3563 = vmatprep.subr.mxu0 0.0
  %3564 = vmatpush1.msra.mxu0 0.0
  %3565 = vmatprep.subr.mxu0 0.0
  %3566 = vmatpush1.msra.mxu0 0.0
  %3567 = vmatprep.subr.mxu0 0.0
  %3568 = vmatpush1.msra.mxu0 0.0
  %3569 = vmatprep.subr.mxu0 0.0
  %3570 = vmatpush1.msra.mxu0 0.0
  %3571 = vmatprep.subr.mxu0 0.0
  %3572 = vmatpush1.msra.mxu0 0.0
  %3573 = vmatprep.subr.mxu0 0.0
  %3574 = vmatpush1.msra.mxu0 0.0
  %3575 = vmatprep.subr.mxu0 0.0
  %3576 = vmatpush1.msra.mxu0 0.0
  %3577 = vmatprep.subr.mxu0 0.0
  %3578 = vmatpush1.msra.mxu0 0.0
  %3579 = vmatprep.subr.mxu0 0.0
  %3580 = vmatpush1.msra.mxu0 0.0
  %3581 = vmatprep.mubr.f32.mxu0 0.0
  %3582 = vmatmul.mubr.f32.gmra.mrb[0].mxu0 %v3515
  %v3583 = vpop.f32.mrb[0].mxu0
  %v3584 = vadd.f32 0.0, %v3583
  %v3585 = vpop.f32.mrb[0].mxu0
  %3586 = vdwg.mxu0
  %v3588 = vrot.slane %v3584, 6
  %v3590 = vadd.f32 %v2129, %v3588
  %v3591 = vtanh.pop %v3590
  %v3592 = vxor.u32 %v3590, 2147483648
  %v3593 = vmul.f32 %v3592, 1.442695
  %v3594 = vpow.pop %v3593
  %v3595 = vadd.f32 %v3594, 1.0
  %v3596 = vrcp.pop %v3595
  %v3597 = vmul.f32 1.0, %v3596
  %v3598 = vsel %vm36, %v3591, %v3597
  %v3600 = vrot.slane %v3505, 6
  %v3602 = vmul.f32 %v3598, %v3600
  %3604 = vrot.lane.b32.xlu0 %v3598, 64
  %v3605 = vpop.permute.xlu0 %3604
  %v3607 = vmul.f32 %v3598, %v3605
  %3609 = vrot.lane.b32.xlu0 %v3607, 32
  %v3610 = vpop.permute.xlu0 %3609
  %v3612 = vadd.f32 %v3602, %v3610
  %v3613 = vtanh.pop %v3612
  %3615 = vrot.lane.b32.xlu0 %v3613, 64
  %v3616 = vpop.permute.xlu0 %3615
  %v3618 = vmul.f32 %v3598, %v3616
  %v3620 = vrot.slane %v3618, 2
  %3621 = vrot.lane.b32.xlu0 %v3620, 32
  %v3622 = vpop.permute.xlu0 %3621
  %v3623 = vsel %vm293, %v3622, 0
  %3625 = vmatprep.subr.mxu0 0.0
  %3626 = vmatpush1.msra.mxu0 %v2016
  %3627 = vmatprep.subr.mxu0 0.0
  %3628 = vmatpush1.msra.mxu0 %v2017
  %3629 = vmatprep.subr.mxu0 0.0
  %3630 = vmatpush1.msra.mxu0 %v2018
  %3631 = vmatprep.subr.mxu0 0.0
  %3632 = vmatpush1.msra.mxu0 %v2019
  %3633 = vmatprep.subr.mxu0 0.0
  %3634 = vmatpush1.msra.mxu0 0.0
  %3635 = vmatprep.subr.mxu0 0.0
  %3636 = vmatpush1.msra.mxu0 0.0
  %3637 = vmatprep.subr.mxu0 0.0
  %3638 = vmatpush1.msra.mxu0 0.0
  %3639 = vmatprep.subr.mxu0 0.0
  %3640 = vmatpush1.msra.mxu0 0.0
  %3641 = vmatprep.subr.mxu0 0.0
  %3642 = vmatpush1.msra.mxu0 0.0
  %3643 = vmatprep.subr.mxu0 0.0
  %3644 = vmatpush1.msra.mxu0 0.0
  %3645 = vmatprep.subr.mxu0 0.0
  %3646 = vmatpush1.msra.mxu0 0.0
  %3647 = vmatprep.subr.mxu0 0.0
  %3648 = vmatpush1.msra.mxu0 0.0
  %3649 = vmatprep.subr.mxu0 0.0
  %3650 = vmatpush1.msra.mxu0 0.0
  %3651 = vmatprep.subr.mxu0 0.0
  %3652 = vmatpush1.msra.mxu0 0.0
  %3653 = vmatprep.subr.mxu0 0.0
  %3654 = vmatpush1.msra.mxu0 0.0
  %3655 = vmatprep.subr.mxu0 0.0
  %3656 = vmatpush1.msra.mxu0 0.0
  %3657 = vmatprep.subr.mxu0 0.0
  %3658 = vmatpush1.msra.mxu0 0.0
  %3659 = vmatprep.subr.mxu0 0.0
  %3660 = vmatpush1.msra.mxu0 0.0
  %3661 = vmatprep.subr.mxu0 0.0
  %3662 = vmatpush1.msra.mxu0 0.0
  %3663 = vmatprep.subr.mxu0 0.0
  %3664 = vmatpush1.msra.mxu0 0.0
  %3665 = vmatprep.subr.mxu0 0.0
  %3666 = vmatpush1.msra.mxu0 0.0
  %3667 = vmatprep.subr.mxu0 0.0
  %3668 = vmatpush1.msra.mxu0 0.0
  %3669 = vmatprep.subr.mxu0 0.0
  %3670 = vmatpush1.msra.mxu0 0.0
  %3671 = vmatprep.subr.mxu0 0.0
  %3672 = vmatpush1.msra.mxu0 0.0
  %3673 = vmatprep.subr.mxu0 0.0
  %3674 = vmatpush1.msra.mxu0 0.0
  %3675 = vmatprep.subr.mxu0 0.0
  %3676 = vmatpush1.msra.mxu0 0.0
  %3677 = vmatprep.subr.mxu0 0.0
  %3678 = vmatpush1.msra.mxu0 0.0
  %3679 = vmatprep.subr.mxu0 0.0
  %3680 = vmatpush1.msra.mxu0 0.0
  %3681 = vmatprep.subr.mxu0 0.0
  %3682 = vmatpush1.msra.mxu0 0.0
  %3683 = vmatprep.subr.mxu0 0.0
  %3684 = vmatpush1.msra.mxu0 0.0
  %3685 = vmatprep.subr.mxu0 0.0
  %3686 = vmatpush1.msra.mxu0 0.0
  %3687 = vmatprep.subr.mxu0 0.0
  %3688 = vmatpush1.msra.mxu0 0.0
  %3689 = vmatprep.mubr.f32.mxu0 0.0
  %3690 = vmatmul.mubr.f32.gmra.mrb[0].mxu0 %v3623
  %v3691 = vpop.f32.mrb[0].mxu0
  %v3692 = vadd.f32 0.0, %v3691
  %v3693 = vpop.f32.mrb[0].mxu0
  %3694 = vdwg.mxu0
  %v3696 = vrot.slane %v3692, 4
  %v3698 = vadd.f32 %v2129, %v3696
  %v3699 = vtanh.pop %v3698
  %v3700 = vxor.u32 %v3698, 2147483648
  %v3701 = vmul.f32 %v3700, 1.442695
  %v3702 = vpow.pop %v3701
  %v3703 = vadd.f32 %v3702, 1.0
  %v3704 = vrcp.pop %v3703
  %v3705 = vmul.f32 1.0, %v3704
  %v3706 = vsel %vm36, %v3699, %v3705
  %v3708 = vrot.slane %v3612, 6
  %v3710 = vmul.f32 %v3706, %v3708
  %3712 = vrot.lane.b32.xlu0 %v3706, 64
  %v3713 = vpop.permute.xlu0 %3712
  %v3715 = vmul.f32 %v3706, %v3713
  %3717 = vrot.lane.b32.xlu0 %v3715, 32
  %v3718 = vpop.permute.xlu0 %3717
  %v3720 = vadd.f32 %v3710, %v3718
  %v3721 = vtanh.pop %v3720
  %3723 = vrot.lane.b32.xlu0 %v3721, 64
  %v3724 = vpop.permute.xlu0 %3723
  %v3726 = vmul.f32 %v3706, %v3724
  %v3728 = vrot.slane %v3726, 4
  %3729 = vrot.lane.b32.xlu0 %v3728, 32
  %v3730 = vpop.permute.xlu0 %3729
  %v3731 = vsel %vm293, %v3730, 0
  %3733 = vmatprep.subr.mxu0 0.0
  %3734 = vmatpush1.msra.mxu0 %v2016
  %3735 = vmatprep.subr.mxu0 0.0
  %3736 = vmatpush1.msra.mxu0 %v2017
  %3737 = vmatprep.subr.mxu0 0.0
  %3738 = vmatpush1.msra.mxu0 %v2018
  %3739 = vmatprep.subr.mxu0 0.0
  %3740 = vmatpush1.msra.mxu0 %v2019
  %3741 = vmatprep.subr.mxu0 0.0
  %3742 = vmatpush1.msra.mxu0 0.0
  %3743 = vmatprep.subr.mxu0 0.0
  %3744 = vmatpush1.msra.mxu0 0.0
  %3745 = vmatprep.subr.mxu0 0.0
  %3746 = vmatpush1.msra.mxu0 0.0
  %3747 = vmatprep.subr.mxu0 0.0
  %3748 = vmatpush1.msra.mxu0 0.0
  %3749 = vmatprep.subr.mxu0 0.0
  %3750 = vmatpush1.msra.mxu0 0.0
  %3751 = vmatprep.subr.mxu0 0.0
  %3752 = vmatpush1.msra.mxu0 0.0
  %3753 = vmatprep.subr.mxu0 0.0
  %3754 = vmatpush1.msra.mxu0 0.0
  %3755 = vmatprep.subr.mxu0 0.0
  %3756 = vmatpush1.msra.mxu0 0.0
  %3757 = vmatprep.subr.mxu0 0.0
  %3758 = vmatpush1.msra.mxu0 0.0
  %3759 = vmatprep.subr.mxu0 0.0
  %3760 = vmatpush1.msra.mxu0 0.0
  %3761 = vmatprep.subr.mxu0 0.0
  %3762 = vmatpush1.msra.mxu0 0.0
  %3763 = vmatprep.subr.mxu0 0.0
  %3764 = vmatpush1.msra.mxu0 0.0
  %3765 = vmatprep.subr.mxu0 0.0
  %3766 = vmatpush1.msra.mxu0 0.0
  %3767 = vmatprep.subr.mxu0 0.0
  %3768 = vmatpush1.msra.mxu0 0.0
  %3769 = vmatprep.subr.mxu0 0.0
  %3770 = vmatpush1.msra.mxu0 0.0
  %3771 = vmatprep.subr.mxu0 0.0
  %3772 = vmatpush1.msra.mxu0 0.0
  %3773 = vmatprep.subr.mxu0 0.0
  %3774 = vmatpush1.msra.mxu0 0.0
  %3775 = vmatprep.subr.mxu0 0.0
  %3776 = vmatpush1.msra.mxu0 0.0
  %3777 = vmatprep.subr.mxu0 0.0
  %3778 = vmatpush1.msra.mxu0 0.0
  %3779 = vmatprep.subr.mxu0 0.0
  %3780 = vmatpush1.msra.mxu0 0.0
  %3781 = vmatprep.subr.mxu0 0.0
  %3782 = vmatpush1.msra.mxu0 0.0
  %3783 = vmatprep.subr.mxu0 0.0
  %3784 = vmatpush1.msra.mxu0 0.0
  %3785 = vmatprep.subr.mxu0 0.0
  %3786 = vmatpush1.msra.mxu0 0.0
  %3787 = vmatprep.subr.mxu0 0.0
  %3788 = vmatpush1.msra.mxu0 0.0
  %3789 = vmatprep.subr.mxu0 0.0
  %3790 = vmatpush1.msra.mxu0 0.0
  %3791 = vmatprep.subr.mxu0 0.0
  %3792 = vmatpush1.msra.mxu0 0.0
  %3793 = vmatprep.subr.mxu0 0.0
  %3794 = vmatpush1.msra.mxu0 0.0
  %3795 = vmatprep.subr.mxu0 0.0
  %3796 = vmatpush1.msra.mxu0 0.0
  %3797 = vmatprep.mubr.f32.mxu0 0.0
  %3798 = vmatmul.mubr.f32.gmra.mrb[0].mxu0 %v3731
  %v3799 = vpop.f32.mrb[0].mxu0
  %v3800 = vadd.f32 0.0, %v3799
  %v3801 = vpop.f32.mrb[0].mxu0
  %3802 = vdwg.mxu0
  %v3804 = vrot.slane %v3800, 2
  %v3806 = vadd.f32 %v2129, %v3804
  %v3807 = vtanh.pop %v3806
  %v3808 = vxor.u32 %v3806, 2147483648
  %v3809 = vmul.f32 %v3808, 1.442695
  %v3810 = vpow.pop %v3809
  %v3811 = vadd.f32 %v3810, 1.0
  %v3812 = vrcp.pop %v3811
  %v3813 = vmul.f32 1.0, %v3812
  %v3814 = vsel %vm36, %v3807, %v3813
  %v3816 = vrot.slane %v3720, 6
  %v3818 = vmul.f32 %v3814, %v3816
  %3820 = vrot.lane.b32.xlu0 %v3814, 64
  %v3821 = vpop.permute.xlu0 %3820
  %v3823 = vmul.f32 %v3814, %v3821
  %3825 = vrot.lane.b32.xlu0 %v3823, 32
  %v3826 = vpop.permute.xlu0 %3825
  %v3828 = vadd.f32 %v3818, %v3826
  %v3829 = vtanh.pop %v3828
  %3831 = vrot.lane.b32.xlu0 %v3829, 64
  %v3832 = vpop.permute.xlu0 %3831
  %v3834 = vmul.f32 %v3814, %v3832
  %3836 = vrot.lane.b32.xlu0 %v2336, 64
  %v3837 = vpop.permute.xlu0 %3836
  %3839 = vrot.lane.b32.xlu0 %v2444, 96
  %v3840 = vpop.permute.xlu0 %3839
  %3844 = vrot.lane.b32.xlu0 %v2764, 64
  %v3845 = vpop.permute.xlu0 %3844
  %3847 = vrot.lane.b32.xlu0 %v2872, 96
  %v3848 = vpop.permute.xlu0 %3847
  %3852 = vrot.lane.b32.xlu0 %v3192, 64
  %v3853 = vpop.permute.xlu0 %3852
  %3855 = vrot.lane.b32.xlu0 %v3300, 96
  %v3856 = vpop.permute.xlu0 %3855
  %3860 = vrot.lane.b32.xlu0 %v3620, 64
  %v3861 = vpop.permute.xlu0 %3860
  %3863 = vrot.lane.b32.xlu0 %v3728, 96
  %v3864 = vpop.permute.xlu0 %3863
  %v3867 = vrot.slane %v3834, 6
  %v3869 = vsel %vm293, %v2230, %v3837
  %vm3870 = vcmask 523264
  %v3871 = vsel %vm3870, %v3869, %v3840
  %vm3872 = vcmask 785408
  %v3873 = vsel %vm3872, %v3871, %v2552
  %v3874 = vsel %vm293, %v2658, %v3845
  %v3875 = vsel %vm3870, %v3874, %v3848
  %v3876 = vsel %vm3872, %v3875, %v2980
  %v3877 = vsel %vm293, %v3086, %v3853
  %v3878 = vsel %vm3870, %v3877, %v3856
  %v3879 = vsel %vm3872, %v3878, %v3408
  %v3880 = vsel %vm293, %v3514, %v3861
  %v3881 = vsel %vm3870, %v3880, %v3864
  %v3882 = vsel %vm3872, %v3881, %v3867
  %v3883 = vld [vmem:[%s7] sm:$0xff]
  %v3884 = vld [vmem:[%s7 + $0x8] sm:$0xff]
  %v3885 = vld [vmem:[%s7 + $0x10] sm:$0xff]
  %v3886 = vld [vmem:[%s7 + $0x18] sm:$0xff]
  %v3887 = vld [vmem:[%s7 + $0x20] sm:$0xff]
  %v3888 = vld [vmem:[%s7 + $0x28] sm:$0xff]
  %v3889 = vld [vmem:[%s7 + $0x30] sm:$0xff]
  %v3890 = vld [vmem:[%s7 + $0x38] sm:$0xff]
  %v3891 = vld [vmem:[%s7 + $0x40] sm:$0xff]
  %v3892 = vld [vmem:[%s7 + $0x48] sm:$0xff]
  %v3893 = vld [vmem:[%s7 + $0x50] sm:$0xff]
  %v3894 = vld [vmem:[%s7 + $0x58] sm:$0xff]
  %v3895 = vld [vmem:[%s7 + $0x60] sm:$0xff]
  %v3896 = vld [vmem:[%s7 + $0x68] sm:$0xff]
  %v3897 = vld [vmem:[%s7 + $0x70] sm:$0xff]
  %v3898 = vld [vmem:[%s7 + $0x78] sm:$0xff]
  %v3899 = vld [vmem:[%s7 + $0x80] sm:$0xff]
  %v3900 = vld [vmem:[%s7 + $0x88] sm:$0xff]
  %v3901 = vld [vmem:[%s7 + $0x90] sm:$0xff]
  %v3902 = vld [vmem:[%s7 + $0x98] sm:$0xff]
  %v3903 = vld [vmem:[%s7 + $0xa0] sm:$0xff]
  %v3904 = vld [vmem:[%s7 + $0xa8] sm:$0xff]
  %v3905 = vld [vmem:[%s7 + $0xb0] sm:$0xff]
  %v3906 = vld [vmem:[%s7 + $0xb8] sm:$0xff]
  %v3907 = vld [vmem:[%s7 + $0xc0] sm:$0xff]
  %v3908 = vld [vmem:[%s7 + $0xc8] sm:$0xff]
  %v3909 = vld [vmem:[%s7 + $0xd0] sm:$0xff]
  %v3910 = vld [vmem:[%s7 + $0xd8] sm:$0xff]
  %v3911 = vld [vmem:[%s7 + $0xe0] sm:$0xff]
  %v3912 = vld [vmem:[%s7 + $0xe8] sm:$0xff]
  %v3913 = vld [vmem:[%s7 + $0xf0] sm:$0xff]
  %v3914 = vld [vmem:[%s7 + $0xf8] sm:$0xff]
  %v3915 = vld [vmem:[%s7 + $0x100] sm:$0xff]
  %v3916 = vld [vmem:[%s7 + $0x108] sm:$0xff]
  %v3917 = vld [vmem:[%s7 + $0x110] sm:$0xff]
  %v3918 = vld [vmem:[%s7 + $0x118] sm:$0xff]
  %v3919 = vld [vmem:[%s7 + $0x120] sm:$0xff]
  %v3920 = vld [vmem:[%s7 + $0x128] sm:$0xff]
  %v3921 = vld [vmem:[%s7 + $0x130] sm:$0xff]
  %v3922 = vld [vmem:[%s7 + $0x138] sm:$0xff]
  %v3923 = vld [vmem:[%s7 + $0x140] sm:$0xff]
  %v3924 = vld [vmem:[%s7 + $0x148] sm:$0xff]
  %v3925 = vld [vmem:[%s7 + $0x150] sm:$0xff]
  %v3926 = vld [vmem:[%s7 + $0x158] sm:$0xff]
  %v3927 = vld [vmem:[%s7 + $0x160] sm:$0xff]
  %v3928 = vld [vmem:[%s7 + $0x168] sm:$0xff]
  %v3929 = vld [vmem:[%s7 + $0x170] sm:$0xff]
  %v3930 = vld [vmem:[%s7 + $0x178] sm:$0xff]
  %v3931 = vld [vmem:[%s7 + $0x180] sm:$0xff]
  %v3932 = vld [vmem:[%s7 + $0x188] sm:$0xff]
  %v3933 = vld [vmem:[%s7 + $0x190] sm:$0xff]
  %v3934 = vld [vmem:[%s7 + $0x198] sm:$0xff]
  %v3935 = vld [vmem:[%s7 + $0x1a0] sm:$0xff]
  %v3936 = vld [vmem:[%s7 + $0x1a8] sm:$0xff]
  %v3937 = vld [vmem:[%s7 + $0x1b0] sm:$0xff]
  %v3938 = vld [vmem:[%s7 + $0x1b8] sm:$0xff]
  %v3939 = vld [vmem:[%s7 + $0x1c0] sm:$0xff]
  %v3940 = vld [vmem:[%s7 + $0x1c8] sm:$0xff]
  %v3941 = vld [vmem:[%s7 + $0x1d0] sm:$0xff]
  %v3942 = vld [vmem:[%s7 + $0x1d8] sm:$0xff]
  %v3943 = vld [vmem:[%s7 + $0x1e0] sm:$0xff]
  %v3944 = vld [vmem:[%s7 + $0x1e8] sm:$0xff]
  %v3945 = vld [vmem:[%s7 + $0x1f0] sm:$0xff]
  %v3946 = vld [vmem:[%s7 + $0x1f8] sm:$0xff]
  %v3947 = vld [vmem:[%s8] sm:$0x1]
  %v3949 = vlaneseq
  %v3950 = vshrl.u32 %v3949, 7
  %v3951 = vsub.s32 0, %v3950
  %v3952 = vrot.slane %v3947, %v3951
  %3954 = vmatprep.subr.mxu0 0.0
  %3955 = vmatpush1.msra.mxu0 %v3883
  %3956 = vmatprep.subr.mxu0 0.0
  %3957 = vmatpush1.msra.mxu0 %v3884
  %3958 = vmatprep.subr.mxu0 0.0
  %3959 = vmatpush1.msra.mxu0 %v3885
  %3960 = vmatprep.subr.mxu0 0.0
  %3961 = vmatpush1.msra.mxu0 %v3886
  %3962 = vmatprep.subr.mxu0 0.0
  %3963 = vmatpush1.msra.mxu0 %v3887
  %3964 = vmatprep.subr.mxu0 0.0
  %3965 = vmatpush1.msra.mxu0 %v3888
  %3966 = vmatprep.subr.mxu0 0.0
  %3967 = vmatpush1.msra.mxu0 %v3889
  %3968 = vmatprep.subr.mxu0 0.0
  %3969 = vmatpush1.msra.mxu0 %v3890
  %3970 = vmatprep.subr.mxu0 0.0
  %3971 = vmatpush1.msra.mxu0 %v3891
  %3972 = vmatprep.subr.mxu0 0.0
  %3973 = vmatpush1.msra.mxu0 %v3892
  %3974 = vmatprep.subr.mxu0 0.0
  %3975 = vmatpush1.msra.mxu0 %v3893
  %3976 = vmatprep.subr.mxu0 0.0
  %3977 = vmatpush1.msra.mxu0 %v3894
  %3978 = vmatprep.subr.mxu0 0.0
  %3979 = vmatpush1.msra.mxu0 %v3895
  %3980 = vmatprep.subr.mxu0 0.0
  %3981 = vmatpush1.msra.mxu0 %v3896
  %3982 = vmatprep.subr.mxu0 0.0
  %3983 = vmatpush1.msra.mxu0 %v3897
  %3984 = vmatprep.subr.mxu0 0.0
  %3985 = vmatpush1.msra.mxu0 %v3898
  %3986 = vmatprep.subr.mxu0 0.0
  %3987 = vmatpush1.msra.mxu0 %v3899
  %3988 = vmatprep.subr.mxu0 0.0
  %3989 = vmatpush1.msra.mxu0 %v3900
  %3990 = vmatprep.subr.mxu0 0.0
  %3991 = vmatpush1.msra.mxu0 %v3901
  %3992 = vmatprep.subr.mxu0 0.0
  %3993 = vmatpush1.msra.mxu0 %v3902
  %3994 = vmatprep.subr.mxu0 0.0
  %3995 = vmatpush1.msra.mxu0 %v3903
  %3996 = vmatprep.subr.mxu0 0.0
  %3997 = vmatpush1.msra.mxu0 %v3904
  %3998 = vmatprep.subr.mxu0 0.0
  %3999 = vmatpush1.msra.mxu0 %v3905
  %4000 = vmatprep.subr.mxu0 0.0
  %4001 = vmatpush1.msra.mxu0 %v3906
  %4002 = vmatprep.subr.mxu0 0.0
  %4003 = vmatpush1.msra.mxu0 %v3907
  %4004 = vmatprep.subr.mxu0 0.0
  %4005 = vmatpush1.msra.mxu0 %v3908
  %4006 = vmatprep.subr.mxu0 0.0
  %4007 = vmatpush1.msra.mxu0 %v3909
  %4008 = vmatprep.subr.mxu0 0.0
  %4009 = vmatpush1.msra.mxu0 %v3910
  %4010 = vmatprep.subr.mxu0 0.0
  %4011 = vmatpush1.msra.mxu0 %v3911
  %4012 = vmatprep.subr.mxu0 0.0
  %4013 = vmatpush1.msra.mxu0 %v3912
  %4014 = vmatprep.subr.mxu0 0.0
  %4015 = vmatpush1.msra.mxu0 %v3913
  %4016 = vmatprep.subr.mxu0 0.0
  %4017 = vmatpush1.msra.mxu0 %v3914
  %4018 = vmatprep.mubr.f32.mxu0 %v3876
  %4019 = vmatmul.mubr.f32.gmra.mrb[0].mxu0 %v3873
  %v4020 = vpop.f32.mrb[0].mxu0
  %v4021 = vadd.f32 %v3952, %v4020
  %v4022 = vpop.f32.mrb[0].mxu0
  %4023 = vdwg.mxu0
  %4024 = vmatprep.subr.mxu0 0.0
  %4025 = vmatpush1.msra.mxu0 %v3915
  %4026 = vmatprep.subr.mxu0 0.0
  %4027 = vmatpush1.msra.mxu0 %v3916
  %4028 = vmatprep.subr.mxu0 0.0
  %4029 = vmatpush1.msra.mxu0 %v3917
  %4030 = vmatprep.subr.mxu0 0.0
  %4031 = vmatpush1.msra.mxu0 %v3918
  %4032 = vmatprep.subr.mxu0 0.0
  %4033 = vmatpush1.msra.mxu0 %v3919
  %4034 = vmatprep.subr.mxu0 0.0
  %4035 = vmatpush1.msra.mxu0 %v3920
  %4036 = vmatprep.subr.mxu0 0.0
  %4037 = vmatpush1.msra.mxu0 %v3921
  %4038 = vmatprep.subr.mxu0 0.0
  %4039 = vmatpush1.msra.mxu0 %v3922
  %4040 = vmatprep.subr.mxu0 0.0
  %4041 = vmatpush1.msra.mxu0 %v3923
  %4042 = vmatprep.subr.mxu0 0.0
  %4043 = vmatpush1.msra.mxu0 %v3924
  %4044 = vmatprep.subr.mxu0 0.0
  %4045 = vmatpush1.msra.mxu0 %v3925
  %4046 = vmatprep.subr.mxu0 0.0
  %4047 = vmatpush1.msra.mxu0 %v3926
  %4048 = vmatprep.subr.mxu0 0.0
  %4049 = vmatpush1.msra.mxu0 %v3927
  %4050 = vmatprep.subr.mxu0 0.0
  %4051 = vmatpush1.msra.mxu0 %v3928
  %4052 = vmatprep.subr.mxu0 0.0
  %4053 = vmatpush1.msra.mxu0 %v3929
  %4054 = vmatprep.subr.mxu0 0.0
  %4055 = vmatpush1.msra.mxu0 %v3930
  %4056 = vmatprep.subr.mxu0 0.0
  %4057 = vmatpush1.msra.mxu0 %v3931
  %4058 = vmatprep.subr.mxu0 0.0
  %4059 = vmatpush1.msra.mxu0 %v3932
  %4060 = vmatprep.subr.mxu0 0.0
  %4061 = vmatpush1.msra.mxu0 %v3933
  %4062 = vmatprep.subr.mxu0 0.0
  %4063 = vmatpush1.msra.mxu0 %v3934
  %4064 = vmatprep.subr.mxu0 0.0
  %4065 = vmatpush1.msra.mxu0 %v3935
  %4066 = vmatprep.subr.mxu0 0.0
  %4067 = vmatpush1.msra.mxu0 %v3936
  %4068 = vmatprep.subr.mxu0 0.0
  %4069 = vmatpush1.msra.mxu0 %v3937
  %4070 = vmatprep.subr.mxu0 0.0
  %4071 = vmatpush1.msra.mxu0 %v3938
  %4072 = vmatprep.subr.mxu0 0.0
  %4073 = vmatpush1.msra.mxu0 %v3939
  %4074 = vmatprep.subr.mxu0 0.0
  %4075 = vmatpush1.msra.mxu0 %v3940
  %4076 = vmatprep.subr.mxu0 0.0
  %4077 = vmatpush1.msra.mxu0 %v3941
  %4078 = vmatprep.subr.mxu0 0.0
  %4079 = vmatpush1.msra.mxu0 %v3942
  %4080 = vmatprep.subr.mxu0 0.0
  %4081 = vmatpush1.msra.mxu0 %v3943
  %4082 = vmatprep.subr.mxu0 0.0
  %4083 = vmatpush1.msra.mxu0 %v3944
  %4084 = vmatprep.subr.mxu0 0.0
  %4085 = vmatpush1.msra.mxu0 %v3945
  %4086 = vmatprep.subr.mxu0 0.0
  %4087 = vmatpush1.msra.mxu0 %v3946
  %4088 = vmatprep.mubr.f32.mxu0 %v3882
  %4089 = vmatmul.mubr.f32.gmra.mrb[0].mxu0 %v3879
  %v4090 = vpop.f32.mrb[0].mxu0
  %v4091 = vadd.f32 %v4021, %v4090
  %v4092 = vpop.f32.mrb[0].mxu0
  %4093 = vdwg.mxu0
  %vm4094 = vcmask 254976
  %4095 = vst.msk [vmem:[%s9] sm:$0x3] %vm4094, %v4091
  // Predicated region
  $region38: #{pure_lstm_forward.1} parent=0 // pred_check
    _
  $region39: #{pure_lstm_forward.1} parent=0 // pred_check_branch
    %4097 = sbr.rel (0) target = $region41
  $region40: #{pure_lstm_forward.1} parent=0 // pred_region
    _
  $region41: #{pure_lstm_forward.1} parent=0 // pred_fallthru
    _
  // Predicated region
  $region42: #{pure_lstm_forward.1} parent=0 // pred_check
    _
  $region43: #{pure_lstm_forward.1} parent=0 // pred_check_branch
    %4099 = sbr.rel (0) target = $region45
  $region44: #{pure_lstm_forward.1} parent=0 // pred_region
    _
  $region45: #{pure_lstm_forward.1} parent=0 // pred_fallthru
    _

</llo_original>
